<compile_context>
chip_gen: v6e
topology: v6e:2x2x1
jax: 0.10.0
libtpu: 0.0.40
codegen_flags: <defaults>
</compile_context>

<pallas_src>
import functools

import jax
import jax.numpy as jnp
from jax.experimental import pallas as pl
from jax.experimental.pallas import tpu as pltpu

_LANES = 128
_SUBLANES = 8
_BUDGET_CAP_BYTES = 48 * 1024 * 1024   # cap on the double-buffered working set


def _vmem_capacity_bytes():
    """Per-TensorCore VMEM capacity; conservative (v7x) fallback if unknown."""
    try:
        cap = getattr(pltpu.get_tpu_info(), "vmem_capacity_bytes", None)
        if cap:
            return int(cap)
    except Exception:
        pass
    return 64 * 1024 * 1024


def _avgpool_kernel(x_ref, o_ref, *, kh, kw, h_out, w_out, inv_area):
    # x_ref: (H, W, Gt, 128) VMEM tile; o_ref: (h_out, w_out, Gt, 128).
    # H and W are leading dims (channel groups own sublane/lane), so the
    # shifted slices below are free vreg re-indexing — no copies, no XLU.

    # Separable box filter, rows first.  Built straight from ref slices so the
    # input tile is never materialized as a second f32 buffer.
    row = x_ref[0:h_out, :, :, :].astype(jnp.float32)
    for dh in range(1, kh):                                   # static unroll
        row = row + x_ref[dh:dh + h_out, :, :, :].astype(jnp.float32)

    # Columns: shifts along the (leading) W axis of the f32 running sum.
    acc = row[:, 0:w_out]
    for dw in range(1, kw):                                   # static unroll
        acc = acc + row[:, dw:dw + w_out]

    o_ref[...] = (acc * jnp.float32(inv_area)).astype(o_ref.dtype)


def simple_spatial_module(x, spatial_type="avg", spatial_size=7):
    """Pallas equivalent of SimpleSpatialModule.forward (return_extra_data=False)."""
    assert spatial_type in ["avg"]
    if isinstance(spatial_size, int):
        spatial_size = (spatial_size, spatial_size)
    kh, kw = spatial_size

    n, c, h, w = x.shape
    h_out = h - kh + 1
    w_out = w - kw + 1
    assert h_out >= 1 and w_out >= 1, "spatial_size larger than input"

    nc = n * c
    in_item = jnp.dtype(x.dtype).itemsize
    out_item = in_item

    # --- VMEM sizing: per 128-lane channel group, counting double-buffered
    # in/out blocks AND the in-kernel f32 intermediates (`row`, `acc`). ---
    per_group = _LANES * (
        2 * h * w * in_item                    # input block x2 (double buffer)
        + 2 * h_out * w_out * out_item         # output block x2
        + 4 * (h_out * w + h_out * w_out)      # f32 row + acc running sums
    )
    cap = _vmem_capacity_bytes()
    budget = min(cap // 2, _BUDGET_CAP_BYTES)            # ~32 MiB v7x, ~48 MiB v5e/v6e
    vmem_limit = min(cap * 3 // 4, 100 * 1024 * 1024)    # let Mosaic actually use it

    max_g = max(_SUBLANES, budget // per_group)
    g_needed = pl.cdiv(nc, _LANES)

    # Channel-group tile: multiple of 8 (tiling constraint), within budget, and
    # <= ceil(G/2) so the grid has >=2 steps (both v7x TensorCores) whenever
    # there are enough channel groups.  Pick the tile minimizing channel padding.
    g_cap = min(max_g, max(_SUBLANES, pl.cdiv(g_needed, 2)))
    g_cap = max(_SUBLANES, (g_cap // _SUBLANES) * _SUBLANES)
    best = None
    for gt in range(_SUBLANES, g_cap + 1, _SUBLANES):
        gp = pl.cdiv(g_needed, gt) * gt
        key = (gp, -gt)                      # least padding, then biggest tile
        if best is None or key < best[0]:
            best = (key, gt, gp)
    _, g_tile, g_pad = best
    nc_pad = g_pad * _LANES
    # TODO(synk): add a halo-overlapped H-tiling (manual DMA) fallback for very
    # large H*W inputs where even an 8-group block exceeds the VMEM budget.

    # Channels-last groups-of-128 layout for the kernel.
    # TODO(synk): callers that keep channels-last activations end-to-end can
    # drop this HBM transpose and the inverse one below (each is an extra HBM
    # read+write pass on an otherwise bandwidth-bound op).
    x_cl = jnp.transpose(x.reshape(nc, h, w), (1, 2, 0))           # (H, W, NC)
    if nc_pad != nc:
        x_cl = jnp.pad(x_cl, ((0, 0), (0, 0), (0, nc_pad - nc)))
    x_cl = x_cl.reshape(h, w, g_pad, _LANES)                       # (H, W, G, 128)

    grid = (g_pad // g_tile,)
    kernel = functools.partial(
        _avgpool_kernel, kh=kh, kw=kw, h_out=h_out, w_out=w_out,
        inv_area=1.0 / (kh * kw),
    )

    out_cl = pl.pallas_call(
        kernel,
        out_shape=jax.ShapeDtypeStruct((h_out, w_out, g_pad, _LANES), x.dtype),
        grid_spec=pl.GridSpec(
            grid=grid,
            in_specs=[pl.BlockSpec((h, w, g_tile, _LANES),
                                   lambda i: (0, 0, i, 0))],
            out_specs=pl.BlockSpec((h_out, w_out, g_tile, _LANES),
                                   lambda i: (0, 0, i, 0)),
        ),
        compiler_params=pltpu.CompilerParams(
            dimension_semantics=("parallel",),
            vmem_limit_bytes=vmem_limit,
        ),
    )(x_cl)

    # Back to NCHW, dropping the channel padding.
    out = out_cl.reshape(h_out, w_out, nc_pad)[:, :, :nc]
    out = jnp.transpose(out, (2, 0, 1)).reshape(n, c, h_out, w_out)
    return out


def _reference_avgpool(x, kh, kw):
    n, c, h, w = x.shape
    h_out, w_out = h - kh + 1, w - kw + 1
    acc = jnp.zeros((n, c, h_out, w_out), jnp.float32)
    for dh in range(kh):
        for dw in range(kw):
            acc = acc + x[:, :, dh:dh + h_out, dw:dw + w_out].astype(jnp.float32)
    return (acc / (kh * kw)).astype(x.dtype)


if __name__ == "__main__":
    key = jax.random.PRNGKey(0)
    k1, k2 = jax.random.split(key)

    # Primary check: module defaults (spatial_size=7) at a small NCHW shape.
    x1 = jax.random.normal(k1, (2, 4, 16, 16), dtype=jnp.float32)
    out1 = jax.block_until_ready(simple_spatial_module(x1, "avg", 7))
    ref1 = _reference_avgpool(x1, 7, 7)
    assert out1.shape == (2, 4, 10, 10), out1.shape
    assert jnp.allclose(out1, ref1, atol=1e-5, rtol=1e-5), "mismatch vs reference (case 1)"

    # Secondary check: enough channels to exercise the multi-step channel grid
    # (>=2 grid steps, the megacore path) with a different window size.
    x2 = jax.random.normal(k2, (1, 2048, 12, 12), dtype=jnp.float32)
    out2 = jax.block_until_ready(simple_spatial_module(x2, "avg", 3))
    ref2 = _reference_avgpool(x2, 3, 3)
    assert out2.shape == (1, 2048, 10, 10), out2.shape
    assert jnp.allclose(out2, ref2, atol=1e-5, rtol=1e-5), "mismatch vs reference (case 2)"

    print("KERNEL_OK")
</pallas_src>

<mosaic_0001>
module attributes {stable_mosaic.version = 11 : i64} {
  func.func @_avgpool_kernel(%arg0: i32, %arg1: memref<16x16x8x128xf32, #tpu.memory_space<vmem>>, %arg2: memref<10x10x8x128xf32, #tpu.memory_space<vmem>>) attributes {dimension_semantics = [#tpu.dimension_semantics<parallel>], iteration_bounds = array<i64: 1>, scalar_prefetch = 0 : i64, scratch_operands = 0 : i64, tpu.core_type = #tpu.core_type<tc>, window_params = [{transform_indices = @transform_0, window_bounds = array<i64: 16, 16, 8, 128>}, {transform_indices = @transform_1, window_bounds = array<i64: 10, 10, 8, 128>}]} {
    %c0 = arith.constant 0 : index
    %c0_0 = arith.constant 0 : index
    %c0_1 = arith.constant 0 : index
    %c0_2 = arith.constant 0 : index
    %0 = vector.load %arg1[%c0, %c0_0, %c0_1, %c0_2] : memref<16x16x8x128xf32, #tpu.memory_space<vmem>>, vector<10x16x8x128xf32>
    %c1 = arith.constant 1 : index
    %c0_3 = arith.constant 0 : index
    %c0_4 = arith.constant 0 : index
    %c0_5 = arith.constant 0 : index
    %1 = vector.load %arg1[%c1, %c0_3, %c0_4, %c0_5] : memref<16x16x8x128xf32, #tpu.memory_space<vmem>>, vector<10x16x8x128xf32>
    %2 = arith.addf %0, %1 : vector<10x16x8x128xf32>
    %c2 = arith.constant 2 : index
    %c0_6 = arith.constant 0 : index
    %c0_7 = arith.constant 0 : index
    %c0_8 = arith.constant 0 : index
    %3 = vector.load %arg1[%c2, %c0_6, %c0_7, %c0_8] : memref<16x16x8x128xf32, #tpu.memory_space<vmem>>, vector<10x16x8x128xf32>
    %4 = arith.addf %2, %3 : vector<10x16x8x128xf32>
    %c3 = arith.constant 3 : index
    %c0_9 = arith.constant 0 : index
    %c0_10 = arith.constant 0 : index
    %c0_11 = arith.constant 0 : index
    %5 = vector.load %arg1[%c3, %c0_9, %c0_10, %c0_11] : memref<16x16x8x128xf32, #tpu.memory_space<vmem>>, vector<10x16x8x128xf32>
    %6 = arith.addf %4, %5 : vector<10x16x8x128xf32>
    %c4 = arith.constant 4 : index
    %c0_12 = arith.constant 0 : index
    %c0_13 = arith.constant 0 : index
    %c0_14 = arith.constant 0 : index
    %7 = vector.load %arg1[%c4, %c0_12, %c0_13, %c0_14] : memref<16x16x8x128xf32, #tpu.memory_space<vmem>>, vector<10x16x8x128xf32>
    %8 = arith.addf %6, %7 : vector<10x16x8x128xf32>
    %c5 = arith.constant 5 : index
    %c0_15 = arith.constant 0 : index
    %c0_16 = arith.constant 0 : index
    %c0_17 = arith.constant 0 : index
    %9 = vector.load %arg1[%c5, %c0_15, %c0_16, %c0_17] : memref<16x16x8x128xf32, #tpu.memory_space<vmem>>, vector<10x16x8x128xf32>
    %10 = arith.addf %8, %9 : vector<10x16x8x128xf32>
    %c6 = arith.constant 6 : index
    %c0_18 = arith.constant 0 : index
    %c0_19 = arith.constant 0 : index
    %c0_20 = arith.constant 0 : index
    %11 = vector.load %arg1[%c6, %c0_18, %c0_19, %c0_20] : memref<16x16x8x128xf32, #tpu.memory_space<vmem>>, vector<10x16x8x128xf32>
    %12 = arith.addf %10, %11 : vector<10x16x8x128xf32>
    %13 = vector.extract_strided_slice %12 {offsets = [0, 0, 0, 0], sizes = [10, 10, 8, 128], strides = [1, 1, 1, 1]} : vector<10x16x8x128xf32> to vector<10x10x8x128xf32>
    %14 = vector.extract_strided_slice %12 {offsets = [0, 1, 0, 0], sizes = [10, 10, 8, 128], strides = [1, 1, 1, 1]} : vector<10x16x8x128xf32> to vector<10x10x8x128xf32>
    %15 = arith.addf %13, %14 : vector<10x10x8x128xf32>
    %16 = vector.extract_strided_slice %12 {offsets = [0, 2, 0, 0], sizes = [10, 10, 8, 128], strides = [1, 1, 1, 1]} : vector<10x16x8x128xf32> to vector<10x10x8x128xf32>
    %17 = arith.addf %15, %16 : vector<10x10x8x128xf32>
    %18 = vector.extract_strided_slice %12 {offsets = [0, 3, 0, 0], sizes = [10, 10, 8, 128], strides = [1, 1, 1, 1]} : vector<10x16x8x128xf32> to vector<10x10x8x128xf32>
    %19 = arith.addf %17, %18 : vector<10x10x8x128xf32>
    %20 = vector.extract_strided_slice %12 {offsets = [0, 4, 0, 0], sizes = [10, 10, 8, 128], strides = [1, 1, 1, 1]} : vector<10x16x8x128xf32> to vector<10x10x8x128xf32>
    %21 = arith.addf %19, %20 : vector<10x10x8x128xf32>
    %22 = vector.extract_strided_slice %12 {offsets = [0, 5, 0, 0], sizes = [10, 10, 8, 128], strides = [1, 1, 1, 1]} : vector<10x16x8x128xf32> to vector<10x10x8x128xf32>
    %23 = arith.addf %21, %22 : vector<10x10x8x128xf32>
    %24 = vector.extract_strided_slice %12 {offsets = [0, 6, 0, 0], sizes = [10, 10, 8, 128], strides = [1, 1, 1, 1]} : vector<10x16x8x128xf32> to vector<10x10x8x128xf32>
    %25 = arith.addf %23, %24 : vector<10x10x8x128xf32>
    %cst = arith.constant 0.0204081628 : f32
    %26 = vector.broadcast %cst : f32 to vector<10x10x8x128xf32>
    %27 = arith.mulf %25, %26 : vector<10x10x8x128xf32>
    %c0_21 = arith.constant 0 : index
    %c0_22 = arith.constant 0 : index
    %c0_23 = arith.constant 0 : index
    %c0_24 = arith.constant 0 : index
    %28 = vector.load %arg2[%c0_21, %c0_22, %c0_23, %c0_24] : memref<10x10x8x128xf32, #tpu.memory_space<vmem>>, vector<10x10x8x128xf32>
    tpu.vector_store %arg2[%c0_21, %c0_22, %c0_23, %c0_24], %27 {strides = array<i32>} : memref<10x10x8x128xf32, #tpu.memory_space<vmem>>, vector<10x10x8x128xf32>,
    return
  }
  func.func @transform_0(%arg0: i32) -> (i32, i32, i32, i32) {
    %c0_i32 = arith.constant 0 : i32
    %c0_i32_0 = arith.constant 0 : i32
    %c0_i32_1 = arith.constant 0 : i32
    %c0_i32_2 = arith.constant 0 : i32
    return %c0_i32, %c0_i32_0, %arg0, %c0_i32_1 : i32, i32, i32, i32
  }
  func.func @transform_1(%arg0: i32) -> (i32, i32, i32, i32) {
    %c0_i32 = arith.constant 0 : i32
    %c0_i32_0 = arith.constant 0 : i32
    %c0_i32_1 = arith.constant 0 : i32
    %c0_i32_2 = arith.constant 0 : i32
    return %c0_i32, %c0_i32_0, %arg0, %c0_i32_1 : i32, i32, i32, i32
  }
}

</mosaic_0001>

<llo_original>
// kernel: tpu_custom_call.1
$region0: #{tpu_custom_call.1}
  #allocation0 [shape = 'u32[]', space=smem, size = 0x4, offset = 0x4, fixed_abs, tag = 'smem constant byte address 0x4 - core index']
  #allocation1 [shape = 'u32[144,128]{1,0:T(1,128)}', space=vmem, size = 0x12000, scoped, tag = 'internal scratch']
  %s0 = inlined_call_operand.hbm [shape: f32[16,16,8,128], index: 0, kind: input, shape index: {}]
  %s1 = inlined_call_operand.hbm [shape: f32[10,10,8,128], index: 1, kind: output, shape index: {}]
  %s2 = sld [smem:[#allocation0]]
  $region18: #{tpu_custom_call.1} parent=0
    _
  %s4 = ssub.s32 1, %s2
  %s5 = scalar_select 0, %s4, %s2
  $region1: #{tpu_custom_call.1} parent=0
    #allocation2 [shape = 'u8[1048576]{0}', space=vmem, size = 0x100000, scoped, tag = 'input window, operand 0, single buffered']
    #allocation3 [shape = 's32[1]{0}', space=sflag, size = 0x4, scoped, tag = 'scoped memory for tpu_custom_call.1']
    #allocation4 [shape = 's32[1]{0}', space=sflag, size = 0x4, scoped, tag = 'scoped memory for tpu_custom_call.1']
    #allocation5 [shape = 'u8[409600]{0}', space=vmem, size = 0x64000, scoped, tag = 'output window, operand 0, single buffered']
    %6 = vsyncpa [#allocation3], 0
    %7 = vsyncpa [#allocation4], 0
    // Predicated region
    $region2: #{tpu_custom_call.1} parent=1 // pred_check
      _
    $region3: #{tpu_custom_call.1} parent=1 // pred_check_branch
      %9 = sbr.rel (0) target = $region5
    $region4: #{tpu_custom_call.1} parent=1 // pred_region
      %s11 = ssub.s32 32768, 32768
      %12 = vsyncadd [#allocation3], %s11
      %s13 = sshll.u32 [#allocation2], 4
      %s14 = int_to_ptr.vmem [resolvable:$true] %s13
      %19 = dma.hbm_to_vmem [thread:$0]  %s0, 32768, %s14, [#allocation3], 128, 128, 8
    $region5: #{tpu_custom_call.1} parent=1 // pred_fallthru
      _
    // Predicated region
    $region6: #{tpu_custom_call.1} parent=1 // pred_check
      _
    $region7: #{tpu_custom_call.1} parent=1 // pred_check_branch
      %21 = sbr.rel (0) target = $region9
    $region8: #{tpu_custom_call.1} parent=1 // pred_region
      %22 = dma.done [#allocation3], 32768
    $region9: #{tpu_custom_call.1} parent=1 // pred_fallthru
      _
    %v23 = vld [vmem:[#allocation2] sm:$0xff]
    %v24 = vld [vmem:[#allocation2 + $0x8] sm:$0xff]
    %v25 = vld [vmem:[#allocation2 + $0x10] sm:$0xff]
    %v26 = vld [vmem:[#allocation2 + $0x18] sm:$0xff]
    %v27 = vld [vmem:[#allocation2 + $0x20] sm:$0xff]
    %v28 = vld [vmem:[#allocation2 + $0x28] sm:$0xff]
    %v29 = vld [vmem:[#allocation2 + $0x30] sm:$0xff]
    %v30 = vld [vmem:[#allocation2 + $0x38] sm:$0xff]
    %v31 = vld [vmem:[#allocation2 + $0x40] sm:$0xff]
    %v32 = vld [vmem:[#allocation2 + $0x48] sm:$0xff]
    %v33 = vld [vmem:[#allocation2 + $0x50] sm:$0xff]
    %v34 = vld [vmem:[#allocation2 + $0x58] sm:$0xff]
    %v35 = vld [vmem:[#allocation2 + $0x60] sm:$0xff]
    %v36 = vld [vmem:[#allocation2 + $0x68] sm:$0xff]
    %v37 = vld [vmem:[#allocation2 + $0x70] sm:$0xff]
    %v38 = vld [vmem:[#allocation2 + $0x78] sm:$0xff]
    %v39 = vld [vmem:[#allocation2 + $0x80] sm:$0xff]
    %v40 = vld [vmem:[#allocation2 + $0x88] sm:$0xff]
    %v41 = vld [vmem:[#allocation2 + $0x90] sm:$0xff]
    %v42 = vld [vmem:[#allocation2 + $0x98] sm:$0xff]
    %v43 = vld [vmem:[#allocation2 + $0xa0] sm:$0xff]
    %v44 = vld [vmem:[#allocation2 + $0xa8] sm:$0xff]
    %v45 = vld [vmem:[#allocation2 + $0xb0] sm:$0xff]
    %v46 = vld [vmem:[#allocation2 + $0xb8] sm:$0xff]
    %v47 = vld [vmem:[#allocation2 + $0xc0] sm:$0xff]
    %v48 = vld [vmem:[#allocation2 + $0xc8] sm:$0xff]
    %v49 = vld [vmem:[#allocation2 + $0xd0] sm:$0xff]
    %v50 = vld [vmem:[#allocation2 + $0xd8] sm:$0xff]
    %v51 = vld [vmem:[#allocation2 + $0xe0] sm:$0xff]
    %v52 = vld [vmem:[#allocation2 + $0xe8] sm:$0xff]
    %v53 = vld [vmem:[#allocation2 + $0xf0] sm:$0xff]
    %v54 = vld [vmem:[#allocation2 + $0xf8] sm:$0xff]
    %v55 = vld [vmem:[#allocation2 + $0x100] sm:$0xff]
    %v56 = vld [vmem:[#allocation2 + $0x108] sm:$0xff]
    %v57 = vld [vmem:[#allocation2 + $0x110] sm:$0xff]
    %v58 = vld [vmem:[#allocation2 + $0x118] sm:$0xff]
    %v59 = vld [vmem:[#allocation2 + $0x120] sm:$0xff]
    %v60 = vld [vmem:[#allocation2 + $0x128] sm:$0xff]
    %v61 = vld [vmem:[#allocation2 + $0x130] sm:$0xff]
    %v62 = vld [vmem:[#allocation2 + $0x138] sm:$0xff]
    %v63 = vld [vmem:[#allocation2 + $0x140] sm:$0xff]
    %v64 = vld [vmem:[#allocation2 + $0x148] sm:$0xff]
    %v65 = vld [vmem:[#allocation2 + $0x150] sm:$0xff]
    %v66 = vld [vmem:[#allocation2 + $0x158] sm:$0xff]
    %v67 = vld [vmem:[#allocation2 + $0x160] sm:$0xff]
    %v68 = vld [vmem:[#allocation2 + $0x168] sm:$0xff]
    %v69 = vld [vmem:[#allocation2 + $0x170] sm:$0xff]
    %v70 = vld [vmem:[#allocation2 + $0x178] sm:$0xff]
    %v71 = vld [vmem:[#allocation2 + $0x180] sm:$0xff]
    %v72 = vld [vmem:[#allocation2 + $0x188] sm:$0xff]
    %v73 = vld [vmem:[#allocation2 + $0x190] sm:$0xff]
    %v74 = vld [vmem:[#allocation2 + $0x198] sm:$0xff]
    %v75 = vld [vmem:[#allocation2 + $0x1a0] sm:$0xff]
    %v76 = vld [vmem:[#allocation2 + $0x1a8] sm:$0xff]
    %v77 = vld [vmem:[#allocation2 + $0x1b0] sm:$0xff]
    %v78 = vld [vmem:[#allocation2 + $0x1b8] sm:$0xff]
    %v79 = vld [vmem:[#allocation2 + $0x1c0] sm:$0xff]
    %v80 = vld [vmem:[#allocation2 + $0x1c8] sm:$0xff]
    %v81 = vld [vmem:[#allocation2 + $0x1d0] sm:$0xff]
    %v82 = vld [vmem:[#allocation2 + $0x1d8] sm:$0xff]
    %v83 = vld [vmem:[#allocation2 + $0x1e0] sm:$0xff]
    %v84 = vld [vmem:[#allocation2 + $0x1e8] sm:$0xff]
    %v85 = vld [vmem:[#allocation2 + $0x1f0] sm:$0xff]
    %v86 = vld [vmem:[#allocation2 + $0x1f8] sm:$0xff]
    %v87 = vld [vmem:[#allocation2 + $0x200] sm:$0xff]
    %v88 = vld [vmem:[#allocation2 + $0x208] sm:$0xff]
    %v89 = vld [vmem:[#allocation2 + $0x210] sm:$0xff]
    %v90 = vld [vmem:[#allocation2 + $0x218] sm:$0xff]
    %v91 = vld [vmem:[#allocation2 + $0x220] sm:$0xff]
    %v92 = vld [vmem:[#allocation2 + $0x228] sm:$0xff]
    %v93 = vld [vmem:[#allocation2 + $0x230] sm:$0xff]
    %v94 = vld [vmem:[#allocation2 + $0x238] sm:$0xff]
    %v95 = vld [vmem:[#allocation2 + $0x240] sm:$0xff]
    %v96 = vld [vmem:[#allocation2 + $0x248] sm:$0xff]
    %v97 = vld [vmem:[#allocation2 + $0x250] sm:$0xff]
    %v98 = vld [vmem:[#allocation2 + $0x258] sm:$0xff]
    %v99 = vld [vmem:[#allocation2 + $0x260] sm:$0xff]
    %v100 = vld [vmem:[#allocation2 + $0x268] sm:$0xff]
    %v101 = vld [vmem:[#allocation2 + $0x270] sm:$0xff]
    %v102 = vld [vmem:[#allocation2 + $0x278] sm:$0xff]
    %v103 = vld [vmem:[#allocation2 + $0x280] sm:$0xff]
    %v104 = vld [vmem:[#allocation2 + $0x288] sm:$0xff]
    %v105 = vld [vmem:[#allocation2 + $0x290] sm:$0xff]
    %v106 = vld [vmem:[#allocation2 + $0x298] sm:$0xff]
    %v107 = vld [vmem:[#allocation2 + $0x2a0] sm:$0xff]
    %v108 = vld [vmem:[#allocation2 + $0x2a8] sm:$0xff]
    %v109 = vld [vmem:[#allocation2 + $0x2b0] sm:$0xff]
    %v110 = vld [vmem:[#allocation2 + $0x2b8] sm:$0xff]
    %v111 = vld [vmem:[#allocation2 + $0x2c0] sm:$0xff]
    %v112 = vld [vmem:[#allocation2 + $0x2c8] sm:$0xff]
    %v113 = vld [vmem:[#allocation2 + $0x2d0] sm:$0xff]
    %v114 = vld [vmem:[#allocation2 + $0x2d8] sm:$0xff]
    %v115 = vld [vmem:[#allocation2 + $0x2e0] sm:$0xff]
    %v116 = vld [vmem:[#allocation2 + $0x2e8] sm:$0xff]
    %v117 = vld [vmem:[#allocation2 + $0x2f0] sm:$0xff]
    %v118 = vld [vmem:[#allocation2 + $0x2f8] sm:$0xff]
    %v119 = vld [vmem:[#allocation2 + $0x300] sm:$0xff]
    %v120 = vld [vmem:[#allocation2 + $0x308] sm:$0xff]
    %v121 = vld [vmem:[#allocation2 + $0x310] sm:$0xff]
    %v122 = vld [vmem:[#allocation2 + $0x318] sm:$0xff]
    %v123 = vld [vmem:[#allocation2 + $0x320] sm:$0xff]
    %v124 = vld [vmem:[#allocation2 + $0x328] sm:$0xff]
    %v125 = vld [vmem:[#allocation2 + $0x330] sm:$0xff]
    %v126 = vld [vmem:[#allocation2 + $0x338] sm:$0xff]
    %v127 = vld [vmem:[#allocation2 + $0x340] sm:$0xff]
    %v128 = vld [vmem:[#allocation2 + $0x348] sm:$0xff]
    %v129 = vld [vmem:[#allocation2 + $0x350] sm:$0xff]
    %v130 = vld [vmem:[#allocation2 + $0x358] sm:$0xff]
    %v131 = vld [vmem:[#allocation2 + $0x360] sm:$0xff]
    %v132 = vld [vmem:[#allocation2 + $0x368] sm:$0xff]
    %v133 = vld [vmem:[#allocation2 + $0x370] sm:$0xff]
    %v134 = vld [vmem:[#allocation2 + $0x378] sm:$0xff]
    %v135 = vld [vmem:[#allocation2 + $0x380] sm:$0xff]
    %v136 = vld [vmem:[#allocation2 + $0x388] sm:$0xff]
    %v137 = vld [vmem:[#allocation2 + $0x390] sm:$0xff]
    %v138 = vld [vmem:[#allocation2 + $0x398] sm:$0xff]
    %v139 = vld [vmem:[#allocation2 + $0x3a0] sm:$0xff]
    %v140 = vld [vmem:[#allocation2 + $0x3a8] sm:$0xff]
    %v141 = vld [vmem:[#allocation2 + $0x3b0] sm:$0xff]
    %v142 = vld [vmem:[#allocation2 + $0x3b8] sm:$0xff]
    %v143 = vld [vmem:[#allocation2 + $0x3c0] sm:$0xff]
    %v144 = vld [vmem:[#allocation2 + $0x3c8] sm:$0xff]
    %v145 = vld [vmem:[#allocation2 + $0x3d0] sm:$0xff]
    %v146 = vld [vmem:[#allocation2 + $0x3d8] sm:$0xff]
    %v147 = vld [vmem:[#allocation2 + $0x3e0] sm:$0xff]
    %v148 = vld [vmem:[#allocation2 + $0x3e8] sm:$0xff]
    %v149 = vld [vmem:[#allocation2 + $0x3f0] sm:$0xff]
    %v150 = vld [vmem:[#allocation2 + $0x3f8] sm:$0xff]
    %v151 = vld [vmem:[#allocation2 + $0x400] sm:$0xff]
    %v152 = vld [vmem:[#allocation2 + $0x408] sm:$0xff]
    %v153 = vld [vmem:[#allocation2 + $0x410] sm:$0xff]
    %v154 = vld [vmem:[#allocation2 + $0x418] sm:$0xff]
    %v155 = vld [vmem:[#allocation2 + $0x420] sm:$0xff]
    %v156 = vld [vmem:[#allocation2 + $0x428] sm:$0xff]
    %v157 = vld [vmem:[#allocation2 + $0x430] sm:$0xff]
    %v158 = vld [vmem:[#allocation2 + $0x438] sm:$0xff]
    %v159 = vld [vmem:[#allocation2 + $0x440] sm:$0xff]
    %v160 = vld [vmem:[#allocation2 + $0x448] sm:$0xff]
    %v161 = vld [vmem:[#allocation2 + $0x450] sm:$0xff]
    %v162 = vld [vmem:[#allocation2 + $0x458] sm:$0xff]
    %v163 = vld [vmem:[#allocation2 + $0x460] sm:$0xff]
    %v164 = vld [vmem:[#allocation2 + $0x468] sm:$0xff]
    %v165 = vld [vmem:[#allocation2 + $0x470] sm:$0xff]
    %v166 = vld [vmem:[#allocation2 + $0x478] sm:$0xff]
    %v167 = vld [vmem:[#allocation2 + $0x480] sm:$0xff]
    %v168 = vld [vmem:[#allocation2 + $0x488] sm:$0xff]
    %v169 = vld [vmem:[#allocation2 + $0x490] sm:$0xff]
    %v170 = vld [vmem:[#allocation2 + $0x498] sm:$0xff]
    %v171 = vld [vmem:[#allocation2 + $0x4a0] sm:$0xff]
    %v172 = vld [vmem:[#allocation2 + $0x4a8] sm:$0xff]
    %v173 = vld [vmem:[#allocation2 + $0x4b0] sm:$0xff]
    %v174 = vld [vmem:[#allocation2 + $0x4b8] sm:$0xff]
    %v175 = vld [vmem:[#allocation2 + $0x4c0] sm:$0xff]
    %v176 = vld [vmem:[#allocation2 + $0x4c8] sm:$0xff]
    %v177 = vld [vmem:[#allocation2 + $0x4d0] sm:$0xff]
    %v178 = vld [vmem:[#allocation2 + $0x4d8] sm:$0xff]
    %v179 = vld [vmem:[#allocation2 + $0x4e0] sm:$0xff]
    %v180 = vld [vmem:[#allocation2 + $0x4e8] sm:$0xff]
    %v181 = vld [vmem:[#allocation2 + $0x4f0] sm:$0xff]
    %v182 = vld [vmem:[#allocation2 + $0x4f8] sm:$0xff]
    %s183 = scalar_lea.vmem [#allocation2], 128
    %v184 = vld [vmem:[%s183] sm:$0xff]
    %v185 = vld [vmem:[%s183 + $0x8] sm:$0xff]
    %v186 = vld [vmem:[%s183 + $0x10] sm:$0xff]
    %v187 = vld [vmem:[%s183 + $0x18] sm:$0xff]
    %v188 = vld [vmem:[%s183 + $0x20] sm:$0xff]
    %v189 = vld [vmem:[%s183 + $0x28] sm:$0xff]
    %v190 = vld [vmem:[%s183 + $0x30] sm:$0xff]
    %v191 = vld [vmem:[%s183 + $0x38] sm:$0xff]
    %v192 = vld [vmem:[%s183 + $0x40] sm:$0xff]
    %v193 = vld [vmem:[%s183 + $0x48] sm:$0xff]
    %v194 = vld [vmem:[%s183 + $0x50] sm:$0xff]
    %v195 = vld [vmem:[%s183 + $0x58] sm:$0xff]
    %v196 = vld [vmem:[%s183 + $0x60] sm:$0xff]
    %v197 = vld [vmem:[%s183 + $0x68] sm:$0xff]
    %v198 = vld [vmem:[%s183 + $0x70] sm:$0xff]
    %v199 = vld [vmem:[%s183 + $0x78] sm:$0xff]
    %v200 = vld [vmem:[%s183 + $0x80] sm:$0xff]
    %v201 = vld [vmem:[%s183 + $0x88] sm:$0xff]
    %v202 = vld [vmem:[%s183 + $0x90] sm:$0xff]
    %v203 = vld [vmem:[%s183 + $0x98] sm:$0xff]
    %v204 = vld [vmem:[%s183 + $0xa0] sm:$0xff]
    %v205 = vld [vmem:[%s183 + $0xa8] sm:$0xff]
    %v206 = vld [vmem:[%s183 + $0xb0] sm:$0xff]
    %v207 = vld [vmem:[%s183 + $0xb8] sm:$0xff]
    %v208 = vld [vmem:[%s183 + $0xc0] sm:$0xff]
    %v209 = vld [vmem:[%s183 + $0xc8] sm:$0xff]
    %v210 = vld [vmem:[%s183 + $0xd0] sm:$0xff]
    %v211 = vld [vmem:[%s183 + $0xd8] sm:$0xff]
    %v212 = vld [vmem:[%s183 + $0xe0] sm:$0xff]
    %v213 = vld [vmem:[%s183 + $0xe8] sm:$0xff]
    %v214 = vld [vmem:[%s183 + $0xf0] sm:$0xff]
    %v215 = vld [vmem:[%s183 + $0xf8] sm:$0xff]
    %v216 = vld [vmem:[%s183 + $0x100] sm:$0xff]
    %v217 = vld [vmem:[%s183 + $0x108] sm:$0xff]
    %v218 = vld [vmem:[%s183 + $0x110] sm:$0xff]
    %v219 = vld [vmem:[%s183 + $0x118] sm:$0xff]
    %v220 = vld [vmem:[%s183 + $0x120] sm:$0xff]
    %v221 = vld [vmem:[%s183 + $0x128] sm:$0xff]
    %v222 = vld [vmem:[%s183 + $0x130] sm:$0xff]
    %v223 = vld [vmem:[%s183 + $0x138] sm:$0xff]
    %v224 = vld [vmem:[%s183 + $0x140] sm:$0xff]
    %v225 = vld [vmem:[%s183 + $0x148] sm:$0xff]
    %v226 = vld [vmem:[%s183 + $0x150] sm:$0xff]
    %v227 = vld [vmem:[%s183 + $0x158] sm:$0xff]
    %v228 = vld [vmem:[%s183 + $0x160] sm:$0xff]
    %v229 = vld [vmem:[%s183 + $0x168] sm:$0xff]
    %v230 = vld [vmem:[%s183 + $0x170] sm:$0xff]
    %v231 = vld [vmem:[%s183 + $0x178] sm:$0xff]
    %v232 = vld [vmem:[%s183 + $0x180] sm:$0xff]
    %v233 = vld [vmem:[%s183 + $0x188] sm:$0xff]
    %v234 = vld [vmem:[%s183 + $0x190] sm:$0xff]
    %v235 = vld [vmem:[%s183 + $0x198] sm:$0xff]
    %v236 = vld [vmem:[%s183 + $0x1a0] sm:$0xff]
    %v237 = vld [vmem:[%s183 + $0x1a8] sm:$0xff]
    %v238 = vld [vmem:[%s183 + $0x1b0] sm:$0xff]
    %v239 = vld [vmem:[%s183 + $0x1b8] sm:$0xff]
    %v240 = vld [vmem:[%s183 + $0x1c0] sm:$0xff]
    %v241 = vld [vmem:[%s183 + $0x1c8] sm:$0xff]
    %v242 = vld [vmem:[%s183 + $0x1d0] sm:$0xff]
    %v243 = vld [vmem:[%s183 + $0x1d8] sm:$0xff]
    %v244 = vld [vmem:[%s183 + $0x1e0] sm:$0xff]
    %v245 = vld [vmem:[%s183 + $0x1e8] sm:$0xff]
    %v246 = vld [vmem:[%s183 + $0x1f0] sm:$0xff]
    %v247 = vld [vmem:[%s183 + $0x1f8] sm:$0xff]
    %v248 = vld [vmem:[%s183 + $0x200] sm:$0xff]
    %v249 = vld [vmem:[%s183 + $0x208] sm:$0xff]
    %v250 = vld [vmem:[%s183 + $0x210] sm:$0xff]
    %v251 = vld [vmem:[%s183 + $0x218] sm:$0xff]
    %v252 = vld [vmem:[%s183 + $0x220] sm:$0xff]
    %v253 = vld [vmem:[%s183 + $0x228] sm:$0xff]
    %v254 = vld [vmem:[%s183 + $0x230] sm:$0xff]
    %v255 = vld [vmem:[%s183 + $0x238] sm:$0xff]
    %v256 = vld [vmem:[%s183 + $0x240] sm:$0xff]
    %v257 = vld [vmem:[%s183 + $0x248] sm:$0xff]
    %v258 = vld [vmem:[%s183 + $0x250] sm:$0xff]
    %v259 = vld [vmem:[%s183 + $0x258] sm:$0xff]
    %v260 = vld [vmem:[%s183 + $0x260] sm:$0xff]
    %v261 = vld [vmem:[%s183 + $0x268] sm:$0xff]
    %v262 = vld [vmem:[%s183 + $0x270] sm:$0xff]
    %v263 = vld [vmem:[%s183 + $0x278] sm:$0xff]
    %v264 = vld [vmem:[%s183 + $0x280] sm:$0xff]
    %v265 = vld [vmem:[%s183 + $0x288] sm:$0xff]
    %v266 = vld [vmem:[%s183 + $0x290] sm:$0xff]
    %v267 = vld [vmem:[%s183 + $0x298] sm:$0xff]
    %v268 = vld [vmem:[%s183 + $0x2a0] sm:$0xff]
    %v269 = vld [vmem:[%s183 + $0x2a8] sm:$0xff]
    %v270 = vld [vmem:[%s183 + $0x2b0] sm:$0xff]
    %v271 = vld [vmem:[%s183 + $0x2b8] sm:$0xff]
    %v272 = vld [vmem:[%s183 + $0x2c0] sm:$0xff]
    %v273 = vld [vmem:[%s183 + $0x2c8] sm:$0xff]
    %v274 = vld [vmem:[%s183 + $0x2d0] sm:$0xff]
    %v275 = vld [vmem:[%s183 + $0x2d8] sm:$0xff]
    %v276 = vld [vmem:[%s183 + $0x2e0] sm:$0xff]
    %v277 = vld [vmem:[%s183 + $0x2e8] sm:$0xff]
    %v278 = vld [vmem:[%s183 + $0x2f0] sm:$0xff]
    %v279 = vld [vmem:[%s183 + $0x2f8] sm:$0xff]
    %v280 = vld [vmem:[%s183 + $0x300] sm:$0xff]
    %v281 = vld [vmem:[%s183 + $0x308] sm:$0xff]
    %v282 = vld [vmem:[%s183 + $0x310] sm:$0xff]
    %v283 = vld [vmem:[%s183 + $0x318] sm:$0xff]
    %v284 = vld [vmem:[%s183 + $0x320] sm:$0xff]
    %v285 = vld [vmem:[%s183 + $0x328] sm:$0xff]
    %v286 = vld [vmem:[%s183 + $0x330] sm:$0xff]
    %v287 = vld [vmem:[%s183 + $0x338] sm:$0xff]
    %v288 = vld [vmem:[%s183 + $0x340] sm:$0xff]
    %v289 = vld [vmem:[%s183 + $0x348] sm:$0xff]
    %v290 = vld [vmem:[%s183 + $0x350] sm:$0xff]
    %v291 = vld [vmem:[%s183 + $0x358] sm:$0xff]
    %v292 = vld [vmem:[%s183 + $0x360] sm:$0xff]
    %v293 = vld [vmem:[%s183 + $0x368] sm:$0xff]
    %v294 = vld [vmem:[%s183 + $0x370] sm:$0xff]
    %v295 = vld [vmem:[%s183 + $0x378] sm:$0xff]
    %v296 = vld [vmem:[%s183 + $0x380] sm:$0xff]
    %v297 = vld [vmem:[%s183 + $0x388] sm:$0xff]
    %v298 = vld [vmem:[%s183 + $0x390] sm:$0xff]
    %v299 = vld [vmem:[%s183 + $0x398] sm:$0xff]
    %v300 = vld [vmem:[%s183 + $0x3a0] sm:$0xff]
    %v301 = vld [vmem:[%s183 + $0x3a8] sm:$0xff]
    %v302 = vld [vmem:[%s183 + $0x3b0] sm:$0xff]
    %v303 = vld [vmem:[%s183 + $0x3b8] sm:$0xff]
    %v304 = vld [vmem:[%s183 + $0x3c0] sm:$0xff]
    %v305 = vld [vmem:[%s183 + $0x3c8] sm:$0xff]
    %v306 = vld [vmem:[%s183 + $0x3d0] sm:$0xff]
    %v307 = vld [vmem:[%s183 + $0x3d8] sm:$0xff]
    %v308 = vld [vmem:[%s183 + $0x3e0] sm:$0xff]
    %v309 = vld [vmem:[%s183 + $0x3e8] sm:$0xff]
    %v310 = vld [vmem:[%s183 + $0x3f0] sm:$0xff]
    %v311 = vld [vmem:[%s183 + $0x3f8] sm:$0xff]
    %v312 = vld [vmem:[%s183 + $0x400] sm:$0xff]
    %v313 = vld [vmem:[%s183 + $0x408] sm:$0xff]
    %v314 = vld [vmem:[%s183 + $0x410] sm:$0xff]
    %v315 = vld [vmem:[%s183 + $0x418] sm:$0xff]
    %v316 = vld [vmem:[%s183 + $0x420] sm:$0xff]
    %v317 = vld [vmem:[%s183 + $0x428] sm:$0xff]
    %v318 = vld [vmem:[%s183 + $0x430] sm:$0xff]
    %v319 = vld [vmem:[%s183 + $0x438] sm:$0xff]
    %v320 = vld [vmem:[%s183 + $0x440] sm:$0xff]
    %v321 = vld [vmem:[%s183 + $0x448] sm:$0xff]
    %v322 = vld [vmem:[%s183 + $0x450] sm:$0xff]
    %v323 = vld [vmem:[%s183 + $0x458] sm:$0xff]
    %v324 = vld [vmem:[%s183 + $0x460] sm:$0xff]
    %v325 = vld [vmem:[%s183 + $0x468] sm:$0xff]
    %v326 = vld [vmem:[%s183 + $0x470] sm:$0xff]
    %v327 = vld [vmem:[%s183 + $0x478] sm:$0xff]
    %v328 = vld [vmem:[%s183 + $0x480] sm:$0xff]
    %v329 = vld [vmem:[%s183 + $0x488] sm:$0xff]
    %v330 = vld [vmem:[%s183 + $0x490] sm:$0xff]
    %v331 = vld [vmem:[%s183 + $0x498] sm:$0xff]
    %v332 = vld [vmem:[%s183 + $0x4a0] sm:$0xff]
    %v333 = vld [vmem:[%s183 + $0x4a8] sm:$0xff]
    %v334 = vld [vmem:[%s183 + $0x4b0] sm:$0xff]
    %v335 = vld [vmem:[%s183 + $0x4b8] sm:$0xff]
    %v336 = vld [vmem:[%s183 + $0x4c0] sm:$0xff]
    %v337 = vld [vmem:[%s183 + $0x4c8] sm:$0xff]
    %v338 = vld [vmem:[%s183 + $0x4d0] sm:$0xff]
    %v339 = vld [vmem:[%s183 + $0x4d8] sm:$0xff]
    %v340 = vld [vmem:[%s183 + $0x4e0] sm:$0xff]
    %v341 = vld [vmem:[%s183 + $0x4e8] sm:$0xff]
    %v342 = vld [vmem:[%s183 + $0x4f0] sm:$0xff]
    %v343 = vld [vmem:[%s183 + $0x4f8] sm:$0xff]
    %v344 = vadd.f32 %v23, %v184
    %v345 = vadd.f32 %v24, %v185
    %v346 = vadd.f32 %v25, %v186
    %v347 = vadd.f32 %v26, %v187
    %v348 = vadd.f32 %v27, %v188
    %v349 = vadd.f32 %v28, %v189
    %v350 = vadd.f32 %v29, %v190
    %v351 = vadd.f32 %v30, %v191
    %v352 = vadd.f32 %v31, %v192
    %v353 = vadd.f32 %v32, %v193
    %v354 = vadd.f32 %v33, %v194
    %v355 = vadd.f32 %v34, %v195
    %v356 = vadd.f32 %v35, %v196
    %v357 = vadd.f32 %v36, %v197
    %v358 = vadd.f32 %v37, %v198
    %v359 = vadd.f32 %v38, %v199
    %v360 = vadd.f32 %v39, %v200
    %v361 = vadd.f32 %v40, %v201
    %v362 = vadd.f32 %v41, %v202
    %v363 = vadd.f32 %v42, %v203
    %v364 = vadd.f32 %v43, %v204
    %v365 = vadd.f32 %v44, %v205
    %v366 = vadd.f32 %v45, %v206
    %v367 = vadd.f32 %v46, %v207
    %v368 = vadd.f32 %v47, %v208
    %v369 = vadd.f32 %v48, %v209
    %v370 = vadd.f32 %v49, %v210
    %v371 = vadd.f32 %v50, %v211
    %v372 = vadd.f32 %v51, %v212
    %v373 = vadd.f32 %v52, %v213
    %v374 = vadd.f32 %v53, %v214
    %v375 = vadd.f32 %v54, %v215
    %v376 = vadd.f32 %v55, %v216
    %v377 = vadd.f32 %v56, %v217
    %v378 = vadd.f32 %v57, %v218
    %v379 = vadd.f32 %v58, %v219
    %v380 = vadd.f32 %v59, %v220
    %v381 = vadd.f32 %v60, %v221
    %v382 = vadd.f32 %v61, %v222
    %v383 = vadd.f32 %v62, %v223
    %v384 = vadd.f32 %v63, %v224
    %v385 = vadd.f32 %v64, %v225
    %v386 = vadd.f32 %v65, %v226
    %v387 = vadd.f32 %v66, %v227
    %v388 = vadd.f32 %v67, %v228
    %v389 = vadd.f32 %v68, %v229
    %v390 = vadd.f32 %v69, %v230
    %v391 = vadd.f32 %v70, %v231
    %v392 = vadd.f32 %v71, %v232
    %v393 = vadd.f32 %v72, %v233
    %v394 = vadd.f32 %v73, %v234
    %v395 = vadd.f32 %v74, %v235
    %v396 = vadd.f32 %v75, %v236
    %v397 = vadd.f32 %v76, %v237
    %v398 = vadd.f32 %v77, %v238
    %v399 = vadd.f32 %v78, %v239
    %v400 = vadd.f32 %v79, %v240
    %v401 = vadd.f32 %v80, %v241
    %v402 = vadd.f32 %v81, %v242
    %v403 = vadd.f32 %v82, %v243
    %v404 = vadd.f32 %v83, %v244
    %v405 = vadd.f32 %v84, %v245
    %v406 = vadd.f32 %v85, %v246
    %v407 = vadd.f32 %v86, %v247
    %v408 = vadd.f32 %v87, %v248
    %v409 = vadd.f32 %v88, %v249
    %v410 = vadd.f32 %v89, %v250
    %v411 = vadd.f32 %v90, %v251
    %v412 = vadd.f32 %v91, %v252
    %v413 = vadd.f32 %v92, %v253
    %v414 = vadd.f32 %v93, %v254
    %v415 = vadd.f32 %v94, %v255
    %v416 = vadd.f32 %v95, %v256
    %v417 = vadd.f32 %v96, %v257
    %v418 = vadd.f32 %v97, %v258
    %v419 = vadd.f32 %v98, %v259
    %v420 = vadd.f32 %v99, %v260
    %v421 = vadd.f32 %v100, %v261
    %v422 = vadd.f32 %v101, %v262
    %v423 = vadd.f32 %v102, %v263
    %v424 = vadd.f32 %v103, %v264
    %v425 = vadd.f32 %v104, %v265
    %v426 = vadd.f32 %v105, %v266
    %v427 = vadd.f32 %v106, %v267
    %v428 = vadd.f32 %v107, %v268
    %v429 = vadd.f32 %v108, %v269
    %v430 = vadd.f32 %v109, %v270
    %v431 = vadd.f32 %v110, %v271
    %v432 = vadd.f32 %v111, %v272
    %v433 = vadd.f32 %v112, %v273
    %v434 = vadd.f32 %v113, %v274
    %v435 = vadd.f32 %v114, %v275
    %v436 = vadd.f32 %v115, %v276
    %v437 = vadd.f32 %v116, %v277
    %v438 = vadd.f32 %v117, %v278
    %v439 = vadd.f32 %v118, %v279
    %v440 = vadd.f32 %v119, %v280
    %v441 = vadd.f32 %v120, %v281
    %v442 = vadd.f32 %v121, %v282
    %v443 = vadd.f32 %v122, %v283
    %v444 = vadd.f32 %v123, %v284
    %v445 = vadd.f32 %v124, %v285
    %v446 = vadd.f32 %v125, %v286
    %v447 = vadd.f32 %v126, %v287
    %v448 = vadd.f32 %v127, %v288
    %v449 = vadd.f32 %v128, %v289
    %v450 = vadd.f32 %v129, %v290
    %v451 = vadd.f32 %v130, %v291
    %v452 = vadd.f32 %v131, %v292
    %v453 = vadd.f32 %v132, %v293
    %v454 = vadd.f32 %v133, %v294
    %v455 = vadd.f32 %v134, %v295
    %v456 = vadd.f32 %v135, %v296
    %v457 = vadd.f32 %v136, %v297
    %v458 = vadd.f32 %v137, %v298
    %v459 = vadd.f32 %v138, %v299
    %v460 = vadd.f32 %v139, %v300
    %v461 = vadd.f32 %v140, %v301
    %v462 = vadd.f32 %v141, %v302
    %v463 = vadd.f32 %v142, %v303
    %v464 = vadd.f32 %v143, %v304
    %v465 = vadd.f32 %v144, %v305
    %v466 = vadd.f32 %v145, %v306
    %v467 = vadd.f32 %v146, %v307
    %v468 = vadd.f32 %v147, %v308
    %v469 = vadd.f32 %v148, %v309
    %v470 = vadd.f32 %v149, %v310
    %v471 = vadd.f32 %v150, %v311
    %v472 = vadd.f32 %v151, %v312
    %v473 = vadd.f32 %v152, %v313
    %v474 = vadd.f32 %v153, %v314
    %v475 = vadd.f32 %v154, %v315
    %v476 = vadd.f32 %v155, %v316
    %v477 = vadd.f32 %v156, %v317
    %v478 = vadd.f32 %v157, %v318
    %v479 = vadd.f32 %v158, %v319
    %v480 = vadd.f32 %v159, %v320
    %v481 = vadd.f32 %v160, %v321
    %v482 = vadd.f32 %v161, %v322
    %v483 = vadd.f32 %v162, %v323
    %v484 = vadd.f32 %v163, %v324
    %v485 = vadd.f32 %v164, %v325
    %v486 = vadd.f32 %v165, %v326
    %v487 = vadd.f32 %v166, %v327
    %v488 = vadd.f32 %v167, %v328
    %v489 = vadd.f32 %v168, %v329
    %v490 = vadd.f32 %v169, %v330
    %v491 = vadd.f32 %v170, %v331
    %v492 = vadd.f32 %v171, %v332
    %v493 = vadd.f32 %v172, %v333
    %v494 = vadd.f32 %v173, %v334
    %v495 = vadd.f32 %v174, %v335
    %v496 = vadd.f32 %v175, %v336
    %v497 = vadd.f32 %v176, %v337
    %v498 = vadd.f32 %v177, %v338
    %v499 = vadd.f32 %v178, %v339
    %v500 = vadd.f32 %v179, %v340
    %v501 = vadd.f32 %v180, %v341
    %v502 = vadd.f32 %v181, %v342
    %v503 = vadd.f32 %v182, %v343
    %s504 = scalar_lea.vmem [#allocation2], 256
    %v505 = vld [vmem:[%s504] sm:$0xff]
    %v506 = vld [vmem:[%s504 + $0x8] sm:$0xff]
    %v507 = vld [vmem:[%s504 + $0x10] sm:$0xff]
    %v508 = vld [vmem:[%s504 + $0x18] sm:$0xff]
    %v509 = vld [vmem:[%s504 + $0x20] sm:$0xff]
    %v510 = vld [vmem:[%s504 + $0x28] sm:$0xff]
    %v511 = vld [vmem:[%s504 + $0x30] sm:$0xff]
    %v512 = vld [vmem:[%s504 + $0x38] sm:$0xff]
    %v513 = vld [vmem:[%s504 + $0x40] sm:$0xff]
    %v514 = vld [vmem:[%s504 + $0x48] sm:$0xff]
    %v515 = vld [vmem:[%s504 + $0x50] sm:$0xff]
    %v516 = vld [vmem:[%s504 + $0x58] sm:$0xff]
    %v517 = vld [vmem:[%s504 + $0x60] sm:$0xff]
    %v518 = vld [vmem:[%s504 + $0x68] sm:$0xff]
    %v519 = vld [vmem:[%s504 + $0x70] sm:$0xff]
    %v520 = vld [vmem:[%s504 + $0x78] sm:$0xff]
    %v521 = vld [vmem:[%s504 + $0x80] sm:$0xff]
    %v522 = vld [vmem:[%s504 + $0x88] sm:$0xff]
    %v523 = vld [vmem:[%s504 + $0x90] sm:$0xff]
    %v524 = vld [vmem:[%s504 + $0x98] sm:$0xff]
    %v525 = vld [vmem:[%s504 + $0xa0] sm:$0xff]
    %v526 = vld [vmem:[%s504 + $0xa8] sm:$0xff]
    %v527 = vld [vmem:[%s504 + $0xb0] sm:$0xff]
    %v528 = vld [vmem:[%s504 + $0xb8] sm:$0xff]
    %v529 = vld [vmem:[%s504 + $0xc0] sm:$0xff]
    %v530 = vld [vmem:[%s504 + $0xc8] sm:$0xff]
    %v531 = vld [vmem:[%s504 + $0xd0] sm:$0xff]
    %v532 = vld [vmem:[%s504 + $0xd8] sm:$0xff]
    %v533 = vld [vmem:[%s504 + $0xe0] sm:$0xff]
    %v534 = vld [vmem:[%s504 + $0xe8] sm:$0xff]
    %v535 = vld [vmem:[%s504 + $0xf0] sm:$0xff]
    %v536 = vld [vmem:[%s504 + $0xf8] sm:$0xff]
    %v537 = vld [vmem:[%s504 + $0x100] sm:$0xff]
    %v538 = vld [vmem:[%s504 + $0x108] sm:$0xff]
    %v539 = vld [vmem:[%s504 + $0x110] sm:$0xff]
    %v540 = vld [vmem:[%s504 + $0x118] sm:$0xff]
    %v541 = vld [vmem:[%s504 + $0x120] sm:$0xff]
    %v542 = vld [vmem:[%s504 + $0x128] sm:$0xff]
    %v543 = vld [vmem:[%s504 + $0x130] sm:$0xff]
    %v544 = vld [vmem:[%s504 + $0x138] sm:$0xff]
    %v545 = vld [vmem:[%s504 + $0x140] sm:$0xff]
    %v546 = vld [vmem:[%s504 + $0x148] sm:$0xff]
    %v547 = vld [vmem:[%s504 + $0x150] sm:$0xff]
    %v548 = vld [vmem:[%s504 + $0x158] sm:$0xff]
    %v549 = vld [vmem:[%s504 + $0x160] sm:$0xff]
    %v550 = vld [vmem:[%s504 + $0x168] sm:$0xff]
    %v551 = vld [vmem:[%s504 + $0x170] sm:$0xff]
    %v552 = vld [vmem:[%s504 + $0x178] sm:$0xff]
    %v553 = vld [vmem:[%s504 + $0x180] sm:$0xff]
    %v554 = vld [vmem:[%s504 + $0x188] sm:$0xff]
    %v555 = vld [vmem:[%s504 + $0x190] sm:$0xff]
    %v556 = vld [vmem:[%s504 + $0x198] sm:$0xff]
    %v557 = vld [vmem:[%s504 + $0x1a0] sm:$0xff]
    %v558 = vld [vmem:[%s504 + $0x1a8] sm:$0xff]
    %v559 = vld [vmem:[%s504 + $0x1b0] sm:$0xff]
    %v560 = vld [vmem:[%s504 + $0x1b8] sm:$0xff]
    %v561 = vld [vmem:[%s504 + $0x1c0] sm:$0xff]
    %v562 = vld [vmem:[%s504 + $0x1c8] sm:$0xff]
    %v563 = vld [vmem:[%s504 + $0x1d0] sm:$0xff]
    %v564 = vld [vmem:[%s504 + $0x1d8] sm:$0xff]
    %v565 = vld [vmem:[%s504 + $0x1e0] sm:$0xff]
    %v566 = vld [vmem:[%s504 + $0x1e8] sm:$0xff]
    %v567 = vld [vmem:[%s504 + $0x1f0] sm:$0xff]
    %v568 = vld [vmem:[%s504 + $0x1f8] sm:$0xff]
    %v569 = vld [vmem:[%s504 + $0x200] sm:$0xff]
    %v570 = vld [vmem:[%s504 + $0x208] sm:$0xff]
    %v571 = vld [vmem:[%s504 + $0x210] sm:$0xff]
    %v572 = vld [vmem:[%s504 + $0x218] sm:$0xff]
    %v573 = vld [vmem:[%s504 + $0x220] sm:$0xff]
    %v574 = vld [vmem:[%s504 + $0x228] sm:$0xff]
    %v575 = vld [vmem:[%s504 + $0x230] sm:$0xff]
    %v576 = vld [vmem:[%s504 + $0x238] sm:$0xff]
    %v577 = vld [vmem:[%s504 + $0x240] sm:$0xff]
    %v578 = vld [vmem:[%s504 + $0x248] sm:$0xff]
    %v579 = vld [vmem:[%s504 + $0x250] sm:$0xff]
    %v580 = vld [vmem:[%s504 + $0x258] sm:$0xff]
    %v581 = vld [vmem:[%s504 + $0x260] sm:$0xff]
    %v582 = vld [vmem:[%s504 + $0x268] sm:$0xff]
    %v583 = vld [vmem:[%s504 + $0x270] sm:$0xff]
    %v584 = vld [vmem:[%s504 + $0x278] sm:$0xff]
    %v585 = vld [vmem:[%s504 + $0x280] sm:$0xff]
    %v586 = vld [vmem:[%s504 + $0x288] sm:$0xff]
    %v587 = vld [vmem:[%s504 + $0x290] sm:$0xff]
    %v588 = vld [vmem:[%s504 + $0x298] sm:$0xff]
    %v589 = vld [vmem:[%s504 + $0x2a0] sm:$0xff]
    %v590 = vld [vmem:[%s504 + $0x2a8] sm:$0xff]
    %v591 = vld [vmem:[%s504 + $0x2b0] sm:$0xff]
    %v592 = vld [vmem:[%s504 + $0x2b8] sm:$0xff]
    %v593 = vld [vmem:[%s504 + $0x2c0] sm:$0xff]
    %v594 = vld [vmem:[%s504 + $0x2c8] sm:$0xff]
    %v595 = vld [vmem:[%s504 + $0x2d0] sm:$0xff]
    %v596 = vld [vmem:[%s504 + $0x2d8] sm:$0xff]
    %v597 = vld [vmem:[%s504 + $0x2e0] sm:$0xff]
    %v598 = vld [vmem:[%s504 + $0x2e8] sm:$0xff]
    %v599 = vld [vmem:[%s504 + $0x2f0] sm:$0xff]
    %v600 = vld [vmem:[%s504 + $0x2f8] sm:$0xff]
    %v601 = vld [vmem:[%s504 + $0x300] sm:$0xff]
    %v602 = vld [vmem:[%s504 + $0x308] sm:$0xff]
    %v603 = vld [vmem:[%s504 + $0x310] sm:$0xff]
    %v604 = vld [vmem:[%s504 + $0x318] sm:$0xff]
    %v605 = vld [vmem:[%s504 + $0x320] sm:$0xff]
    %v606 = vld [vmem:[%s504 + $0x328] sm:$0xff]
    %v607 = vld [vmem:[%s504 + $0x330] sm:$0xff]
    %v608 = vld [vmem:[%s504 + $0x338] sm:$0xff]
    %v609 = vld [vmem:[%s504 + $0x340] sm:$0xff]
    %v610 = vld [vmem:[%s504 + $0x348] sm:$0xff]
    %v611 = vld [vmem:[%s504 + $0x350] sm:$0xff]
    %v612 = vld [vmem:[%s504 + $0x358] sm:$0xff]
    %v613 = vld [vmem:[%s504 + $0x360] sm:$0xff]
    %v614 = vld [vmem:[%s504 + $0x368] sm:$0xff]
    %v615 = vld [vmem:[%s504 + $0x370] sm:$0xff]
    %v616 = vld [vmem:[%s504 + $0x378] sm:$0xff]
    %v617 = vld [vmem:[%s504 + $0x380] sm:$0xff]
    %v618 = vld [vmem:[%s504 + $0x388] sm:$0xff]
    %v619 = vld [vmem:[%s504 + $0x390] sm:$0xff]
    %v620 = vld [vmem:[%s504 + $0x398] sm:$0xff]
    %v621 = vld [vmem:[%s504 + $0x3a0] sm:$0xff]
    %v622 = vld [vmem:[%s504 + $0x3a8] sm:$0xff]
    %v623 = vld [vmem:[%s504 + $0x3b0] sm:$0xff]
    %v624 = vld [vmem:[%s504 + $0x3b8] sm:$0xff]
    %v625 = vld [vmem:[%s504 + $0x3c0] sm:$0xff]
    %v626 = vld [vmem:[%s504 + $0x3c8] sm:$0xff]
    %v627 = vld [vmem:[%s504 + $0x3d0] sm:$0xff]
    %v628 = vld [vmem:[%s504 + $0x3d8] sm:$0xff]
    %v629 = vld [vmem:[%s504 + $0x3e0] sm:$0xff]
    %v630 = vld [vmem:[%s504 + $0x3e8] sm:$0xff]
    %v631 = vld [vmem:[%s504 + $0x3f0] sm:$0xff]
    %v632 = vld [vmem:[%s504 + $0x3f8] sm:$0xff]
    %v633 = vld [vmem:[%s504 + $0x400] sm:$0xff]
    %v634 = vld [vmem:[%s504 + $0x408] sm:$0xff]
    %v635 = vld [vmem:[%s504 + $0x410] sm:$0xff]
    %v636 = vld [vmem:[%s504 + $0x418] sm:$0xff]
    %v637 = vld [vmem:[%s504 + $0x420] sm:$0xff]
    %v638 = vld [vmem:[%s504 + $0x428] sm:$0xff]
    %v639 = vld [vmem:[%s504 + $0x430] sm:$0xff]
    %v640 = vld [vmem:[%s504 + $0x438] sm:$0xff]
    %v641 = vld [vmem:[%s504 + $0x440] sm:$0xff]
    %v642 = vld [vmem:[%s504 + $0x448] sm:$0xff]
    %v643 = vld [vmem:[%s504 + $0x450] sm:$0xff]
    %v644 = vld [vmem:[%s504 + $0x458] sm:$0xff]
    %v645 = vld [vmem:[%s504 + $0x460] sm:$0xff]
    %v646 = vld [vmem:[%s504 + $0x468] sm:$0xff]
    %v647 = vld [vmem:[%s504 + $0x470] sm:$0xff]
    %v648 = vld [vmem:[%s504 + $0x478] sm:$0xff]
    %v649 = vld [vmem:[%s504 + $0x480] sm:$0xff]
    %v650 = vld [vmem:[%s504 + $0x488] sm:$0xff]
    %v651 = vld [vmem:[%s504 + $0x490] sm:$0xff]
    %v652 = vld [vmem:[%s504 + $0x498] sm:$0xff]
    %v653 = vld [vmem:[%s504 + $0x4a0] sm:$0xff]
    %v654 = vld [vmem:[%s504 + $0x4a8] sm:$0xff]
    %v655 = vld [vmem:[%s504 + $0x4b0] sm:$0xff]
    %v656 = vld [vmem:[%s504 + $0x4b8] sm:$0xff]
    %v657 = vld [vmem:[%s504 + $0x4c0] sm:$0xff]
    %v658 = vld [vmem:[%s504 + $0x4c8] sm:$0xff]
    %v659 = vld [vmem:[%s504 + $0x4d0] sm:$0xff]
    %v660 = vld [vmem:[%s504 + $0x4d8] sm:$0xff]
    %v661 = vld [vmem:[%s504 + $0x4e0] sm:$0xff]
    %v662 = vld [vmem:[%s504 + $0x4e8] sm:$0xff]
    %v663 = vld [vmem:[%s504 + $0x4f0] sm:$0xff]
    %v664 = vld [vmem:[%s504 + $0x4f8] sm:$0xff]
    %v665 = vadd.f32 %v344, %v505
    %v666 = vadd.f32 %v345, %v506
    %v667 = vadd.f32 %v346, %v507
    %v668 = vadd.f32 %v347, %v508
    %v669 = vadd.f32 %v348, %v509
    %v670 = vadd.f32 %v349, %v510
    %v671 = vadd.f32 %v350, %v511
    %v672 = vadd.f32 %v351, %v512
    %v673 = vadd.f32 %v352, %v513
    %v674 = vadd.f32 %v353, %v514
    %v675 = vadd.f32 %v354, %v515
    %v676 = vadd.f32 %v355, %v516
    %v677 = vadd.f32 %v356, %v517
    %v678 = vadd.f32 %v357, %v518
    %v679 = vadd.f32 %v358, %v519
    %v680 = vadd.f32 %v359, %v520
    %v681 = vadd.f32 %v360, %v521
    %v682 = vadd.f32 %v361, %v522
    %v683 = vadd.f32 %v362, %v523
    %v684 = vadd.f32 %v363, %v524
    %v685 = vadd.f32 %v364, %v525
    %v686 = vadd.f32 %v365, %v526
    %v687 = vadd.f32 %v366, %v527
    %v688 = vadd.f32 %v367, %v528
    %v689 = vadd.f32 %v368, %v529
    %v690 = vadd.f32 %v369, %v530
    %v691 = vadd.f32 %v370, %v531
    %v692 = vadd.f32 %v371, %v532
    %v693 = vadd.f32 %v372, %v533
    %v694 = vadd.f32 %v373, %v534
    %v695 = vadd.f32 %v374, %v535
    %v696 = vadd.f32 %v375, %v536
    %v697 = vadd.f32 %v376, %v537
    %v698 = vadd.f32 %v377, %v538
    %v699 = vadd.f32 %v378, %v539
    %v700 = vadd.f32 %v379, %v540
    %v701 = vadd.f32 %v380, %v541
    %v702 = vadd.f32 %v381, %v542
    %v703 = vadd.f32 %v382, %v543
    %v704 = vadd.f32 %v383, %v544
    %v705 = vadd.f32 %v384, %v545
    %v706 = vadd.f32 %v385, %v546
    %v707 = vadd.f32 %v386, %v547
    %v708 = vadd.f32 %v387, %v548
    %v709 = vadd.f32 %v388, %v549
    %v710 = vadd.f32 %v389, %v550
    %v711 = vadd.f32 %v390, %v551
    %v712 = vadd.f32 %v391, %v552
    %v713 = vadd.f32 %v392, %v553
    %v714 = vadd.f32 %v393, %v554
    %v715 = vadd.f32 %v394, %v555
    %v716 = vadd.f32 %v395, %v556
    %v717 = vadd.f32 %v396, %v557
    %v718 = vadd.f32 %v397, %v558
    %v719 = vadd.f32 %v398, %v559
    %v720 = vadd.f32 %v399, %v560
    %v721 = vadd.f32 %v400, %v561
    %v722 = vadd.f32 %v401, %v562
    %v723 = vadd.f32 %v402, %v563
    %v724 = vadd.f32 %v403, %v564
    %v725 = vadd.f32 %v404, %v565
    %v726 = vadd.f32 %v405, %v566
    %v727 = vadd.f32 %v406, %v567
    %v728 = vadd.f32 %v407, %v568
    %v729 = vadd.f32 %v408, %v569
    %v730 = vadd.f32 %v409, %v570
    %v731 = vadd.f32 %v410, %v571
    %v732 = vadd.f32 %v411, %v572
    %v733 = vadd.f32 %v412, %v573
    %v734 = vadd.f32 %v413, %v574
    %v735 = vadd.f32 %v414, %v575
    %v736 = vadd.f32 %v415, %v576
    %v737 = vadd.f32 %v416, %v577
    %v738 = vadd.f32 %v417, %v578
    %v739 = vadd.f32 %v418, %v579
    %v740 = vadd.f32 %v419, %v580
    %v741 = vadd.f32 %v420, %v581
    %v742 = vadd.f32 %v421, %v582
    %v743 = vadd.f32 %v422, %v583
    %v744 = vadd.f32 %v423, %v584
    %v745 = vadd.f32 %v424, %v585
    %v746 = vadd.f32 %v425, %v586
    %v747 = vadd.f32 %v426, %v587
    %v748 = vadd.f32 %v427, %v588
    %v749 = vadd.f32 %v428, %v589
    %v750 = vadd.f32 %v429, %v590
    %v751 = vadd.f32 %v430, %v591
    %v752 = vadd.f32 %v431, %v592
    %v753 = vadd.f32 %v432, %v593
    %v754 = vadd.f32 %v433, %v594
    %v755 = vadd.f32 %v434, %v595
    %v756 = vadd.f32 %v435, %v596
    %v757 = vadd.f32 %v436, %v597
    %v758 = vadd.f32 %v437, %v598
    %v759 = vadd.f32 %v438, %v599
    %v760 = vadd.f32 %v439, %v600
    %v761 = vadd.f32 %v440, %v601
    %v762 = vadd.f32 %v441, %v602
    %v763 = vadd.f32 %v442, %v603
    %v764 = vadd.f32 %v443, %v604
    %v765 = vadd.f32 %v444, %v605
    %v766 = vadd.f32 %v445, %v606
    %v767 = vadd.f32 %v446, %v607
    %v768 = vadd.f32 %v447, %v608
    %v769 = vadd.f32 %v448, %v609
    %v770 = vadd.f32 %v449, %v610
    %v771 = vadd.f32 %v450, %v611
    %v772 = vadd.f32 %v451, %v612
    %v773 = vadd.f32 %v452, %v613
    %v774 = vadd.f32 %v453, %v614
    %v775 = vadd.f32 %v454, %v615
    %v776 = vadd.f32 %v455, %v616
    %v777 = vadd.f32 %v456, %v617
    %v778 = vadd.f32 %v457, %v618
    %v779 = vadd.f32 %v458, %v619
    %v780 = vadd.f32 %v459, %v620
    %v781 = vadd.f32 %v460, %v621
    %v782 = vadd.f32 %v461, %v622
    %v783 = vadd.f32 %v462, %v623
    %v784 = vadd.f32 %v463, %v624
    %v785 = vadd.f32 %v464, %v625
    %v786 = vadd.f32 %v465, %v626
    %v787 = vadd.f32 %v466, %v627
    %v788 = vadd.f32 %v467, %v628
    %v789 = vadd.f32 %v468, %v629
    %v790 = vadd.f32 %v469, %v630
    %v791 = vadd.f32 %v470, %v631
    %v792 = vadd.f32 %v471, %v632
    %v793 = vadd.f32 %v472, %v633
    %v794 = vadd.f32 %v473, %v634
    %v795 = vadd.f32 %v474, %v635
    %v796 = vadd.f32 %v475, %v636
    %v797 = vadd.f32 %v476, %v637
    %v798 = vadd.f32 %v477, %v638
    %v799 = vadd.f32 %v478, %v639
    %v800 = vadd.f32 %v479, %v640
    %v801 = vadd.f32 %v480, %v641
    %v802 = vadd.f32 %v481, %v642
    %v803 = vadd.f32 %v482, %v643
    %v804 = vadd.f32 %v483, %v644
    %v805 = vadd.f32 %v484, %v645
    %v806 = vadd.f32 %v485, %v646
    %v807 = vadd.f32 %v486, %v647
    %v808 = vadd.f32 %v487, %v648
    %v809 = vadd.f32 %v488, %v649
    %v810 = vadd.f32 %v489, %v650
    %v811 = vadd.f32 %v490, %v651
    %v812 = vadd.f32 %v491, %v652
    %v813 = vadd.f32 %v492, %v653
    %v814 = vadd.f32 %v493, %v654
    %v815 = vadd.f32 %v494, %v655
    %v816 = vadd.f32 %v495, %v656
    %v817 = vadd.f32 %v496, %v657
    %v818 = vadd.f32 %v497, %v658
    %v819 = vadd.f32 %v498, %v659
    %v820 = vadd.f32 %v499, %v660
    %v821 = vadd.f32 %v500, %v661
    %v822 = vadd.f32 %v501, %v662
    %v823 = vadd.f32 %v502, %v663
    %v824 = vadd.f32 %v503, %v664
    %s825 = scalar_lea.vmem [#allocation2], 384
    %v826 = vld [vmem:[%s825] sm:$0xff]
    %v827 = vld [vmem:[%s825 + $0x8] sm:$0xff]
    %v828 = vld [vmem:[%s825 + $0x10] sm:$0xff]
    %v829 = vld [vmem:[%s825 + $0x18] sm:$0xff]
    %v830 = vld [vmem:[%s825 + $0x20] sm:$0xff]
    %v831 = vld [vmem:[%s825 + $0x28] sm:$0xff]
    %v832 = vld [vmem:[%s825 + $0x30] sm:$0xff]
    %v833 = vld [vmem:[%s825 + $0x38] sm:$0xff]
    %v834 = vld [vmem:[%s825 + $0x40] sm:$0xff]
    %v835 = vld [vmem:[%s825 + $0x48] sm:$0xff]
    %v836 = vld [vmem:[%s825 + $0x50] sm:$0xff]
    %v837 = vld [vmem:[%s825 + $0x58] sm:$0xff]
    %v838 = vld [vmem:[%s825 + $0x60] sm:$0xff]
    %v839 = vld [vmem:[%s825 + $0x68] sm:$0xff]
    %v840 = vld [vmem:[%s825 + $0x70] sm:$0xff]
    %v841 = vld [vmem:[%s825 + $0x78] sm:$0xff]
    %v842 = vld [vmem:[%s825 + $0x80] sm:$0xff]
    %v843 = vld [vmem:[%s825 + $0x88] sm:$0xff]
    %v844 = vld [vmem:[%s825 + $0x90] sm:$0xff]
    %v845 = vld [vmem:[%s825 + $0x98] sm:$0xff]
    %v846 = vld [vmem:[%s825 + $0xa0] sm:$0xff]
    %v847 = vld [vmem:[%s825 + $0xa8] sm:$0xff]
    %v848 = vld [vmem:[%s825 + $0xb0] sm:$0xff]
    %v849 = vld [vmem:[%s825 + $0xb8] sm:$0xff]
    %v850 = vld [vmem:[%s825 + $0xc0] sm:$0xff]
    %v851 = vld [vmem:[%s825 + $0xc8] sm:$0xff]
    %v852 = vld [vmem:[%s825 + $0xd0] sm:$0xff]
    %v853 = vld [vmem:[%s825 + $0xd8] sm:$0xff]
    %v854 = vld [vmem:[%s825 + $0xe0] sm:$0xff]
    %v855 = vld [vmem:[%s825 + $0xe8] sm:$0xff]
    %v856 = vld [vmem:[%s825 + $0xf0] sm:$0xff]
    %v857 = vld [vmem:[%s825 + $0xf8] sm:$0xff]
    %v858 = vld [vmem:[%s825 + $0x100] sm:$0xff]
    %v859 = vld [vmem:[%s825 + $0x108] sm:$0xff]
    %v860 = vld [vmem:[%s825 + $0x110] sm:$0xff]
    %v861 = vld [vmem:[%s825 + $0x118] sm:$0xff]
    %v862 = vld [vmem:[%s825 + $0x120] sm:$0xff]
    %v863 = vld [vmem:[%s825 + $0x128] sm:$0xff]
    %v864 = vld [vmem:[%s825 + $0x130] sm:$0xff]
    %v865 = vld [vmem:[%s825 + $0x138] sm:$0xff]
    %v866 = vld [vmem:[%s825 + $0x140] sm:$0xff]
    %v867 = vld [vmem:[%s825 + $0x148] sm:$0xff]
    %v868 = vld [vmem:[%s825 + $0x150] sm:$0xff]
    %v869 = vld [vmem:[%s825 + $0x158] sm:$0xff]
    %v870 = vld [vmem:[%s825 + $0x160] sm:$0xff]
    %v871 = vld [vmem:[%s825 + $0x168] sm:$0xff]
    %v872 = vld [vmem:[%s825 + $0x170] sm:$0xff]
    %v873 = vld [vmem:[%s825 + $0x178] sm:$0xff]
    %v874 = vld [vmem:[%s825 + $0x180] sm:$0xff]
    %v875 = vld [vmem:[%s825 + $0x188] sm:$0xff]
    %v876 = vld [vmem:[%s825 + $0x190] sm:$0xff]
    %v877 = vld [vmem:[%s825 + $0x198] sm:$0xff]
    %v878 = vld [vmem:[%s825 + $0x1a0] sm:$0xff]
    %v879 = vld [vmem:[%s825 + $0x1a8] sm:$0xff]
    %v880 = vld [vmem:[%s825 + $0x1b0] sm:$0xff]
    %v881 = vld [vmem:[%s825 + $0x1b8] sm:$0xff]
    %v882 = vld [vmem:[%s825 + $0x1c0] sm:$0xff]
    %v883 = vld [vmem:[%s825 + $0x1c8] sm:$0xff]
    %v884 = vld [vmem:[%s825 + $0x1d0] sm:$0xff]
    %v885 = vld [vmem:[%s825 + $0x1d8] sm:$0xff]
    %v886 = vld [vmem:[%s825 + $0x1e0] sm:$0xff]
    %v887 = vld [vmem:[%s825 + $0x1e8] sm:$0xff]
    %v888 = vld [vmem:[%s825 + $0x1f0] sm:$0xff]
    %v889 = vld [vmem:[%s825 + $0x1f8] sm:$0xff]
    %v890 = vld [vmem:[%s825 + $0x200] sm:$0xff]
    %v891 = vld [vmem:[%s825 + $0x208] sm:$0xff]
    %v892 = vld [vmem:[%s825 + $0x210] sm:$0xff]
    %v893 = vld [vmem:[%s825 + $0x218] sm:$0xff]
    %v894 = vld [vmem:[%s825 + $0x220] sm:$0xff]
    %v895 = vld [vmem:[%s825 + $0x228] sm:$0xff]
    %v896 = vld [vmem:[%s825 + $0x230] sm:$0xff]
    %v897 = vld [vmem:[%s825 + $0x238] sm:$0xff]
    %v898 = vld [vmem:[%s825 + $0x240] sm:$0xff]
    %v899 = vld [vmem:[%s825 + $0x248] sm:$0xff]
    %v900 = vld [vmem:[%s825 + $0x250] sm:$0xff]
    %v901 = vld [vmem:[%s825 + $0x258] sm:$0xff]
    %v902 = vld [vmem:[%s825 + $0x260] sm:$0xff]
    %v903 = vld [vmem:[%s825 + $0x268] sm:$0xff]
    %v904 = vld [vmem:[%s825 + $0x270] sm:$0xff]
    %v905 = vld [vmem:[%s825 + $0x278] sm:$0xff]
    %v906 = vld [vmem:[%s825 + $0x280] sm:$0xff]
    %v907 = vld [vmem:[%s825 + $0x288] sm:$0xff]
    %v908 = vld [vmem:[%s825 + $0x290] sm:$0xff]
    %v909 = vld [vmem:[%s825 + $0x298] sm:$0xff]
    %v910 = vld [vmem:[%s825 + $0x2a0] sm:$0xff]
    %v911 = vld [vmem:[%s825 + $0x2a8] sm:$0xff]
    %v912 = vld [vmem:[%s825 + $0x2b0] sm:$0xff]
    %v913 = vld [vmem:[%s825 + $0x2b8] sm:$0xff]
    %v914 = vld [vmem:[%s825 + $0x2c0] sm:$0xff]
    %v915 = vld [vmem:[%s825 + $0x2c8] sm:$0xff]
    %v916 = vld [vmem:[%s825 + $0x2d0] sm:$0xff]
    %v917 = vld [vmem:[%s825 + $0x2d8] sm:$0xff]
    %v918 = vld [vmem:[%s825 + $0x2e0] sm:$0xff]
    %v919 = vld [vmem:[%s825 + $0x2e8] sm:$0xff]
    %v920 = vld [vmem:[%s825 + $0x2f0] sm:$0xff]
    %v921 = vld [vmem:[%s825 + $0x2f8] sm:$0xff]
    %v922 = vld [vmem:[%s825 + $0x300] sm:$0xff]
    %v923 = vld [vmem:[%s825 + $0x308] sm:$0xff]
    %v924 = vld [vmem:[%s825 + $0x310] sm:$0xff]
    %v925 = vld [vmem:[%s825 + $0x318] sm:$0xff]
    %v926 = vld [vmem:[%s825 + $0x320] sm:$0xff]
    %v927 = vld [vmem:[%s825 + $0x328] sm:$0xff]
    %v928 = vld [vmem:[%s825 + $0x330] sm:$0xff]
    %v929 = vld [vmem:[%s825 + $0x338] sm:$0xff]
    %v930 = vld [vmem:[%s825 + $0x340] sm:$0xff]
    %v931 = vld [vmem:[%s825 + $0x348] sm:$0xff]
    %v932 = vld [vmem:[%s825 + $0x350] sm:$0xff]
    %v933 = vld [vmem:[%s825 + $0x358] sm:$0xff]
    %v934 = vld [vmem:[%s825 + $0x360] sm:$0xff]
    %v935 = vld [vmem:[%s825 + $0x368] sm:$0xff]
    %v936 = vld [vmem:[%s825 + $0x370] sm:$0xff]
    %v937 = vld [vmem:[%s825 + $0x378] sm:$0xff]
    %v938 = vld [vmem:[%s825 + $0x380] sm:$0xff]
    %v939 = vld [vmem:[%s825 + $0x388] sm:$0xff]
    %v940 = vld [vmem:[%s825 + $0x390] sm:$0xff]
    %v941 = vld [vmem:[%s825 + $0x398] sm:$0xff]
    %v942 = vld [vmem:[%s825 + $0x3a0] sm:$0xff]
    %v943 = vld [vmem:[%s825 + $0x3a8] sm:$0xff]
    %v944 = vld [vmem:[%s825 + $0x3b0] sm:$0xff]
    %v945 = vld [vmem:[%s825 + $0x3b8] sm:$0xff]
    %v946 = vld [vmem:[%s825 + $0x3c0] sm:$0xff]
    %v947 = vld [vmem:[%s825 + $0x3c8] sm:$0xff]
    %v948 = vld [vmem:[%s825 + $0x3d0] sm:$0xff]
    %v949 = vld [vmem:[%s825 + $0x3d8] sm:$0xff]
    %v950 = vld [vmem:[%s825 + $0x3e0] sm:$0xff]
    %v951 = vld [vmem:[%s825 + $0x3e8] sm:$0xff]
    %v952 = vld [vmem:[%s825 + $0x3f0] sm:$0xff]
    %v953 = vld [vmem:[%s825 + $0x3f8] sm:$0xff]
    %v954 = vld [vmem:[%s825 + $0x400] sm:$0xff]
    %v955 = vld [vmem:[%s825 + $0x408] sm:$0xff]
    %v956 = vld [vmem:[%s825 + $0x410] sm:$0xff]
    %v957 = vld [vmem:[%s825 + $0x418] sm:$0xff]
    %v958 = vld [vmem:[%s825 + $0x420] sm:$0xff]
    %v959 = vld [vmem:[%s825 + $0x428] sm:$0xff]
    %v960 = vld [vmem:[%s825 + $0x430] sm:$0xff]
    %v961 = vld [vmem:[%s825 + $0x438] sm:$0xff]
    %v962 = vld [vmem:[%s825 + $0x440] sm:$0xff]
    %v963 = vld [vmem:[%s825 + $0x448] sm:$0xff]
    %v964 = vld [vmem:[%s825 + $0x450] sm:$0xff]
    %v965 = vld [vmem:[%s825 + $0x458] sm:$0xff]
    %v966 = vld [vmem:[%s825 + $0x460] sm:$0xff]
    %v967 = vld [vmem:[%s825 + $0x468] sm:$0xff]
    %v968 = vld [vmem:[%s825 + $0x470] sm:$0xff]
    %v969 = vld [vmem:[%s825 + $0x478] sm:$0xff]
    %v970 = vld [vmem:[%s825 + $0x480] sm:$0xff]
    %v971 = vld [vmem:[%s825 + $0x488] sm:$0xff]
    %v972 = vld [vmem:[%s825 + $0x490] sm:$0xff]
    %v973 = vld [vmem:[%s825 + $0x498] sm:$0xff]
    %v974 = vld [vmem:[%s825 + $0x4a0] sm:$0xff]
    %v975 = vld [vmem:[%s825 + $0x4a8] sm:$0xff]
    %v976 = vld [vmem:[%s825 + $0x4b0] sm:$0xff]
    %v977 = vld [vmem:[%s825 + $0x4b8] sm:$0xff]
    %v978 = vld [vmem:[%s825 + $0x4c0] sm:$0xff]
    %v979 = vld [vmem:[%s825 + $0x4c8] sm:$0xff]
    %v980 = vld [vmem:[%s825 + $0x4d0] sm:$0xff]
    %v981 = vld [vmem:[%s825 + $0x4d8] sm:$0xff]
    %v982 = vld [vmem:[%s825 + $0x4e0] sm:$0xff]
    %v983 = vld [vmem:[%s825 + $0x4e8] sm:$0xff]
    %v984 = vld [vmem:[%s825 + $0x4f0] sm:$0xff]
    %v985 = vld [vmem:[%s825 + $0x4f8] sm:$0xff]
    %v986 = vadd.f32 %v665, %v826
    %v987 = vadd.f32 %v666, %v827
    %v988 = vadd.f32 %v667, %v828
    %v989 = vadd.f32 %v668, %v829
    %v990 = vadd.f32 %v669, %v830
    %v991 = vadd.f32 %v670, %v831
    %v992 = vadd.f32 %v671, %v832
    %v993 = vadd.f32 %v672, %v833
    %v994 = vadd.f32 %v673, %v834
    %v995 = vadd.f32 %v674, %v835
    %v996 = vadd.f32 %v675, %v836
    %v997 = vadd.f32 %v676, %v837
    %v998 = vadd.f32 %v677, %v838
    %v999 = vadd.f32 %v678, %v839
    %v1000 = vadd.f32 %v679, %v840
    %v1001 = vadd.f32 %v680, %v841
    %v1002 = vadd.f32 %v681, %v842
    %v1003 = vadd.f32 %v682, %v843
    %v1004 = vadd.f32 %v683, %v844
    %v1005 = vadd.f32 %v684, %v845
    %v1006 = vadd.f32 %v685, %v846
    %v1007 = vadd.f32 %v686, %v847
    %v1008 = vadd.f32 %v687, %v848
    %v1009 = vadd.f32 %v688, %v849
    %v1010 = vadd.f32 %v689, %v850
    %v1011 = vadd.f32 %v690, %v851
    %v1012 = vadd.f32 %v691, %v852
    %v1013 = vadd.f32 %v692, %v853
    %v1014 = vadd.f32 %v693, %v854
    %v1015 = vadd.f32 %v694, %v855
    %v1016 = vadd.f32 %v695, %v856
    %v1017 = vadd.f32 %v696, %v857
    %v1018 = vadd.f32 %v697, %v858
    %v1019 = vadd.f32 %v698, %v859
    %v1020 = vadd.f32 %v699, %v860
    %v1021 = vadd.f32 %v700, %v861
    %v1022 = vadd.f32 %v701, %v862
    %v1023 = vadd.f32 %v702, %v863
    %v1024 = vadd.f32 %v703, %v864
    %v1025 = vadd.f32 %v704, %v865
    %v1026 = vadd.f32 %v705, %v866
    %v1027 = vadd.f32 %v706, %v867
    %v1028 = vadd.f32 %v707, %v868
    %v1029 = vadd.f32 %v708, %v869
    %v1030 = vadd.f32 %v709, %v870
    %v1031 = vadd.f32 %v710, %v871
    %v1032 = vadd.f32 %v711, %v872
    %v1033 = vadd.f32 %v712, %v873
    %v1034 = vadd.f32 %v713, %v874
    %v1035 = vadd.f32 %v714, %v875
    %v1036 = vadd.f32 %v715, %v876
    %v1037 = vadd.f32 %v716, %v877
    %v1038 = vadd.f32 %v717, %v878
    %v1039 = vadd.f32 %v718, %v879
    %v1040 = vadd.f32 %v719, %v880
    %v1041 = vadd.f32 %v720, %v881
    %v1042 = vadd.f32 %v721, %v882
    %v1043 = vadd.f32 %v722, %v883
    %v1044 = vadd.f32 %v723, %v884
    %v1045 = vadd.f32 %v724, %v885
    %v1046 = vadd.f32 %v725, %v886
    %v1047 = vadd.f32 %v726, %v887
    %v1048 = vadd.f32 %v727, %v888
    %v1049 = vadd.f32 %v728, %v889
    %v1050 = vadd.f32 %v729, %v890
    %v1051 = vadd.f32 %v730, %v891
    %v1052 = vadd.f32 %v731, %v892
    %v1053 = vadd.f32 %v732, %v893
    %v1054 = vadd.f32 %v733, %v894
    %v1055 = vadd.f32 %v734, %v895
    %v1056 = vadd.f32 %v735, %v896
    %v1057 = vadd.f32 %v736, %v897
    %v1058 = vadd.f32 %v737, %v898
    %v1059 = vadd.f32 %v738, %v899
    %v1060 = vadd.f32 %v739, %v900
    %v1061 = vadd.f32 %v740, %v901
    %v1062 = vadd.f32 %v741, %v902
    %v1063 = vadd.f32 %v742, %v903
    %v1064 = vadd.f32 %v743, %v904
    %v1065 = vadd.f32 %v744, %v905
    %v1066 = vadd.f32 %v745, %v906
    %v1067 = vadd.f32 %v746, %v907
    %v1068 = vadd.f32 %v747, %v908
    %v1069 = vadd.f32 %v748, %v909
    %v1070 = vadd.f32 %v749, %v910
    %v1071 = vadd.f32 %v750, %v911
    %v1072 = vadd.f32 %v751, %v912
    %v1073 = vadd.f32 %v752, %v913
    %v1074 = vadd.f32 %v753, %v914
    %v1075 = vadd.f32 %v754, %v915
    %v1076 = vadd.f32 %v755, %v916
    %v1077 = vadd.f32 %v756, %v917
    %v1078 = vadd.f32 %v757, %v918
    %v1079 = vadd.f32 %v758, %v919
    %v1080 = vadd.f32 %v759, %v920
    %v1081 = vadd.f32 %v760, %v921
    %v1082 = vadd.f32 %v761, %v922
    %v1083 = vadd.f32 %v762, %v923
    %v1084 = vadd.f32 %v763, %v924
    %v1085 = vadd.f32 %v764, %v925
    %v1086 = vadd.f32 %v765, %v926
    %v1087 = vadd.f32 %v766, %v927
    %v1088 = vadd.f32 %v767, %v928
    %v1089 = vadd.f32 %v768, %v929
    %v1090 = vadd.f32 %v769, %v930
    %v1091 = vadd.f32 %v770, %v931
    %v1092 = vadd.f32 %v771, %v932
    %v1093 = vadd.f32 %v772, %v933
    %v1094 = vadd.f32 %v773, %v934
    %v1095 = vadd.f32 %v774, %v935
    %v1096 = vadd.f32 %v775, %v936
    %v1097 = vadd.f32 %v776, %v937
    %v1098 = vadd.f32 %v777, %v938
    %v1099 = vadd.f32 %v778, %v939
    %v1100 = vadd.f32 %v779, %v940
    %v1101 = vadd.f32 %v780, %v941
    %v1102 = vadd.f32 %v781, %v942
    %v1103 = vadd.f32 %v782, %v943
    %v1104 = vadd.f32 %v783, %v944
    %v1105 = vadd.f32 %v784, %v945
    %v1106 = vadd.f32 %v785, %v946
    %v1107 = vadd.f32 %v786, %v947
    %v1108 = vadd.f32 %v787, %v948
    %v1109 = vadd.f32 %v788, %v949
    %v1110 = vadd.f32 %v789, %v950
    %v1111 = vadd.f32 %v790, %v951
    %v1112 = vadd.f32 %v791, %v952
    %v1113 = vadd.f32 %v792, %v953
    %v1114 = vadd.f32 %v793, %v954
    %v1115 = vadd.f32 %v794, %v955
    %v1116 = vadd.f32 %v795, %v956
    %v1117 = vadd.f32 %v796, %v957
    %v1118 = vadd.f32 %v797, %v958
    %v1119 = vadd.f32 %v798, %v959
    %v1120 = vadd.f32 %v799, %v960
    %v1121 = vadd.f32 %v800, %v961
    %v1122 = vadd.f32 %v801, %v962
    %v1123 = vadd.f32 %v802, %v963
    %v1124 = vadd.f32 %v803, %v964
    %v1125 = vadd.f32 %v804, %v965
    %v1126 = vadd.f32 %v805, %v966
    %v1127 = vadd.f32 %v806, %v967
    %v1128 = vadd.f32 %v807, %v968
    %v1129 = vadd.f32 %v808, %v969
    %v1130 = vadd.f32 %v809, %v970
    %v1131 = vadd.f32 %v810, %v971
    %v1132 = vadd.f32 %v811, %v972
    %v1133 = vadd.f32 %v812, %v973
    %v1134 = vadd.f32 %v813, %v974
    %v1135 = vadd.f32 %v814, %v975
    %v1136 = vadd.f32 %v815, %v976
    %v1137 = vadd.f32 %v816, %v977
    %v1138 = vadd.f32 %v817, %v978
    %v1139 = vadd.f32 %v818, %v979
    %v1140 = vadd.f32 %v819, %v980
    %v1141 = vadd.f32 %v820, %v981
    %v1142 = vadd.f32 %v821, %v982
    %v1143 = vadd.f32 %v822, %v983
    %v1144 = vadd.f32 %v823, %v984
    %v1145 = vadd.f32 %v824, %v985
    %s1146 = scalar_lea.vmem [#allocation2], 512
    %v1147 = vld [vmem:[%s1146] sm:$0xff]
    %v1148 = vld [vmem:[%s1146 + $0x8] sm:$0xff]
    %v1149 = vld [vmem:[%s1146 + $0x10] sm:$0xff]
    %v1150 = vld [vmem:[%s1146 + $0x18] sm:$0xff]
    %v1151 = vld [vmem:[%s1146 + $0x20] sm:$0xff]
    %v1152 = vld [vmem:[%s1146 + $0x28] sm:$0xff]
    %v1153 = vld [vmem:[%s1146 + $0x30] sm:$0xff]
    %v1154 = vld [vmem:[%s1146 + $0x38] sm:$0xff]
    %v1155 = vld [vmem:[%s1146 + $0x40] sm:$0xff]
    %v1156 = vld [vmem:[%s1146 + $0x48] sm:$0xff]
    %v1157 = vld [vmem:[%s1146 + $0x50] sm:$0xff]
    %v1158 = vld [vmem:[%s1146 + $0x58] sm:$0xff]
    %v1159 = vld [vmem:[%s1146 + $0x60] sm:$0xff]
    %v1160 = vld [vmem:[%s1146 + $0x68] sm:$0xff]
    %v1161 = vld [vmem:[%s1146 + $0x70] sm:$0xff]
    %v1162 = vld [vmem:[%s1146 + $0x78] sm:$0xff]
    %v1163 = vld [vmem:[%s1146 + $0x80] sm:$0xff]
    %v1164 = vld [vmem:[%s1146 + $0x88] sm:$0xff]
    %v1165 = vld [vmem:[%s1146 + $0x90] sm:$0xff]
    %v1166 = vld [vmem:[%s1146 + $0x98] sm:$0xff]
    %v1167 = vld [vmem:[%s1146 + $0xa0] sm:$0xff]
    %v1168 = vld [vmem:[%s1146 + $0xa8] sm:$0xff]
    %v1169 = vld [vmem:[%s1146 + $0xb0] sm:$0xff]
    %v1170 = vld [vmem:[%s1146 + $0xb8] sm:$0xff]
    %v1171 = vld [vmem:[%s1146 + $0xc0] sm:$0xff]
    %v1172 = vld [vmem:[%s1146 + $0xc8] sm:$0xff]
    %v1173 = vld [vmem:[%s1146 + $0xd0] sm:$0xff]
    %v1174 = vld [vmem:[%s1146 + $0xd8] sm:$0xff]
    %v1175 = vld [vmem:[%s1146 + $0xe0] sm:$0xff]
    %v1176 = vld [vmem:[%s1146 + $0xe8] sm:$0xff]
    %v1177 = vld [vmem:[%s1146 + $0xf0] sm:$0xff]
    %v1178 = vld [vmem:[%s1146 + $0xf8] sm:$0xff]
    %v1179 = vld [vmem:[%s1146 + $0x100] sm:$0xff]
    %v1180 = vld [vmem:[%s1146 + $0x108] sm:$0xff]
    %v1181 = vld [vmem:[%s1146 + $0x110] sm:$0xff]
    %v1182 = vld [vmem:[%s1146 + $0x118] sm:$0xff]
    %v1183 = vld [vmem:[%s1146 + $0x120] sm:$0xff]
    %v1184 = vld [vmem:[%s1146 + $0x128] sm:$0xff]
    %v1185 = vld [vmem:[%s1146 + $0x130] sm:$0xff]
    %v1186 = vld [vmem:[%s1146 + $0x138] sm:$0xff]
    %v1187 = vld [vmem:[%s1146 + $0x140] sm:$0xff]
    %v1188 = vld [vmem:[%s1146 + $0x148] sm:$0xff]
    %v1189 = vld [vmem:[%s1146 + $0x150] sm:$0xff]
    %v1190 = vld [vmem:[%s1146 + $0x158] sm:$0xff]
    %v1191 = vld [vmem:[%s1146 + $0x160] sm:$0xff]
    %v1192 = vld [vmem:[%s1146 + $0x168] sm:$0xff]
    %v1193 = vld [vmem:[%s1146 + $0x170] sm:$0xff]
    %v1194 = vld [vmem:[%s1146 + $0x178] sm:$0xff]
    %v1195 = vld [vmem:[%s1146 + $0x180] sm:$0xff]
    %v1196 = vld [vmem:[%s1146 + $0x188] sm:$0xff]
    %v1197 = vld [vmem:[%s1146 + $0x190] sm:$0xff]
    %v1198 = vld [vmem:[%s1146 + $0x198] sm:$0xff]
    %v1199 = vld [vmem:[%s1146 + $0x1a0] sm:$0xff]
    %v1200 = vld [vmem:[%s1146 + $0x1a8] sm:$0xff]
    %v1201 = vld [vmem:[%s1146 + $0x1b0] sm:$0xff]
    %v1202 = vld [vmem:[%s1146 + $0x1b8] sm:$0xff]
    %v1203 = vld [vmem:[%s1146 + $0x1c0] sm:$0xff]
    %v1204 = vld [vmem:[%s1146 + $0x1c8] sm:$0xff]
    %v1205 = vld [vmem:[%s1146 + $0x1d0] sm:$0xff]
    %v1206 = vld [vmem:[%s1146 + $0x1d8] sm:$0xff]
    %v1207 = vld [vmem:[%s1146 + $0x1e0] sm:$0xff]
    %v1208 = vld [vmem:[%s1146 + $0x1e8] sm:$0xff]
    %v1209 = vld [vmem:[%s1146 + $0x1f0] sm:$0xff]
    %v1210 = vld [vmem:[%s1146 + $0x1f8] sm:$0xff]
    %v1211 = vld [vmem:[%s1146 + $0x200] sm:$0xff]
    %v1212 = vld [vmem:[%s1146 + $0x208] sm:$0xff]
    %v1213 = vld [vmem:[%s1146 + $0x210] sm:$0xff]
    %v1214 = vld [vmem:[%s1146 + $0x218] sm:$0xff]
    %v1215 = vld [vmem:[%s1146 + $0x220] sm:$0xff]
    %v1216 = vld [vmem:[%s1146 + $0x228] sm:$0xff]
    %v1217 = vld [vmem:[%s1146 + $0x230] sm:$0xff]
    %v1218 = vld [vmem:[%s1146 + $0x238] sm:$0xff]
    %v1219 = vld [vmem:[%s1146 + $0x240] sm:$0xff]
    %v1220 = vld [vmem:[%s1146 + $0x248] sm:$0xff]
    %v1221 = vld [vmem:[%s1146 + $0x250] sm:$0xff]
    %v1222 = vld [vmem:[%s1146 + $0x258] sm:$0xff]
    %v1223 = vld [vmem:[%s1146 + $0x260] sm:$0xff]
    %v1224 = vld [vmem:[%s1146 + $0x268] sm:$0xff]
    %v1225 = vld [vmem:[%s1146 + $0x270] sm:$0xff]
    %v1226 = vld [vmem:[%s1146 + $0x278] sm:$0xff]
    %v1227 = vld [vmem:[%s1146 + $0x280] sm:$0xff]
    %v1228 = vld [vmem:[%s1146 + $0x288] sm:$0xff]
    %v1229 = vld [vmem:[%s1146 + $0x290] sm:$0xff]
    %v1230 = vld [vmem:[%s1146 + $0x298] sm:$0xff]
    %v1231 = vld [vmem:[%s1146 + $0x2a0] sm:$0xff]
    %v1232 = vld [vmem:[%s1146 + $0x2a8] sm:$0xff]
    %v1233 = vld [vmem:[%s1146 + $0x2b0] sm:$0xff]
    %v1234 = vld [vmem:[%s1146 + $0x2b8] sm:$0xff]
    %v1235 = vld [vmem:[%s1146 + $0x2c0] sm:$0xff]
    %v1236 = vld [vmem:[%s1146 + $0x2c8] sm:$0xff]
    %v1237 = vld [vmem:[%s1146 + $0x2d0] sm:$0xff]
    %v1238 = vld [vmem:[%s1146 + $0x2d8] sm:$0xff]
    %v1239 = vld [vmem:[%s1146 + $0x2e0] sm:$0xff]
    %v1240 = vld [vmem:[%s1146 + $0x2e8] sm:$0xff]
    %v1241 = vld [vmem:[%s1146 + $0x2f0] sm:$0xff]
    %v1242 = vld [vmem:[%s1146 + $0x2f8] sm:$0xff]
    %v1243 = vld [vmem:[%s1146 + $0x300] sm:$0xff]
    %v1244 = vld [vmem:[%s1146 + $0x308] sm:$0xff]
    %v1245 = vld [vmem:[%s1146 + $0x310] sm:$0xff]
    %v1246 = vld [vmem:[%s1146 + $0x318] sm:$0xff]
    %v1247 = vld [vmem:[%s1146 + $0x320] sm:$0xff]
    %v1248 = vld [vmem:[%s1146 + $0x328] sm:$0xff]
    %v1249 = vld [vmem:[%s1146 + $0x330] sm:$0xff]
    %v1250 = vld [vmem:[%s1146 + $0x338] sm:$0xff]
    %v1251 = vld [vmem:[%s1146 + $0x340] sm:$0xff]
    %v1252 = vld [vmem:[%s1146 + $0x348] sm:$0xff]
    %v1253 = vld [vmem:[%s1146 + $0x350] sm:$0xff]
    %v1254 = vld [vmem:[%s1146 + $0x358] sm:$0xff]
    %v1255 = vld [vmem:[%s1146 + $0x360] sm:$0xff]
    %v1256 = vld [vmem:[%s1146 + $0x368] sm:$0xff]
    %v1257 = vld [vmem:[%s1146 + $0x370] sm:$0xff]
    %v1258 = vld [vmem:[%s1146 + $0x378] sm:$0xff]
    %v1259 = vld [vmem:[%s1146 + $0x380] sm:$0xff]
    %v1260 = vld [vmem:[%s1146 + $0x388] sm:$0xff]
    %v1261 = vld [vmem:[%s1146 + $0x390] sm:$0xff]
    %v1262 = vld [vmem:[%s1146 + $0x398] sm:$0xff]
    %v1263 = vld [vmem:[%s1146 + $0x3a0] sm:$0xff]
    %v1264 = vld [vmem:[%s1146 + $0x3a8] sm:$0xff]
    %v1265 = vld [vmem:[%s1146 + $0x3b0] sm:$0xff]
    %v1266 = vld [vmem:[%s1146 + $0x3b8] sm:$0xff]
    %v1267 = vld [vmem:[%s1146 + $0x3c0] sm:$0xff]
    %v1268 = vld [vmem:[%s1146 + $0x3c8] sm:$0xff]
    %v1269 = vld [vmem:[%s1146 + $0x3d0] sm:$0xff]
    %v1270 = vld [vmem:[%s1146 + $0x3d8] sm:$0xff]
    %v1271 = vld [vmem:[%s1146 + $0x3e0] sm:$0xff]
    %v1272 = vld [vmem:[%s1146 + $0x3e8] sm:$0xff]
    %v1273 = vld [vmem:[%s1146 + $0x3f0] sm:$0xff]
    %v1274 = vld [vmem:[%s1146 + $0x3f8] sm:$0xff]
    %v1275 = vld [vmem:[%s1146 + $0x400] sm:$0xff]
    %v1276 = vld [vmem:[%s1146 + $0x408] sm:$0xff]
    %v1277 = vld [vmem:[%s1146 + $0x410] sm:$0xff]
    %v1278 = vld [vmem:[%s1146 + $0x418] sm:$0xff]
    %v1279 = vld [vmem:[%s1146 + $0x420] sm:$0xff]
    %v1280 = vld [vmem:[%s1146 + $0x428] sm:$0xff]
    %v1281 = vld [vmem:[%s1146 + $0x430] sm:$0xff]
    %v1282 = vld [vmem:[%s1146 + $0x438] sm:$0xff]
    %v1283 = vld [vmem:[%s1146 + $0x440] sm:$0xff]
    %v1284 = vld [vmem:[%s1146 + $0x448] sm:$0xff]
    %v1285 = vld [vmem:[%s1146 + $0x450] sm:$0xff]
    %v1286 = vld [vmem:[%s1146 + $0x458] sm:$0xff]
    %v1287 = vld [vmem:[%s1146 + $0x460] sm:$0xff]
    %v1288 = vld [vmem:[%s1146 + $0x468] sm:$0xff]
    %v1289 = vld [vmem:[%s1146 + $0x470] sm:$0xff]
    %v1290 = vld [vmem:[%s1146 + $0x478] sm:$0xff]
    %v1291 = vld [vmem:[%s1146 + $0x480] sm:$0xff]
    %v1292 = vld [vmem:[%s1146 + $0x488] sm:$0xff]
    %v1293 = vld [vmem:[%s1146 + $0x490] sm:$0xff]
    %v1294 = vld [vmem:[%s1146 + $0x498] sm:$0xff]
    %v1295 = vld [vmem:[%s1146 + $0x4a0] sm:$0xff]
    %v1296 = vld [vmem:[%s1146 + $0x4a8] sm:$0xff]
    %v1297 = vld [vmem:[%s1146 + $0x4b0] sm:$0xff]
    %v1298 = vld [vmem:[%s1146 + $0x4b8] sm:$0xff]
    %v1299 = vld [vmem:[%s1146 + $0x4c0] sm:$0xff]
    %v1300 = vld [vmem:[%s1146 + $0x4c8] sm:$0xff]
    %v1301 = vld [vmem:[%s1146 + $0x4d0] sm:$0xff]
    %v1302 = vld [vmem:[%s1146 + $0x4d8] sm:$0xff]
    %v1303 = vld [vmem:[%s1146 + $0x4e0] sm:$0xff]
    %v1304 = vld [vmem:[%s1146 + $0x4e8] sm:$0xff]
    %v1305 = vld [vmem:[%s1146 + $0x4f0] sm:$0xff]
    %v1306 = vld [vmem:[%s1146 + $0x4f8] sm:$0xff]
    %v1307 = vadd.f32 %v986, %v1147
    %v1308 = vadd.f32 %v987, %v1148
    %v1309 = vadd.f32 %v988, %v1149
    %v1310 = vadd.f32 %v989, %v1150
    %v1311 = vadd.f32 %v990, %v1151
    %v1312 = vadd.f32 %v991, %v1152
    %v1313 = vadd.f32 %v992, %v1153
    %v1314 = vadd.f32 %v993, %v1154
    %v1315 = vadd.f32 %v994, %v1155
    %v1316 = vadd.f32 %v995, %v1156
    %v1317 = vadd.f32 %v996, %v1157
    %v1318 = vadd.f32 %v997, %v1158
    %v1319 = vadd.f32 %v998, %v1159
    %v1320 = vadd.f32 %v999, %v1160
    %v1321 = vadd.f32 %v1000, %v1161
    %v1322 = vadd.f32 %v1001, %v1162
    %v1323 = vadd.f32 %v1002, %v1163
    %v1324 = vadd.f32 %v1003, %v1164
    %v1325 = vadd.f32 %v1004, %v1165
    %v1326 = vadd.f32 %v1005, %v1166
    %v1327 = vadd.f32 %v1006, %v1167
    %v1328 = vadd.f32 %v1007, %v1168
    %v1329 = vadd.f32 %v1008, %v1169
    %v1330 = vadd.f32 %v1009, %v1170
    %v1331 = vadd.f32 %v1010, %v1171
    %v1332 = vadd.f32 %v1011, %v1172
    %v1333 = vadd.f32 %v1012, %v1173
    %v1334 = vadd.f32 %v1013, %v1174
    %v1335 = vadd.f32 %v1014, %v1175
    %v1336 = vadd.f32 %v1015, %v1176
    %v1337 = vadd.f32 %v1016, %v1177
    %v1338 = vadd.f32 %v1017, %v1178
    %v1339 = vadd.f32 %v1018, %v1179
    %v1340 = vadd.f32 %v1019, %v1180
    %v1341 = vadd.f32 %v1020, %v1181
    %v1342 = vadd.f32 %v1021, %v1182
    %v1343 = vadd.f32 %v1022, %v1183
    %v1344 = vadd.f32 %v1023, %v1184
    %v1345 = vadd.f32 %v1024, %v1185
    %v1346 = vadd.f32 %v1025, %v1186
    %v1347 = vadd.f32 %v1026, %v1187
    %v1348 = vadd.f32 %v1027, %v1188
    %v1349 = vadd.f32 %v1028, %v1189
    %v1350 = vadd.f32 %v1029, %v1190
    %v1351 = vadd.f32 %v1030, %v1191
    %v1352 = vadd.f32 %v1031, %v1192
    %v1353 = vadd.f32 %v1032, %v1193
    %v1354 = vadd.f32 %v1033, %v1194
    %v1355 = vadd.f32 %v1034, %v1195
    %v1356 = vadd.f32 %v1035, %v1196
    %v1357 = vadd.f32 %v1036, %v1197
    %v1358 = vadd.f32 %v1037, %v1198
    %v1359 = vadd.f32 %v1038, %v1199
    %v1360 = vadd.f32 %v1039, %v1200
    %v1361 = vadd.f32 %v1040, %v1201
    %v1362 = vadd.f32 %v1041, %v1202
    %v1363 = vadd.f32 %v1042, %v1203
    %v1364 = vadd.f32 %v1043, %v1204
    %v1365 = vadd.f32 %v1044, %v1205
    %v1366 = vadd.f32 %v1045, %v1206
    %v1367 = vadd.f32 %v1046, %v1207
    %v1368 = vadd.f32 %v1047, %v1208
    %v1369 = vadd.f32 %v1048, %v1209
    %v1370 = vadd.f32 %v1049, %v1210
    %v1371 = vadd.f32 %v1050, %v1211
    %v1372 = vadd.f32 %v1051, %v1212
    %v1373 = vadd.f32 %v1052, %v1213
    %v1374 = vadd.f32 %v1053, %v1214
    %v1375 = vadd.f32 %v1054, %v1215
    %v1376 = vadd.f32 %v1055, %v1216
    %v1377 = vadd.f32 %v1056, %v1217
    %v1378 = vadd.f32 %v1057, %v1218
    %v1379 = vadd.f32 %v1058, %v1219
    %v1380 = vadd.f32 %v1059, %v1220
    %v1381 = vadd.f32 %v1060, %v1221
    %v1382 = vadd.f32 %v1061, %v1222
    %v1383 = vadd.f32 %v1062, %v1223
    %v1384 = vadd.f32 %v1063, %v1224
    %v1385 = vadd.f32 %v1064, %v1225
    %v1386 = vadd.f32 %v1065, %v1226
    %v1387 = vadd.f32 %v1066, %v1227
    %v1388 = vadd.f32 %v1067, %v1228
    %v1389 = vadd.f32 %v1068, %v1229
    %v1390 = vadd.f32 %v1069, %v1230
    %v1391 = vadd.f32 %v1070, %v1231
    %v1392 = vadd.f32 %v1071, %v1232
    %v1393 = vadd.f32 %v1072, %v1233
    %v1394 = vadd.f32 %v1073, %v1234
    %v1395 = vadd.f32 %v1074, %v1235
    %v1396 = vadd.f32 %v1075, %v1236
    %v1397 = vadd.f32 %v1076, %v1237
    %v1398 = vadd.f32 %v1077, %v1238
    %v1399 = vadd.f32 %v1078, %v1239
    %v1400 = vadd.f32 %v1079, %v1240
    %v1401 = vadd.f32 %v1080, %v1241
    %v1402 = vadd.f32 %v1081, %v1242
    %v1403 = vadd.f32 %v1082, %v1243
    %v1404 = vadd.f32 %v1083, %v1244
    %v1405 = vadd.f32 %v1084, %v1245
    %v1406 = vadd.f32 %v1085, %v1246
    %v1407 = vadd.f32 %v1086, %v1247
    %v1408 = vadd.f32 %v1087, %v1248
    %v1409 = vadd.f32 %v1088, %v1249
    %v1410 = vadd.f32 %v1089, %v1250
    %v1411 = vadd.f32 %v1090, %v1251
    %v1412 = vadd.f32 %v1091, %v1252
    %v1413 = vadd.f32 %v1092, %v1253
    %v1414 = vadd.f32 %v1093, %v1254
    %v1415 = vadd.f32 %v1094, %v1255
    %v1416 = vadd.f32 %v1095, %v1256
    %v1417 = vadd.f32 %v1096, %v1257
    %v1418 = vadd.f32 %v1097, %v1258
    %v1419 = vadd.f32 %v1098, %v1259
    %v1420 = vadd.f32 %v1099, %v1260
    %v1421 = vadd.f32 %v1100, %v1261
    %v1422 = vadd.f32 %v1101, %v1262
    %v1423 = vadd.f32 %v1102, %v1263
    %v1424 = vadd.f32 %v1103, %v1264
    %v1425 = vadd.f32 %v1104, %v1265
    %v1426 = vadd.f32 %v1105, %v1266
    %v1427 = vadd.f32 %v1106, %v1267
    %v1428 = vadd.f32 %v1107, %v1268
    %v1429 = vadd.f32 %v1108, %v1269
    %v1430 = vadd.f32 %v1109, %v1270
    %v1431 = vadd.f32 %v1110, %v1271
    %v1432 = vadd.f32 %v1111, %v1272
    %v1433 = vadd.f32 %v1112, %v1273
    %v1434 = vadd.f32 %v1113, %v1274
    %v1435 = vadd.f32 %v1114, %v1275
    %v1436 = vadd.f32 %v1115, %v1276
    %v1437 = vadd.f32 %v1116, %v1277
    %v1438 = vadd.f32 %v1117, %v1278
    %v1439 = vadd.f32 %v1118, %v1279
    %v1440 = vadd.f32 %v1119, %v1280
    %v1441 = vadd.f32 %v1120, %v1281
    %v1442 = vadd.f32 %v1121, %v1282
    %v1443 = vadd.f32 %v1122, %v1283
    %v1444 = vadd.f32 %v1123, %v1284
    %v1445 = vadd.f32 %v1124, %v1285
    %v1446 = vadd.f32 %v1125, %v1286
    %v1447 = vadd.f32 %v1126, %v1287
    %v1448 = vadd.f32 %v1127, %v1288
    %v1449 = vadd.f32 %v1128, %v1289
    %v1450 = vadd.f32 %v1129, %v1290
    %v1451 = vadd.f32 %v1130, %v1291
    %v1452 = vadd.f32 %v1131, %v1292
    %v1453 = vadd.f32 %v1132, %v1293
    %v1454 = vadd.f32 %v1133, %v1294
    %v1455 = vadd.f32 %v1134, %v1295
    %v1456 = vadd.f32 %v1135, %v1296
    %v1457 = vadd.f32 %v1136, %v1297
    %v1458 = vadd.f32 %v1137, %v1298
    %v1459 = vadd.f32 %v1138, %v1299
    %v1460 = vadd.f32 %v1139, %v1300
    %v1461 = vadd.f32 %v1140, %v1301
    %v1462 = vadd.f32 %v1141, %v1302
    %v1463 = vadd.f32 %v1142, %v1303
    %v1464 = vadd.f32 %v1143, %v1304
    %v1465 = vadd.f32 %v1144, %v1305
    %v1466 = vadd.f32 %v1145, %v1306
    %s1467 = scalar_lea.vmem [#allocation2], 640
    %v1468 = vld [vmem:[%s1467] sm:$0xff]
    %v1469 = vld [vmem:[%s1467 + $0x8] sm:$0xff]
    %v1470 = vld [vmem:[%s1467 + $0x10] sm:$0xff]
    %v1471 = vld [vmem:[%s1467 + $0x18] sm:$0xff]
    %v1472 = vld [vmem:[%s1467 + $0x20] sm:$0xff]
    %v1473 = vld [vmem:[%s1467 + $0x28] sm:$0xff]
    %v1474 = vld [vmem:[%s1467 + $0x30] sm:$0xff]
    %v1475 = vld [vmem:[%s1467 + $0x38] sm:$0xff]
    %v1476 = vld [vmem:[%s1467 + $0x40] sm:$0xff]
    %v1477 = vld [vmem:[%s1467 + $0x48] sm:$0xff]
    %v1478 = vld [vmem:[%s1467 + $0x50] sm:$0xff]
    %v1479 = vld [vmem:[%s1467 + $0x58] sm:$0xff]
    %v1480 = vld [vmem:[%s1467 + $0x60] sm:$0xff]
    %v1481 = vld [vmem:[%s1467 + $0x68] sm:$0xff]
    %v1482 = vld [vmem:[%s1467 + $0x70] sm:$0xff]
    %v1483 = vld [vmem:[%s1467 + $0x78] sm:$0xff]
    %v1484 = vld [vmem:[%s1467 + $0x80] sm:$0xff]
    %v1485 = vld [vmem:[%s1467 + $0x88] sm:$0xff]
    %v1486 = vld [vmem:[%s1467 + $0x90] sm:$0xff]
    %v1487 = vld [vmem:[%s1467 + $0x98] sm:$0xff]
    %v1488 = vld [vmem:[%s1467 + $0xa0] sm:$0xff]
    %v1489 = vld [vmem:[%s1467 + $0xa8] sm:$0xff]
    %v1490 = vld [vmem:[%s1467 + $0xb0] sm:$0xff]
    %v1491 = vld [vmem:[%s1467 + $0xb8] sm:$0xff]
    %v1492 = vld [vmem:[%s1467 + $0xc0] sm:$0xff]
    %v1493 = vld [vmem:[%s1467 + $0xc8] sm:$0xff]
    %v1494 = vld [vmem:[%s1467 + $0xd0] sm:$0xff]
    %v1495 = vld [vmem:[%s1467 + $0xd8] sm:$0xff]
    %v1496 = vld [vmem:[%s1467 + $0xe0] sm:$0xff]
    %v1497 = vld [vmem:[%s1467 + $0xe8] sm:$0xff]
    %v1498 = vld [vmem:[%s1467 + $0xf0] sm:$0xff]
    %v1499 = vld [vmem:[%s1467 + $0xf8] sm:$0xff]
    %v1500 = vld [vmem:[%s1467 + $0x100] sm:$0xff]
    %v1501 = vld [vmem:[%s1467 + $0x108] sm:$0xff]
    %v1502 = vld [vmem:[%s1467 + $0x110] sm:$0xff]
    %v1503 = vld [vmem:[%s1467 + $0x118] sm:$0xff]
    %v1504 = vld [vmem:[%s1467 + $0x120] sm:$0xff]
    %v1505 = vld [vmem:[%s1467 + $0x128] sm:$0xff]
    %v1506 = vld [vmem:[%s1467 + $0x130] sm:$0xff]
    %v1507 = vld [vmem:[%s1467 + $0x138] sm:$0xff]
    %v1508 = vld [vmem:[%s1467 + $0x140] sm:$0xff]
    %v1509 = vld [vmem:[%s1467 + $0x148] sm:$0xff]
    %v1510 = vld [vmem:[%s1467 + $0x150] sm:$0xff]
    %v1511 = vld [vmem:[%s1467 + $0x158] sm:$0xff]
    %v1512 = vld [vmem:[%s1467 + $0x160] sm:$0xff]
    %v1513 = vld [vmem:[%s1467 + $0x168] sm:$0xff]
    %v1514 = vld [vmem:[%s1467 + $0x170] sm:$0xff]
    %v1515 = vld [vmem:[%s1467 + $0x178] sm:$0xff]
    %v1516 = vld [vmem:[%s1467 + $0x180] sm:$0xff]
    %v1517 = vld [vmem:[%s1467 + $0x188] sm:$0xff]
    %v1518 = vld [vmem:[%s1467 + $0x190] sm:$0xff]
    %v1519 = vld [vmem:[%s1467 + $0x198] sm:$0xff]
    %v1520 = vld [vmem:[%s1467 + $0x1a0] sm:$0xff]
    %v1521 = vld [vmem:[%s1467 + $0x1a8] sm:$0xff]
    %v1522 = vld [vmem:[%s1467 + $0x1b0] sm:$0xff]
    %v1523 = vld [vmem:[%s1467 + $0x1b8] sm:$0xff]
    %v1524 = vld [vmem:[%s1467 + $0x1c0] sm:$0xff]
    %v1525 = vld [vmem:[%s1467 + $0x1c8] sm:$0xff]
    %v1526 = vld [vmem:[%s1467 + $0x1d0] sm:$0xff]
    %v1527 = vld [vmem:[%s1467 + $0x1d8] sm:$0xff]
    %v1528 = vld [vmem:[%s1467 + $0x1e0] sm:$0xff]
    %v1529 = vld [vmem:[%s1467 + $0x1e8] sm:$0xff]
    %v1530 = vld [vmem:[%s1467 + $0x1f0] sm:$0xff]
    %v1531 = vld [vmem:[%s1467 + $0x1f8] sm:$0xff]
    %v1532 = vld [vmem:[%s1467 + $0x200] sm:$0xff]
    %v1533 = vld [vmem:[%s1467 + $0x208] sm:$0xff]
    %v1534 = vld [vmem:[%s1467 + $0x210] sm:$0xff]
    %v1535 = vld [vmem:[%s1467 + $0x218] sm:$0xff]
    %v1536 = vld [vmem:[%s1467 + $0x220] sm:$0xff]
    %v1537 = vld [vmem:[%s1467 + $0x228] sm:$0xff]
    %v1538 = vld [vmem:[%s1467 + $0x230] sm:$0xff]
    %v1539 = vld [vmem:[%s1467 + $0x238] sm:$0xff]
    %v1540 = vld [vmem:[%s1467 + $0x240] sm:$0xff]
    %v1541 = vld [vmem:[%s1467 + $0x248] sm:$0xff]
    %v1542 = vld [vmem:[%s1467 + $0x250] sm:$0xff]
    %v1543 = vld [vmem:[%s1467 + $0x258] sm:$0xff]
    %v1544 = vld [vmem:[%s1467 + $0x260] sm:$0xff]
    %v1545 = vld [vmem:[%s1467 + $0x268] sm:$0xff]
    %v1546 = vld [vmem:[%s1467 + $0x270] sm:$0xff]
    %v1547 = vld [vmem:[%s1467 + $0x278] sm:$0xff]
    %v1548 = vld [vmem:[%s1467 + $0x280] sm:$0xff]
    %v1549 = vld [vmem:[%s1467 + $0x288] sm:$0xff]
    %v1550 = vld [vmem:[%s1467 + $0x290] sm:$0xff]
    %v1551 = vld [vmem:[%s1467 + $0x298] sm:$0xff]
    %v1552 = vld [vmem:[%s1467 + $0x2a0] sm:$0xff]
    %v1553 = vld [vmem:[%s1467 + $0x2a8] sm:$0xff]
    %v1554 = vld [vmem:[%s1467 + $0x2b0] sm:$0xff]
    %v1555 = vld [vmem:[%s1467 + $0x2b8] sm:$0xff]
    %v1556 = vld [vmem:[%s1467 + $0x2c0] sm:$0xff]
    %v1557 = vld [vmem:[%s1467 + $0x2c8] sm:$0xff]
    %v1558 = vld [vmem:[%s1467 + $0x2d0] sm:$0xff]
    %v1559 = vld [vmem:[%s1467 + $0x2d8] sm:$0xff]
    %v1560 = vld [vmem:[%s1467 + $0x2e0] sm:$0xff]
    %v1561 = vld [vmem:[%s1467 + $0x2e8] sm:$0xff]
    %v1562 = vld [vmem:[%s1467 + $0x2f0] sm:$0xff]
    %v1563 = vld [vmem:[%s1467 + $0x2f8] sm:$0xff]
    %v1564 = vld [vmem:[%s1467 + $0x300] sm:$0xff]
    %v1565 = vld [vmem:[%s1467 + $0x308] sm:$0xff]
    %v1566 = vld [vmem:[%s1467 + $0x310] sm:$0xff]
    %v1567 = vld [vmem:[%s1467 + $0x318] sm:$0xff]
    %v1568 = vld [vmem:[%s1467 + $0x320] sm:$0xff]
    %v1569 = vld [vmem:[%s1467 + $0x328] sm:$0xff]
    %v1570 = vld [vmem:[%s1467 + $0x330] sm:$0xff]
    %v1571 = vld [vmem:[%s1467 + $0x338] sm:$0xff]
    %v1572 = vld [vmem:[%s1467 + $0x340] sm:$0xff]
    %v1573 = vld [vmem:[%s1467 + $0x348] sm:$0xff]
    %v1574 = vld [vmem:[%s1467 + $0x350] sm:$0xff]
    %v1575 = vld [vmem:[%s1467 + $0x358] sm:$0xff]
    %v1576 = vld [vmem:[%s1467 + $0x360] sm:$0xff]
    %v1577 = vld [vmem:[%s1467 + $0x368] sm:$0xff]
    %v1578 = vld [vmem:[%s1467 + $0x370] sm:$0xff]
    %v1579 = vld [vmem:[%s1467 + $0x378] sm:$0xff]
    %v1580 = vld [vmem:[%s1467 + $0x380] sm:$0xff]
    %v1581 = vld [vmem:[%s1467 + $0x388] sm:$0xff]
    %v1582 = vld [vmem:[%s1467 + $0x390] sm:$0xff]
    %v1583 = vld [vmem:[%s1467 + $0x398] sm:$0xff]
    %v1584 = vld [vmem:[%s1467 + $0x3a0] sm:$0xff]
    %v1585 = vld [vmem:[%s1467 + $0x3a8] sm:$0xff]
    %v1586 = vld [vmem:[%s1467 + $0x3b0] sm:$0xff]
    %v1587 = vld [vmem:[%s1467 + $0x3b8] sm:$0xff]
    %v1588 = vld [vmem:[%s1467 + $0x3c0] sm:$0xff]
    %v1589 = vld [vmem:[%s1467 + $0x3c8] sm:$0xff]
    %v1590 = vld [vmem:[%s1467 + $0x3d0] sm:$0xff]
    %v1591 = vld [vmem:[%s1467 + $0x3d8] sm:$0xff]
    %v1592 = vld [vmem:[%s1467 + $0x3e0] sm:$0xff]
    %v1593 = vld [vmem:[%s1467 + $0x3e8] sm:$0xff]
    %v1594 = vld [vmem:[%s1467 + $0x3f0] sm:$0xff]
    %v1595 = vld [vmem:[%s1467 + $0x3f8] sm:$0xff]
    %v1596 = vld [vmem:[%s1467 + $0x400] sm:$0xff]
    %v1597 = vld [vmem:[%s1467 + $0x408] sm:$0xff]
    %v1598 = vld [vmem:[%s1467 + $0x410] sm:$0xff]
    %v1599 = vld [vmem:[%s1467 + $0x418] sm:$0xff]
    %v1600 = vld [vmem:[%s1467 + $0x420] sm:$0xff]
    %v1601 = vld [vmem:[%s1467 + $0x428] sm:$0xff]
    %v1602 = vld [vmem:[%s1467 + $0x430] sm:$0xff]
    %v1603 = vld [vmem:[%s1467 + $0x438] sm:$0xff]
    %v1604 = vld [vmem:[%s1467 + $0x440] sm:$0xff]
    %v1605 = vld [vmem:[%s1467 + $0x448] sm:$0xff]
    %v1606 = vld [vmem:[%s1467 + $0x450] sm:$0xff]
    %v1607 = vld [vmem:[%s1467 + $0x458] sm:$0xff]
    %v1608 = vld [vmem:[%s1467 + $0x460] sm:$0xff]
    %v1609 = vld [vmem:[%s1467 + $0x468] sm:$0xff]
    %v1610 = vld [vmem:[%s1467 + $0x470] sm:$0xff]
    %v1611 = vld [vmem:[%s1467 + $0x478] sm:$0xff]
    %v1612 = vld [vmem:[%s1467 + $0x480] sm:$0xff]
    %v1613 = vld [vmem:[%s1467 + $0x488] sm:$0xff]
    %v1614 = vld [vmem:[%s1467 + $0x490] sm:$0xff]
    %v1615 = vld [vmem:[%s1467 + $0x498] sm:$0xff]
    %v1616 = vld [vmem:[%s1467 + $0x4a0] sm:$0xff]
    %v1617 = vld [vmem:[%s1467 + $0x4a8] sm:$0xff]
    %v1618 = vld [vmem:[%s1467 + $0x4b0] sm:$0xff]
    %v1619 = vld [vmem:[%s1467 + $0x4b8] sm:$0xff]
    %v1620 = vld [vmem:[%s1467 + $0x4c0] sm:$0xff]
    %v1621 = vld [vmem:[%s1467 + $0x4c8] sm:$0xff]
    %v1622 = vld [vmem:[%s1467 + $0x4d0] sm:$0xff]
    %v1623 = vld [vmem:[%s1467 + $0x4d8] sm:$0xff]
    %v1624 = vld [vmem:[%s1467 + $0x4e0] sm:$0xff]
    %v1625 = vld [vmem:[%s1467 + $0x4e8] sm:$0xff]
    %v1626 = vld [vmem:[%s1467 + $0x4f0] sm:$0xff]
    %v1627 = vld [vmem:[%s1467 + $0x4f8] sm:$0xff]
    %v1628 = vadd.f32 %v1307, %v1468
    %v1629 = vadd.f32 %v1308, %v1469
    %v1630 = vadd.f32 %v1309, %v1470
    %v1631 = vadd.f32 %v1310, %v1471
    %v1632 = vadd.f32 %v1311, %v1472
    %v1633 = vadd.f32 %v1312, %v1473
    %v1634 = vadd.f32 %v1313, %v1474
    %v1635 = vadd.f32 %v1314, %v1475
    %v1636 = vadd.f32 %v1315, %v1476
    %v1637 = vadd.f32 %v1316, %v1477
    %v1638 = vadd.f32 %v1317, %v1478
    %v1639 = vadd.f32 %v1318, %v1479
    %v1640 = vadd.f32 %v1319, %v1480
    %v1641 = vadd.f32 %v1320, %v1481
    %v1642 = vadd.f32 %v1321, %v1482
    %v1643 = vadd.f32 %v1322, %v1483
    %v1644 = vadd.f32 %v1323, %v1484
    %v1645 = vadd.f32 %v1324, %v1485
    %v1646 = vadd.f32 %v1325, %v1486
    %v1647 = vadd.f32 %v1326, %v1487
    %v1648 = vadd.f32 %v1327, %v1488
    %v1649 = vadd.f32 %v1328, %v1489
    %v1650 = vadd.f32 %v1329, %v1490
    %v1651 = vadd.f32 %v1330, %v1491
    %v1652 = vadd.f32 %v1331, %v1492
    %v1653 = vadd.f32 %v1332, %v1493
    %v1654 = vadd.f32 %v1333, %v1494
    %v1655 = vadd.f32 %v1334, %v1495
    %v1656 = vadd.f32 %v1335, %v1496
    %v1657 = vadd.f32 %v1336, %v1497
    %v1658 = vadd.f32 %v1337, %v1498
    %v1659 = vadd.f32 %v1338, %v1499
    %v1660 = vadd.f32 %v1339, %v1500
    %v1661 = vadd.f32 %v1340, %v1501
    %v1662 = vadd.f32 %v1341, %v1502
    %v1663 = vadd.f32 %v1342, %v1503
    %v1664 = vadd.f32 %v1343, %v1504
    %v1665 = vadd.f32 %v1344, %v1505
    %v1666 = vadd.f32 %v1345, %v1506
    %v1667 = vadd.f32 %v1346, %v1507
    %v1668 = vadd.f32 %v1347, %v1508
    %v1669 = vadd.f32 %v1348, %v1509
    %v1670 = vadd.f32 %v1349, %v1510
    %v1671 = vadd.f32 %v1350, %v1511
    %v1672 = vadd.f32 %v1351, %v1512
    %v1673 = vadd.f32 %v1352, %v1513
    %v1674 = vadd.f32 %v1353, %v1514
    %v1675 = vadd.f32 %v1354, %v1515
    %v1676 = vadd.f32 %v1355, %v1516
    %v1677 = vadd.f32 %v1356, %v1517
    %v1678 = vadd.f32 %v1357, %v1518
    %v1679 = vadd.f32 %v1358, %v1519
    %v1680 = vadd.f32 %v1359, %v1520
    %v1681 = vadd.f32 %v1360, %v1521
    %v1682 = vadd.f32 %v1361, %v1522
    %v1683 = vadd.f32 %v1362, %v1523
    %v1684 = vadd.f32 %v1363, %v1524
    %v1685 = vadd.f32 %v1364, %v1525
    %v1686 = vadd.f32 %v1365, %v1526
    %v1687 = vadd.f32 %v1366, %v1527
    %v1688 = vadd.f32 %v1367, %v1528
    %v1689 = vadd.f32 %v1368, %v1529
    %v1690 = vadd.f32 %v1369, %v1530
    %v1691 = vadd.f32 %v1370, %v1531
    %v1692 = vadd.f32 %v1371, %v1532
    %v1693 = vadd.f32 %v1372, %v1533
    %v1694 = vadd.f32 %v1373, %v1534
    %v1695 = vadd.f32 %v1374, %v1535
    %v1696 = vadd.f32 %v1375, %v1536
    %v1697 = vadd.f32 %v1376, %v1537
    %v1698 = vadd.f32 %v1377, %v1538
    %v1699 = vadd.f32 %v1378, %v1539
    %v1700 = vadd.f32 %v1379, %v1540
    %v1701 = vadd.f32 %v1380, %v1541
    %v1702 = vadd.f32 %v1381, %v1542
    %v1703 = vadd.f32 %v1382, %v1543
    %v1704 = vadd.f32 %v1383, %v1544
    %v1705 = vadd.f32 %v1384, %v1545
    %v1706 = vadd.f32 %v1385, %v1546
    %v1707 = vadd.f32 %v1386, %v1547
    %v1708 = vadd.f32 %v1387, %v1548
    %v1709 = vadd.f32 %v1388, %v1549
    %v1710 = vadd.f32 %v1389, %v1550
    %v1711 = vadd.f32 %v1390, %v1551
    %v1712 = vadd.f32 %v1391, %v1552
    %v1713 = vadd.f32 %v1392, %v1553
    %v1714 = vadd.f32 %v1393, %v1554
    %v1715 = vadd.f32 %v1394, %v1555
    %v1716 = vadd.f32 %v1395, %v1556
    %v1717 = vadd.f32 %v1396, %v1557
    %v1718 = vadd.f32 %v1397, %v1558
    %v1719 = vadd.f32 %v1398, %v1559
    %v1720 = vadd.f32 %v1399, %v1560
    %v1721 = vadd.f32 %v1400, %v1561
    %v1722 = vadd.f32 %v1401, %v1562
    %v1723 = vadd.f32 %v1402, %v1563
    %v1724 = vadd.f32 %v1403, %v1564
    %v1725 = vadd.f32 %v1404, %v1565
    %v1726 = vadd.f32 %v1405, %v1566
    %v1727 = vadd.f32 %v1406, %v1567
    %v1728 = vadd.f32 %v1407, %v1568
    %v1729 = vadd.f32 %v1408, %v1569
    %v1730 = vadd.f32 %v1409, %v1570
    %v1731 = vadd.f32 %v1410, %v1571
    %v1732 = vadd.f32 %v1411, %v1572
    %v1733 = vadd.f32 %v1412, %v1573
    %v1734 = vadd.f32 %v1413, %v1574
    %v1735 = vadd.f32 %v1414, %v1575
    %v1736 = vadd.f32 %v1415, %v1576
    %v1737 = vadd.f32 %v1416, %v1577
    %v1738 = vadd.f32 %v1417, %v1578
    %v1739 = vadd.f32 %v1418, %v1579
    %v1740 = vadd.f32 %v1419, %v1580
    %v1741 = vadd.f32 %v1420, %v1581
    %v1742 = vadd.f32 %v1421, %v1582
    %v1743 = vadd.f32 %v1422, %v1583
    %v1744 = vadd.f32 %v1423, %v1584
    %v1745 = vadd.f32 %v1424, %v1585
    %v1746 = vadd.f32 %v1425, %v1586
    %v1747 = vadd.f32 %v1426, %v1587
    %v1748 = vadd.f32 %v1427, %v1588
    %v1749 = vadd.f32 %v1428, %v1589
    %v1750 = vadd.f32 %v1429, %v1590
    %v1751 = vadd.f32 %v1430, %v1591
    %v1752 = vadd.f32 %v1431, %v1592
    %v1753 = vadd.f32 %v1432, %v1593
    %v1754 = vadd.f32 %v1433, %v1594
    %v1755 = vadd.f32 %v1434, %v1595
    %v1756 = vadd.f32 %v1435, %v1596
    %v1757 = vadd.f32 %v1436, %v1597
    %v1758 = vadd.f32 %v1437, %v1598
    %v1759 = vadd.f32 %v1438, %v1599
    %v1760 = vadd.f32 %v1439, %v1600
    %v1761 = vadd.f32 %v1440, %v1601
    %v1762 = vadd.f32 %v1441, %v1602
    %v1763 = vadd.f32 %v1442, %v1603
    %v1764 = vadd.f32 %v1443, %v1604
    %v1765 = vadd.f32 %v1444, %v1605
    %v1766 = vadd.f32 %v1445, %v1606
    %v1767 = vadd.f32 %v1446, %v1607
    %v1768 = vadd.f32 %v1447, %v1608
    %v1769 = vadd.f32 %v1448, %v1609
    %v1770 = vadd.f32 %v1449, %v1610
    %v1771 = vadd.f32 %v1450, %v1611
    %v1772 = vadd.f32 %v1451, %v1612
    %v1773 = vadd.f32 %v1452, %v1613
    %v1774 = vadd.f32 %v1453, %v1614
    %v1775 = vadd.f32 %v1454, %v1615
    %v1776 = vadd.f32 %v1455, %v1616
    %v1777 = vadd.f32 %v1456, %v1617
    %v1778 = vadd.f32 %v1457, %v1618
    %v1779 = vadd.f32 %v1458, %v1619
    %v1780 = vadd.f32 %v1459, %v1620
    %v1781 = vadd.f32 %v1460, %v1621
    %v1782 = vadd.f32 %v1461, %v1622
    %v1783 = vadd.f32 %v1462, %v1623
    %v1784 = vadd.f32 %v1463, %v1624
    %v1785 = vadd.f32 %v1464, %v1625
    %v1786 = vadd.f32 %v1465, %v1626
    %v1787 = vadd.f32 %v1466, %v1627
    %s1788 = scalar_lea.vmem [#allocation2], 768
    %v1789 = vld [vmem:[%s1788] sm:$0xff]
    %v1790 = vld [vmem:[%s1788 + $0x8] sm:$0xff]
    %v1791 = vld [vmem:[%s1788 + $0x10] sm:$0xff]
    %v1792 = vld [vmem:[%s1788 + $0x18] sm:$0xff]
    %v1793 = vld [vmem:[%s1788 + $0x20] sm:$0xff]
    %v1794 = vld [vmem:[%s1788 + $0x28] sm:$0xff]
    %v1795 = vld [vmem:[%s1788 + $0x30] sm:$0xff]
    %v1796 = vld [vmem:[%s1788 + $0x38] sm:$0xff]
    %v1797 = vld [vmem:[%s1788 + $0x40] sm:$0xff]
    %v1798 = vld [vmem:[%s1788 + $0x48] sm:$0xff]
    %v1799 = vld [vmem:[%s1788 + $0x50] sm:$0xff]
    %v1800 = vld [vmem:[%s1788 + $0x58] sm:$0xff]
    %v1801 = vld [vmem:[%s1788 + $0x60] sm:$0xff]
    %v1802 = vld [vmem:[%s1788 + $0x68] sm:$0xff]
    %v1803 = vld [vmem:[%s1788 + $0x70] sm:$0xff]
    %v1804 = vld [vmem:[%s1788 + $0x78] sm:$0xff]
    %v1805 = vld [vmem:[%s1788 + $0x80] sm:$0xff]
    %v1806 = vld [vmem:[%s1788 + $0x88] sm:$0xff]
    %v1807 = vld [vmem:[%s1788 + $0x90] sm:$0xff]
    %v1808 = vld [vmem:[%s1788 + $0x98] sm:$0xff]
    %v1809 = vld [vmem:[%s1788 + $0xa0] sm:$0xff]
    %v1810 = vld [vmem:[%s1788 + $0xa8] sm:$0xff]
    %v1811 = vld [vmem:[%s1788 + $0xb0] sm:$0xff]
    %v1812 = vld [vmem:[%s1788 + $0xb8] sm:$0xff]
    %v1813 = vld [vmem:[%s1788 + $0xc0] sm:$0xff]
    %v1814 = vld [vmem:[%s1788 + $0xc8] sm:$0xff]
    %v1815 = vld [vmem:[%s1788 + $0xd0] sm:$0xff]
    %v1816 = vld [vmem:[%s1788 + $0xd8] sm:$0xff]
    %v1817 = vld [vmem:[%s1788 + $0xe0] sm:$0xff]
    %v1818 = vld [vmem:[%s1788 + $0xe8] sm:$0xff]
    %v1819 = vld [vmem:[%s1788 + $0xf0] sm:$0xff]
    %v1820 = vld [vmem:[%s1788 + $0xf8] sm:$0xff]
    %v1821 = vld [vmem:[%s1788 + $0x100] sm:$0xff]
    %v1822 = vld [vmem:[%s1788 + $0x108] sm:$0xff]
    %v1823 = vld [vmem:[%s1788 + $0x110] sm:$0xff]
    %v1824 = vld [vmem:[%s1788 + $0x118] sm:$0xff]
    %v1825 = vld [vmem:[%s1788 + $0x120] sm:$0xff]
    %v1826 = vld [vmem:[%s1788 + $0x128] sm:$0xff]
    %v1827 = vld [vmem:[%s1788 + $0x130] sm:$0xff]
    %v1828 = vld [vmem:[%s1788 + $0x138] sm:$0xff]
    %v1829 = vld [vmem:[%s1788 + $0x140] sm:$0xff]
    %v1830 = vld [vmem:[%s1788 + $0x148] sm:$0xff]
    %v1831 = vld [vmem:[%s1788 + $0x150] sm:$0xff]
    %v1832 = vld [vmem:[%s1788 + $0x158] sm:$0xff]
    %v1833 = vld [vmem:[%s1788 + $0x160] sm:$0xff]
    %v1834 = vld [vmem:[%s1788 + $0x168] sm:$0xff]
    %v1835 = vld [vmem:[%s1788 + $0x170] sm:$0xff]
    %v1836 = vld [vmem:[%s1788 + $0x178] sm:$0xff]
    %v1837 = vld [vmem:[%s1788 + $0x180] sm:$0xff]
    %v1838 = vld [vmem:[%s1788 + $0x188] sm:$0xff]
    %v1839 = vld [vmem:[%s1788 + $0x190] sm:$0xff]
    %v1840 = vld [vmem:[%s1788 + $0x198] sm:$0xff]
    %v1841 = vld [vmem:[%s1788 + $0x1a0] sm:$0xff]
    %v1842 = vld [vmem:[%s1788 + $0x1a8] sm:$0xff]
    %v1843 = vld [vmem:[%s1788 + $0x1b0] sm:$0xff]
    %v1844 = vld [vmem:[%s1788 + $0x1b8] sm:$0xff]
    %v1845 = vld [vmem:[%s1788 + $0x1c0] sm:$0xff]
    %v1846 = vld [vmem:[%s1788 + $0x1c8] sm:$0xff]
    %v1847 = vld [vmem:[%s1788 + $0x1d0] sm:$0xff]
    %v1848 = vld [vmem:[%s1788 + $0x1d8] sm:$0xff]
    %v1849 = vld [vmem:[%s1788 + $0x1e0] sm:$0xff]
    %v1850 = vld [vmem:[%s1788 + $0x1e8] sm:$0xff]
    %v1851 = vld [vmem:[%s1788 + $0x1f0] sm:$0xff]
    %v1852 = vld [vmem:[%s1788 + $0x1f8] sm:$0xff]
    %v1853 = vld [vmem:[%s1788 + $0x200] sm:$0xff]
    %v1854 = vld [vmem:[%s1788 + $0x208] sm:$0xff]
    %v1855 = vld [vmem:[%s1788 + $0x210] sm:$0xff]
    %v1856 = vld [vmem:[%s1788 + $0x218] sm:$0xff]
    %v1857 = vld [vmem:[%s1788 + $0x220] sm:$0xff]
    %v1858 = vld [vmem:[%s1788 + $0x228] sm:$0xff]
    %v1859 = vld [vmem:[%s1788 + $0x230] sm:$0xff]
    %v1860 = vld [vmem:[%s1788 + $0x238] sm:$0xff]
    %v1861 = vld [vmem:[%s1788 + $0x240] sm:$0xff]
    %v1862 = vld [vmem:[%s1788 + $0x248] sm:$0xff]
    %v1863 = vld [vmem:[%s1788 + $0x250] sm:$0xff]
    %v1864 = vld [vmem:[%s1788 + $0x258] sm:$0xff]
    %v1865 = vld [vmem:[%s1788 + $0x260] sm:$0xff]
    %v1866 = vld [vmem:[%s1788 + $0x268] sm:$0xff]
    %v1867 = vld [vmem:[%s1788 + $0x270] sm:$0xff]
    %v1868 = vld [vmem:[%s1788 + $0x278] sm:$0xff]
    %v1869 = vld [vmem:[%s1788 + $0x280] sm:$0xff]
    %v1870 = vld [vmem:[%s1788 + $0x288] sm:$0xff]
    %v1871 = vld [vmem:[%s1788 + $0x290] sm:$0xff]
    %v1872 = vld [vmem:[%s1788 + $0x298] sm:$0xff]
    %v1873 = vld [vmem:[%s1788 + $0x2a0] sm:$0xff]
    %v1874 = vld [vmem:[%s1788 + $0x2a8] sm:$0xff]
    %v1875 = vld [vmem:[%s1788 + $0x2b0] sm:$0xff]
    %v1876 = vld [vmem:[%s1788 + $0x2b8] sm:$0xff]
    %v1877 = vld [vmem:[%s1788 + $0x2c0] sm:$0xff]
    %v1878 = vld [vmem:[%s1788 + $0x2c8] sm:$0xff]
    %v1879 = vld [vmem:[%s1788 + $0x2d0] sm:$0xff]
    %v1880 = vld [vmem:[%s1788 + $0x2d8] sm:$0xff]
    %v1881 = vld [vmem:[%s1788 + $0x2e0] sm:$0xff]
    %v1882 = vld [vmem:[%s1788 + $0x2e8] sm:$0xff]
    %v1883 = vld [vmem:[%s1788 + $0x2f0] sm:$0xff]
    %v1884 = vld [vmem:[%s1788 + $0x2f8] sm:$0xff]
    %v1885 = vld [vmem:[%s1788 + $0x300] sm:$0xff]
    %v1886 = vld [vmem:[%s1788 + $0x308] sm:$0xff]
    %v1887 = vld [vmem:[%s1788 + $0x310] sm:$0xff]
    %v1888 = vld [vmem:[%s1788 + $0x318] sm:$0xff]
    %v1889 = vld [vmem:[%s1788 + $0x320] sm:$0xff]
    %v1890 = vld [vmem:[%s1788 + $0x328] sm:$0xff]
    %v1891 = vld [vmem:[%s1788 + $0x330] sm:$0xff]
    %v1892 = vld [vmem:[%s1788 + $0x338] sm:$0xff]
    %v1893 = vld [vmem:[%s1788 + $0x340] sm:$0xff]
    %v1894 = vld [vmem:[%s1788 + $0x348] sm:$0xff]
    %v1895 = vld [vmem:[%s1788 + $0x350] sm:$0xff]
    %v1896 = vld [vmem:[%s1788 + $0x358] sm:$0xff]
    %v1897 = vld [vmem:[%s1788 + $0x360] sm:$0xff]
    %v1898 = vld [vmem:[%s1788 + $0x368] sm:$0xff]
    %v1899 = vld [vmem:[%s1788 + $0x370] sm:$0xff]
    %v1900 = vld [vmem:[%s1788 + $0x378] sm:$0xff]
    %v1901 = vld [vmem:[%s1788 + $0x380] sm:$0xff]
    %v1902 = vld [vmem:[%s1788 + $0x388] sm:$0xff]
    %v1903 = vld [vmem:[%s1788 + $0x390] sm:$0xff]
    %v1904 = vld [vmem:[%s1788 + $0x398] sm:$0xff]
    %v1905 = vld [vmem:[%s1788 + $0x3a0] sm:$0xff]
    %v1906 = vld [vmem:[%s1788 + $0x3a8] sm:$0xff]
    %v1907 = vld [vmem:[%s1788 + $0x3b0] sm:$0xff]
    %v1908 = vld [vmem:[%s1788 + $0x3b8] sm:$0xff]
    %v1909 = vld [vmem:[%s1788 + $0x3c0] sm:$0xff]
    %v1910 = vld [vmem:[%s1788 + $0x3c8] sm:$0xff]
    %v1911 = vld [vmem:[%s1788 + $0x3d0] sm:$0xff]
    %v1912 = vld [vmem:[%s1788 + $0x3d8] sm:$0xff]
    %v1913 = vld [vmem:[%s1788 + $0x3e0] sm:$0xff]
    %v1914 = vld [vmem:[%s1788 + $0x3e8] sm:$0xff]
    %v1915 = vld [vmem:[%s1788 + $0x3f0] sm:$0xff]
    %v1916 = vld [vmem:[%s1788 + $0x3f8] sm:$0xff]
    %v1917 = vld [vmem:[%s1788 + $0x400] sm:$0xff]
    %v1918 = vld [vmem:[%s1788 + $0x408] sm:$0xff]
    %v1919 = vld [vmem:[%s1788 + $0x410] sm:$0xff]
    %v1920 = vld [vmem:[%s1788 + $0x418] sm:$0xff]
    %v1921 = vld [vmem:[%s1788 + $0x420] sm:$0xff]
    %v1922 = vld [vmem:[%s1788 + $0x428] sm:$0xff]
    %v1923 = vld [vmem:[%s1788 + $0x430] sm:$0xff]
    %v1924 = vld [vmem:[%s1788 + $0x438] sm:$0xff]
    %v1925 = vld [vmem:[%s1788 + $0x440] sm:$0xff]
    %v1926 = vld [vmem:[%s1788 + $0x448] sm:$0xff]
    %v1927 = vld [vmem:[%s1788 + $0x450] sm:$0xff]
    %v1928 = vld [vmem:[%s1788 + $0x458] sm:$0xff]
    %v1929 = vld [vmem:[%s1788 + $0x460] sm:$0xff]
    %v1930 = vld [vmem:[%s1788 + $0x468] sm:$0xff]
    %v1931 = vld [vmem:[%s1788 + $0x470] sm:$0xff]
    %v1932 = vld [vmem:[%s1788 + $0x478] sm:$0xff]
    %v1933 = vld [vmem:[%s1788 + $0x480] sm:$0xff]
    %v1934 = vld [vmem:[%s1788 + $0x488] sm:$0xff]
    %v1935 = vld [vmem:[%s1788 + $0x490] sm:$0xff]
    %v1936 = vld [vmem:[%s1788 + $0x498] sm:$0xff]
    %v1937 = vld [vmem:[%s1788 + $0x4a0] sm:$0xff]
    %v1938 = vld [vmem:[%s1788 + $0x4a8] sm:$0xff]
    %v1939 = vld [vmem:[%s1788 + $0x4b0] sm:$0xff]
    %v1940 = vld [vmem:[%s1788 + $0x4b8] sm:$0xff]
    %v1941 = vld [vmem:[%s1788 + $0x4c0] sm:$0xff]
    %v1942 = vld [vmem:[%s1788 + $0x4c8] sm:$0xff]
    %v1943 = vld [vmem:[%s1788 + $0x4d0] sm:$0xff]
    %v1944 = vld [vmem:[%s1788 + $0x4d8] sm:$0xff]
    %v1945 = vld [vmem:[%s1788 + $0x4e0] sm:$0xff]
    %v1946 = vld [vmem:[%s1788 + $0x4e8] sm:$0xff]
    %v1947 = vld [vmem:[%s1788 + $0x4f0] sm:$0xff]
    %v1948 = vld [vmem:[%s1788 + $0x4f8] sm:$0xff]
    %v1949 = vadd.f32 %v1628, %v1789
    %v1950 = vadd.f32 %v1629, %v1790
    %v1951 = vadd.f32 %v1630, %v1791
    %v1952 = vadd.f32 %v1631, %v1792
    %v1953 = vadd.f32 %v1632, %v1793
    %v1954 = vadd.f32 %v1633, %v1794
    %v1955 = vadd.f32 %v1634, %v1795
    %v1956 = vadd.f32 %v1635, %v1796
    %v1957 = vadd.f32 %v1636, %v1797
    %v1958 = vadd.f32 %v1637, %v1798
    %v1959 = vadd.f32 %v1638, %v1799
    %v1960 = vadd.f32 %v1639, %v1800
    %v1961 = vadd.f32 %v1640, %v1801
    %v1962 = vadd.f32 %v1641, %v1802
    %v1963 = vadd.f32 %v1642, %v1803
    %v1964 = vadd.f32 %v1643, %v1804
    %v1965 = vadd.f32 %v1644, %v1805
    %v1966 = vadd.f32 %v1645, %v1806
    %v1967 = vadd.f32 %v1646, %v1807
    %v1968 = vadd.f32 %v1647, %v1808
    %v1969 = vadd.f32 %v1648, %v1809
    %v1970 = vadd.f32 %v1649, %v1810
    %v1971 = vadd.f32 %v1650, %v1811
    %v1972 = vadd.f32 %v1651, %v1812
    %v1973 = vadd.f32 %v1652, %v1813
    %v1974 = vadd.f32 %v1653, %v1814
    %v1975 = vadd.f32 %v1654, %v1815
    %v1976 = vadd.f32 %v1655, %v1816
    %v1977 = vadd.f32 %v1656, %v1817
    %v1978 = vadd.f32 %v1657, %v1818
    %v1979 = vadd.f32 %v1658, %v1819
    %v1980 = vadd.f32 %v1659, %v1820
    %v1981 = vadd.f32 %v1660, %v1821
    %v1982 = vadd.f32 %v1661, %v1822
    %v1983 = vadd.f32 %v1662, %v1823
    %v1984 = vadd.f32 %v1663, %v1824
    %v1985 = vadd.f32 %v1664, %v1825
    %v1986 = vadd.f32 %v1665, %v1826
    %v1987 = vadd.f32 %v1666, %v1827
    %v1988 = vadd.f32 %v1667, %v1828
    %v1989 = vadd.f32 %v1668, %v1829
    %v1990 = vadd.f32 %v1669, %v1830
    %v1991 = vadd.f32 %v1670, %v1831
    %v1992 = vadd.f32 %v1671, %v1832
    %v1993 = vadd.f32 %v1672, %v1833
    %v1994 = vadd.f32 %v1673, %v1834
    %v1995 = vadd.f32 %v1674, %v1835
    %v1996 = vadd.f32 %v1675, %v1836
    %v1997 = vadd.f32 %v1676, %v1837
    %v1998 = vadd.f32 %v1677, %v1838
    %v1999 = vadd.f32 %v1678, %v1839
    %v2000 = vadd.f32 %v1679, %v1840
    %v2001 = vadd.f32 %v1680, %v1841
    %v2002 = vadd.f32 %v1681, %v1842
    %v2003 = vadd.f32 %v1682, %v1843
    %v2004 = vadd.f32 %v1683, %v1844
    %v2005 = vadd.f32 %v1684, %v1845
    %v2006 = vadd.f32 %v1685, %v1846
    %v2007 = vadd.f32 %v1686, %v1847
    %v2008 = vadd.f32 %v1687, %v1848
    %v2009 = vadd.f32 %v1688, %v1849
    %v2010 = vadd.f32 %v1689, %v1850
    %v2011 = vadd.f32 %v1690, %v1851
    %v2012 = vadd.f32 %v1691, %v1852
    %v2013 = vadd.f32 %v1692, %v1853
    %v2014 = vadd.f32 %v1693, %v1854
    %v2015 = vadd.f32 %v1694, %v1855
    %v2016 = vadd.f32 %v1695, %v1856
    %v2017 = vadd.f32 %v1696, %v1857
    %v2018 = vadd.f32 %v1697, %v1858
    %v2019 = vadd.f32 %v1698, %v1859
    %v2020 = vadd.f32 %v1699, %v1860
    %v2021 = vadd.f32 %v1700, %v1861
    %v2022 = vadd.f32 %v1701, %v1862
    %v2023 = vadd.f32 %v1702, %v1863
    %v2024 = vadd.f32 %v1703, %v1864
    %v2025 = vadd.f32 %v1704, %v1865
    %v2026 = vadd.f32 %v1705, %v1866
    %v2027 = vadd.f32 %v1706, %v1867
    %v2028 = vadd.f32 %v1707, %v1868
    %v2029 = vadd.f32 %v1708, %v1869
    %v2030 = vadd.f32 %v1709, %v1870
    %v2031 = vadd.f32 %v1710, %v1871
    %v2032 = vadd.f32 %v1711, %v1872
    %v2033 = vadd.f32 %v1712, %v1873
    %v2034 = vadd.f32 %v1713, %v1874
    %v2035 = vadd.f32 %v1714, %v1875
    %v2036 = vadd.f32 %v1715, %v1876
    %v2037 = vadd.f32 %v1716, %v1877
    %v2038 = vadd.f32 %v1717, %v1878
    %v2039 = vadd.f32 %v1718, %v1879
    %v2040 = vadd.f32 %v1719, %v1880
    %v2041 = vadd.f32 %v1720, %v1881
    %v2042 = vadd.f32 %v1721, %v1882
    %v2043 = vadd.f32 %v1722, %v1883
    %v2044 = vadd.f32 %v1723, %v1884
    %v2045 = vadd.f32 %v1724, %v1885
    %v2046 = vadd.f32 %v1725, %v1886
    %v2047 = vadd.f32 %v1726, %v1887
    %v2048 = vadd.f32 %v1727, %v1888
    %v2049 = vadd.f32 %v1728, %v1889
    %v2050 = vadd.f32 %v1729, %v1890
    %v2051 = vadd.f32 %v1730, %v1891
    %v2052 = vadd.f32 %v1731, %v1892
    %v2053 = vadd.f32 %v1732, %v1893
    %v2054 = vadd.f32 %v1733, %v1894
    %v2055 = vadd.f32 %v1734, %v1895
    %v2056 = vadd.f32 %v1735, %v1896
    %v2057 = vadd.f32 %v1736, %v1897
    %v2058 = vadd.f32 %v1737, %v1898
    %v2059 = vadd.f32 %v1738, %v1899
    %v2060 = vadd.f32 %v1739, %v1900
    %v2061 = vadd.f32 %v1740, %v1901
    %v2062 = vadd.f32 %v1741, %v1902
    %v2063 = vadd.f32 %v1742, %v1903
    %v2064 = vadd.f32 %v1743, %v1904
    %v2065 = vadd.f32 %v1744, %v1905
    %v2066 = vadd.f32 %v1745, %v1906
    %v2067 = vadd.f32 %v1746, %v1907
    %v2068 = vadd.f32 %v1747, %v1908
    %v2069 = vadd.f32 %v1748, %v1909
    %v2070 = vadd.f32 %v1749, %v1910
    %v2071 = vadd.f32 %v1750, %v1911
    %v2072 = vadd.f32 %v1751, %v1912
    %v2073 = vadd.f32 %v1752, %v1913
    %v2074 = vadd.f32 %v1753, %v1914
    %v2075 = vadd.f32 %v1754, %v1915
    %v2076 = vadd.f32 %v1755, %v1916
    %v2077 = vadd.f32 %v1756, %v1917
    %v2078 = vadd.f32 %v1757, %v1918
    %v2079 = vadd.f32 %v1758, %v1919
    %v2080 = vadd.f32 %v1759, %v1920
    %v2081 = vadd.f32 %v1760, %v1921
    %v2082 = vadd.f32 %v1761, %v1922
    %v2083 = vadd.f32 %v1762, %v1923
    %v2084 = vadd.f32 %v1763, %v1924
    %v2085 = vadd.f32 %v1764, %v1925
    %v2086 = vadd.f32 %v1765, %v1926
    %v2087 = vadd.f32 %v1766, %v1927
    %v2088 = vadd.f32 %v1767, %v1928
    %v2089 = vadd.f32 %v1768, %v1929
    %v2090 = vadd.f32 %v1769, %v1930
    %v2091 = vadd.f32 %v1770, %v1931
    %v2092 = vadd.f32 %v1771, %v1932
    %v2093 = vadd.f32 %v1772, %v1933
    %v2094 = vadd.f32 %v1773, %v1934
    %v2095 = vadd.f32 %v1774, %v1935
    %v2096 = vadd.f32 %v1775, %v1936
    %v2097 = vadd.f32 %v1776, %v1937
    %v2098 = vadd.f32 %v1777, %v1938
    %v2099 = vadd.f32 %v1778, %v1939
    %v2100 = vadd.f32 %v1779, %v1940
    %v2101 = vadd.f32 %v1780, %v1941
    %v2102 = vadd.f32 %v1781, %v1942
    %v2103 = vadd.f32 %v1782, %v1943
    %v2104 = vadd.f32 %v1783, %v1944
    %v2105 = vadd.f32 %v1784, %v1945
    %v2106 = vadd.f32 %v1785, %v1946
    %v2107 = vadd.f32 %v1786, %v1947
    %v2108 = vadd.f32 %v1787, %v1948
    %v2109 = vadd.f32 %v1949, %v1950
    %v2110 = vadd.f32 %v1950, %v1951
    %v2111 = vadd.f32 %v1951, %v1952
    %v2112 = vadd.f32 %v1952, %v1953
    %v2113 = vadd.f32 %v1953, %v1954
    %v2114 = vadd.f32 %v1954, %v1955
    %v2115 = vadd.f32 %v1955, %v1956
    %v2116 = vadd.f32 %v1956, %v1957
    %v2117 = vadd.f32 %v1957, %v1958
    %v2118 = vadd.f32 %v1958, %v1959
    %v2119 = vadd.f32 %v1965, %v1966
    %v2120 = vadd.f32 %v1966, %v1967
    %v2121 = vadd.f32 %v1967, %v1968
    %v2122 = vadd.f32 %v1968, %v1969
    %v2123 = vadd.f32 %v1969, %v1970
    %v2124 = vadd.f32 %v1970, %v1971
    %v2125 = vadd.f32 %v1971, %v1972
    %v2126 = vadd.f32 %v1972, %v1973
    %v2127 = vadd.f32 %v1973, %v1974
    %v2128 = vadd.f32 %v1974, %v1975
    %v2129 = vadd.f32 %v1981, %v1982
    %v2130 = vadd.f32 %v1982, %v1983
    %v2131 = vadd.f32 %v1983, %v1984
    %v2132 = vadd.f32 %v1984, %v1985
    %v2133 = vadd.f32 %v1985, %v1986
    %v2134 = vadd.f32 %v1986, %v1987
    %v2135 = vadd.f32 %v1987, %v1988
    %v2136 = vadd.f32 %v1988, %v1989
    %v2137 = vadd.f32 %v1989, %v1990
    %v2138 = vadd.f32 %v1990, %v1991
    %v2139 = vadd.f32 %v1997, %v1998
    %v2140 = vadd.f32 %v1998, %v1999
    %v2141 = vadd.f32 %v1999, %v2000
    %v2142 = vadd.f32 %v2000, %v2001
    %v2143 = vadd.f32 %v2001, %v2002
    %v2144 = vadd.f32 %v2002, %v2003
    %v2145 = vadd.f32 %v2003, %v2004
    %v2146 = vadd.f32 %v2004, %v2005
    %v2147 = vadd.f32 %v2005, %v2006
    %v2148 = vadd.f32 %v2006, %v2007
    %v2149 = vadd.f32 %v2013, %v2014
    %v2150 = vadd.f32 %v2014, %v2015
    %v2151 = vadd.f32 %v2015, %v2016
    %v2152 = vadd.f32 %v2016, %v2017
    %v2153 = vadd.f32 %v2017, %v2018
    %v2154 = vadd.f32 %v2018, %v2019
    %v2155 = vadd.f32 %v2019, %v2020
    %v2156 = vadd.f32 %v2020, %v2021
    %v2157 = vadd.f32 %v2021, %v2022
    %v2158 = vadd.f32 %v2022, %v2023
    %v2159 = vadd.f32 %v2029, %v2030
    %v2160 = vadd.f32 %v2030, %v2031
    %v2161 = vadd.f32 %v2031, %v2032
    %v2162 = vadd.f32 %v2032, %v2033
    %v2163 = vadd.f32 %v2033, %v2034
    %v2164 = vadd.f32 %v2034, %v2035
    %v2165 = vadd.f32 %v2035, %v2036
    %v2166 = vadd.f32 %v2036, %v2037
    %v2167 = vadd.f32 %v2037, %v2038
    %v2168 = vadd.f32 %v2038, %v2039
    %v2169 = vadd.f32 %v2045, %v2046
    %v2170 = vadd.f32 %v2046, %v2047
    %v2171 = vadd.f32 %v2047, %v2048
    %v2172 = vadd.f32 %v2048, %v2049
    %v2173 = vadd.f32 %v2049, %v2050
    %v2174 = vadd.f32 %v2050, %v2051
    %v2175 = vadd.f32 %v2051, %v2052
    %v2176 = vadd.f32 %v2052, %v2053
    %v2177 = vadd.f32 %v2053, %v2054
    %v2178 = vadd.f32 %v2054, %v2055
    %v2179 = vadd.f32 %v2061, %v2062
    %v2180 = vadd.f32 %v2062, %v2063
    %v2181 = vadd.f32 %v2063, %v2064
    %v2182 = vadd.f32 %v2064, %v2065
    %v2183 = vadd.f32 %v2065, %v2066
    %v2184 = vadd.f32 %v2066, %v2067
    %v2185 = vadd.f32 %v2067, %v2068
    %v2186 = vadd.f32 %v2068, %v2069
    %v2187 = vadd.f32 %v2069, %v2070
    %v2188 = vadd.f32 %v2070, %v2071
    %v2189 = vadd.f32 %v2077, %v2078
    %v2190 = vadd.f32 %v2078, %v2079
    %v2191 = vadd.f32 %v2079, %v2080
    %v2192 = vadd.f32 %v2080, %v2081
    %v2193 = vadd.f32 %v2081, %v2082
    %v2194 = vadd.f32 %v2082, %v2083
    %v2195 = vadd.f32 %v2083, %v2084
    %v2196 = vadd.f32 %v2084, %v2085
    %v2197 = vadd.f32 %v2085, %v2086
    %v2198 = vadd.f32 %v2086, %v2087
    %v2199 = vadd.f32 %v2093, %v2094
    %v2200 = vadd.f32 %v2094, %v2095
    %v2201 = vadd.f32 %v2095, %v2096
    %v2202 = vadd.f32 %v2096, %v2097
    %v2203 = vadd.f32 %v2097, %v2098
    %v2204 = vadd.f32 %v2098, %v2099
    %v2205 = vadd.f32 %v2099, %v2100
    %v2206 = vadd.f32 %v2100, %v2101
    %v2207 = vadd.f32 %v2101, %v2102
    %v2208 = vadd.f32 %v2102, %v2103
    %v2209 = vadd.f32 %v2109, %v1951
    %v2210 = vadd.f32 %v2110, %v1952
    %v2211 = vadd.f32 %v2111, %v1953
    %v2212 = vadd.f32 %v2112, %v1954
    %v2213 = vadd.f32 %v2113, %v1955
    %v2214 = vadd.f32 %v2114, %v1956
    %v2215 = vadd.f32 %v2115, %v1957
    %v2216 = vadd.f32 %v2116, %v1958
    %v2217 = vadd.f32 %v2117, %v1959
    %v2218 = vadd.f32 %v2118, %v1960
    %v2219 = vadd.f32 %v2119, %v1967
    %v2220 = vadd.f32 %v2120, %v1968
    %v2221 = vadd.f32 %v2121, %v1969
    %v2222 = vadd.f32 %v2122, %v1970
    %v2223 = vadd.f32 %v2123, %v1971
    %v2224 = vadd.f32 %v2124, %v1972
    %v2225 = vadd.f32 %v2125, %v1973
    %v2226 = vadd.f32 %v2126, %v1974
    %v2227 = vadd.f32 %v2127, %v1975
    %v2228 = vadd.f32 %v2128, %v1976
    %v2229 = vadd.f32 %v2129, %v1983
    %v2230 = vadd.f32 %v2130, %v1984
    %v2231 = vadd.f32 %v2131, %v1985
    %v2232 = vadd.f32 %v2132, %v1986
    %v2233 = vadd.f32 %v2133, %v1987
    %v2234 = vadd.f32 %v2134, %v1988
    %v2235 = vadd.f32 %v2135, %v1989
    %v2236 = vadd.f32 %v2136, %v1990
    %v2237 = vadd.f32 %v2137, %v1991
    %v2238 = vadd.f32 %v2138, %v1992
    %v2239 = vadd.f32 %v2139, %v1999
    %v2240 = vadd.f32 %v2140, %v2000
    %v2241 = vadd.f32 %v2141, %v2001
    %v2242 = vadd.f32 %v2142, %v2002
    %v2243 = vadd.f32 %v2143, %v2003
    %v2244 = vadd.f32 %v2144, %v2004
    %v2245 = vadd.f32 %v2145, %v2005
    %v2246 = vadd.f32 %v2146, %v2006
    %v2247 = vadd.f32 %v2147, %v2007
    %v2248 = vadd.f32 %v2148, %v2008
    %v2249 = vadd.f32 %v2149, %v2015
    %v2250 = vadd.f32 %v2150, %v2016
    %v2251 = vadd.f32 %v2151, %v2017
    %v2252 = vadd.f32 %v2152, %v2018
    %v2253 = vadd.f32 %v2153, %v2019
    %v2254 = vadd.f32 %v2154, %v2020
    %v2255 = vadd.f32 %v2155, %v2021
    %v2256 = vadd.f32 %v2156, %v2022
    %v2257 = vadd.f32 %v2157, %v2023
    %v2258 = vadd.f32 %v2158, %v2024
    %v2259 = vadd.f32 %v2159, %v2031
    %v2260 = vadd.f32 %v2160, %v2032
    %v2261 = vadd.f32 %v2161, %v2033
    %v2262 = vadd.f32 %v2162, %v2034
    %v2263 = vadd.f32 %v2163, %v2035
    %v2264 = vadd.f32 %v2164, %v2036
    %v2265 = vadd.f32 %v2165, %v2037
    %v2266 = vadd.f32 %v2166, %v2038
    %v2267 = vadd.f32 %v2167, %v2039
    %v2268 = vadd.f32 %v2168, %v2040
    %v2269 = vadd.f32 %v2169, %v2047
    %v2270 = vadd.f32 %v2170, %v2048
    %v2271 = vadd.f32 %v2171, %v2049
    %v2272 = vadd.f32 %v2172, %v2050
    %v2273 = vadd.f32 %v2173, %v2051
    %v2274 = vadd.f32 %v2174, %v2052
    %v2275 = vadd.f32 %v2175, %v2053
    %v2276 = vadd.f32 %v2176, %v2054
    %v2277 = vadd.f32 %v2177, %v2055
    %v2278 = vadd.f32 %v2178, %v2056
    %v2279 = vadd.f32 %v2179, %v2063
    %v2280 = vadd.f32 %v2180, %v2064
    %v2281 = vadd.f32 %v2181, %v2065
    %v2282 = vadd.f32 %v2182, %v2066
    %v2283 = vadd.f32 %v2183, %v2067
    %v2284 = vadd.f32 %v2184, %v2068
    %v2285 = vadd.f32 %v2185, %v2069
    %v2286 = vadd.f32 %v2186, %v2070
    %v2287 = vadd.f32 %v2187, %v2071
    %v2288 = vadd.f32 %v2188, %v2072
    %v2289 = vadd.f32 %v2189, %v2079
    %v2290 = vadd.f32 %v2190, %v2080
    %v2291 = vadd.f32 %v2191, %v2081
    %v2292 = vadd.f32 %v2192, %v2082
    %v2293 = vadd.f32 %v2193, %v2083
    %v2294 = vadd.f32 %v2194, %v2084
    %v2295 = vadd.f32 %v2195, %v2085
    %v2296 = vadd.f32 %v2196, %v2086
    %v2297 = vadd.f32 %v2197, %v2087
    %v2298 = vadd.f32 %v2198, %v2088
    %v2299 = vadd.f32 %v2199, %v2095
    %v2300 = vadd.f32 %v2200, %v2096
    %v2301 = vadd.f32 %v2201, %v2097
    %v2302 = vadd.f32 %v2202, %v2098
    %v2303 = vadd.f32 %v2203, %v2099
    %v2304 = vadd.f32 %v2204, %v2100
    %v2305 = vadd.f32 %v2205, %v2101
    %v2306 = vadd.f32 %v2206, %v2102
    %v2307 = vadd.f32 %v2207, %v2103
    %v2308 = vadd.f32 %v2208, %v2104
    %v2309 = vadd.f32 %v2209, %v1952
    %v2310 = vadd.f32 %v2210, %v1953
    %v2311 = vadd.f32 %v2211, %v1954
    %v2312 = vadd.f32 %v2212, %v1955
    %v2313 = vadd.f32 %v2213, %v1956
    %v2314 = vadd.f32 %v2214, %v1957
    %v2315 = vadd.f32 %v2215, %v1958
    %v2316 = vadd.f32 %v2216, %v1959
    %v2317 = vadd.f32 %v2217, %v1960
    %v2318 = vadd.f32 %v2218, %v1961
    %v2319 = vadd.f32 %v2219, %v1968
    %v2320 = vadd.f32 %v2220, %v1969
    %v2321 = vadd.f32 %v2221, %v1970
    %v2322 = vadd.f32 %v2222, %v1971
    %v2323 = vadd.f32 %v2223, %v1972
    %v2324 = vadd.f32 %v2224, %v1973
    %v2325 = vadd.f32 %v2225, %v1974
    %v2326 = vadd.f32 %v2226, %v1975
    %v2327 = vadd.f32 %v2227, %v1976
    %v2328 = vadd.f32 %v2228, %v1977
    %v2329 = vadd.f32 %v2229, %v1984
    %v2330 = vadd.f32 %v2230, %v1985
    %v2331 = vadd.f32 %v2231, %v1986
    %v2332 = vadd.f32 %v2232, %v1987
    %v2333 = vadd.f32 %v2233, %v1988
    %v2334 = vadd.f32 %v2234, %v1989
    %v2335 = vadd.f32 %v2235, %v1990
    %v2336 = vadd.f32 %v2236, %v1991
    %v2337 = vadd.f32 %v2237, %v1992
    %v2338 = vadd.f32 %v2238, %v1993
    %v2339 = vadd.f32 %v2239, %v2000
    %v2340 = vadd.f32 %v2240, %v2001
    %v2341 = vadd.f32 %v2241, %v2002
    %v2342 = vadd.f32 %v2242, %v2003
    %v2343 = vadd.f32 %v2243, %v2004
    %v2344 = vadd.f32 %v2244, %v2005
    %v2345 = vadd.f32 %v2245, %v2006
    %v2346 = vadd.f32 %v2246, %v2007
    %v2347 = vadd.f32 %v2247, %v2008
    %v2348 = vadd.f32 %v2248, %v2009
    %v2349 = vadd.f32 %v2249, %v2016
    %v2350 = vadd.f32 %v2250, %v2017
    %v2351 = vadd.f32 %v2251, %v2018
    %v2352 = vadd.f32 %v2252, %v2019
    %v2353 = vadd.f32 %v2253, %v2020
    %v2354 = vadd.f32 %v2254, %v2021
    %v2355 = vadd.f32 %v2255, %v2022
    %v2356 = vadd.f32 %v2256, %v2023
    %v2357 = vadd.f32 %v2257, %v2024
    %v2358 = vadd.f32 %v2258, %v2025
    %v2359 = vadd.f32 %v2259, %v2032
    %v2360 = vadd.f32 %v2260, %v2033
    %v2361 = vadd.f32 %v2261, %v2034
    %v2362 = vadd.f32 %v2262, %v2035
    %v2363 = vadd.f32 %v2263, %v2036
    %v2364 = vadd.f32 %v2264, %v2037
    %v2365 = vadd.f32 %v2265, %v2038
    %v2366 = vadd.f32 %v2266, %v2039
    %v2367 = vadd.f32 %v2267, %v2040
    %v2368 = vadd.f32 %v2268, %v2041
    %v2369 = vadd.f32 %v2269, %v2048
    %v2370 = vadd.f32 %v2270, %v2049
    %v2371 = vadd.f32 %v2271, %v2050
    %v2372 = vadd.f32 %v2272, %v2051
    %v2373 = vadd.f32 %v2273, %v2052
    %v2374 = vadd.f32 %v2274, %v2053
    %v2375 = vadd.f32 %v2275, %v2054
    %v2376 = vadd.f32 %v2276, %v2055
    %v2377 = vadd.f32 %v2277, %v2056
    %v2378 = vadd.f32 %v2278, %v2057
    %v2379 = vadd.f32 %v2279, %v2064
    %v2380 = vadd.f32 %v2280, %v2065
    %v2381 = vadd.f32 %v2281, %v2066
    %v2382 = vadd.f32 %v2282, %v2067
    %v2383 = vadd.f32 %v2283, %v2068
    %v2384 = vadd.f32 %v2284, %v2069
    %v2385 = vadd.f32 %v2285, %v2070
    %v2386 = vadd.f32 %v2286, %v2071
    %v2387 = vadd.f32 %v2287, %v2072
    %v2388 = vadd.f32 %v2288, %v2073
    %v2389 = vadd.f32 %v2289, %v2080
    %v2390 = vadd.f32 %v2290, %v2081
    %v2391 = vadd.f32 %v2291, %v2082
    %v2392 = vadd.f32 %v2292, %v2083
    %v2393 = vadd.f32 %v2293, %v2084
    %v2394 = vadd.f32 %v2294, %v2085
    %v2395 = vadd.f32 %v2295, %v2086
    %v2396 = vadd.f32 %v2296, %v2087
    %v2397 = vadd.f32 %v2297, %v2088
    %v2398 = vadd.f32 %v2298, %v2089
    %v2399 = vadd.f32 %v2299, %v2096
    %v2400 = vadd.f32 %v2300, %v2097
    %v2401 = vadd.f32 %v2301, %v2098
    %v2402 = vadd.f32 %v2302, %v2099
    %v2403 = vadd.f32 %v2303, %v2100
    %v2404 = vadd.f32 %v2304, %v2101
    %v2405 = vadd.f32 %v2305, %v2102
    %v2406 = vadd.f32 %v2306, %v2103
    %v2407 = vadd.f32 %v2307, %v2104
    %v2408 = vadd.f32 %v2308, %v2105
    %v2409 = vadd.f32 %v2309, %v1953
    %v2410 = vadd.f32 %v2310, %v1954
    %v2411 = vadd.f32 %v2311, %v1955
    %v2412 = vadd.f32 %v2312, %v1956
    %v2413 = vadd.f32 %v2313, %v1957
    %v2414 = vadd.f32 %v2314, %v1958
    %v2415 = vadd.f32 %v2315, %v1959
    %v2416 = vadd.f32 %v2316, %v1960
    %v2417 = vadd.f32 %v2317, %v1961
    %v2418 = vadd.f32 %v2318, %v1962
    %v2419 = vadd.f32 %v2319, %v1969
    %v2420 = vadd.f32 %v2320, %v1970
    %v2421 = vadd.f32 %v2321, %v1971
    %v2422 = vadd.f32 %v2322, %v1972
    %v2423 = vadd.f32 %v2323, %v1973
    %v2424 = vadd.f32 %v2324, %v1974
    %v2425 = vadd.f32 %v2325, %v1975
    %v2426 = vadd.f32 %v2326, %v1976
    %v2427 = vadd.f32 %v2327, %v1977
    %v2428 = vadd.f32 %v2328, %v1978
    %v2429 = vadd.f32 %v2329, %v1985
    %v2430 = vadd.f32 %v2330, %v1986
    %v2431 = vadd.f32 %v2331, %v1987
    %v2432 = vadd.f32 %v2332, %v1988
    %v2433 = vadd.f32 %v2333, %v1989
    %v2434 = vadd.f32 %v2334, %v1990
    %v2435 = vadd.f32 %v2335, %v1991
    %v2436 = vadd.f32 %v2336, %v1992
    %v2437 = vadd.f32 %v2337, %v1993
    %v2438 = vadd.f32 %v2338, %v1994
    %v2439 = vadd.f32 %v2339, %v2001
    %v2440 = vadd.f32 %v2340, %v2002
    %v2441 = vadd.f32 %v2341, %v2003
    %v2442 = vadd.f32 %v2342, %v2004
    %v2443 = vadd.f32 %v2343, %v2005
    %v2444 = vadd.f32 %v2344, %v2006
    %v2445 = vadd.f32 %v2345, %v2007
    %v2446 = vadd.f32 %v2346, %v2008
    %v2447 = vadd.f32 %v2347, %v2009
    %v2448 = vadd.f32 %v2348, %v2010
    %v2449 = vadd.f32 %v2349, %v2017
    %v2450 = vadd.f32 %v2350, %v2018
    %v2451 = vadd.f32 %v2351, %v2019
    %v2452 = vadd.f32 %v2352, %v2020
    %v2453 = vadd.f32 %v2353, %v2021
    %v2454 = vadd.f32 %v2354, %v2022
    %v2455 = vadd.f32 %v2355, %v2023
    %v2456 = vadd.f32 %v2356, %v2024
    %v2457 = vadd.f32 %v2357, %v2025
    %v2458 = vadd.f32 %v2358, %v2026
    %v2459 = vadd.f32 %v2359, %v2033
    %v2460 = vadd.f32 %v2360, %v2034
    %v2461 = vadd.f32 %v2361, %v2035
    %v2462 = vadd.f32 %v2362, %v2036
    %v2463 = vadd.f32 %v2363, %v2037
    %v2464 = vadd.f32 %v2364, %v2038
    %v2465 = vadd.f32 %v2365, %v2039
    %v2466 = vadd.f32 %v2366, %v2040
    %v2467 = vadd.f32 %v2367, %v2041
    %v2468 = vadd.f32 %v2368, %v2042
    %v2469 = vadd.f32 %v2369, %v2049
    %v2470 = vadd.f32 %v2370, %v2050
    %v2471 = vadd.f32 %v2371, %v2051
    %v2472 = vadd.f32 %v2372, %v2052
    %v2473 = vadd.f32 %v2373, %v2053
    %v2474 = vadd.f32 %v2374, %v2054
    %v2475 = vadd.f32 %v2375, %v2055
    %v2476 = vadd.f32 %v2376, %v2056
    %v2477 = vadd.f32 %v2377, %v2057
    %v2478 = vadd.f32 %v2378, %v2058
    %v2479 = vadd.f32 %v2379, %v2065
    %v2480 = vadd.f32 %v2380, %v2066
    %v2481 = vadd.f32 %v2381, %v2067
    %v2482 = vadd.f32 %v2382, %v2068
    %v2483 = vadd.f32 %v2383, %v2069
    %v2484 = vadd.f32 %v2384, %v2070
    %v2485 = vadd.f32 %v2385, %v2071
    %v2486 = vadd.f32 %v2386, %v2072
    %v2487 = vadd.f32 %v2387, %v2073
    %v2488 = vadd.f32 %v2388, %v2074
    %v2489 = vadd.f32 %v2389, %v2081
    %v2490 = vadd.f32 %v2390, %v2082
    %v2491 = vadd.f32 %v2391, %v2083
    %v2492 = vadd.f32 %v2392, %v2084
    %v2493 = vadd.f32 %v2393, %v2085
    %v2494 = vadd.f32 %v2394, %v2086
    %v2495 = vadd.f32 %v2395, %v2087
    %v2496 = vadd.f32 %v2396, %v2088
    %v2497 = vadd.f32 %v2397, %v2089
    %v2498 = vadd.f32 %v2398, %v2090
    %v2499 = vadd.f32 %v2399, %v2097
    %v2500 = vadd.f32 %v2400, %v2098
    %v2501 = vadd.f32 %v2401, %v2099
    %v2502 = vadd.f32 %v2402, %v2100
    %v2503 = vadd.f32 %v2403, %v2101
    %v2504 = vadd.f32 %v2404, %v2102
    %v2505 = vadd.f32 %v2405, %v2103
    %v2506 = vadd.f32 %v2406, %v2104
    %v2507 = vadd.f32 %v2407, %v2105
    %v2508 = vadd.f32 %v2408, %v2106
    %v2509 = vadd.f32 %v2409, %v1954
    %v2510 = vadd.f32 %v2410, %v1955
    %v2511 = vadd.f32 %v2411, %v1956
    %v2512 = vadd.f32 %v2412, %v1957
    %v2513 = vadd.f32 %v2413, %v1958
    %v2514 = vadd.f32 %v2414, %v1959
    %v2515 = vadd.f32 %v2415, %v1960
    %v2516 = vadd.f32 %v2416, %v1961
    %v2517 = vadd.f32 %v2417, %v1962
    %v2518 = vadd.f32 %v2418, %v1963
    %v2519 = vadd.f32 %v2419, %v1970
    %v2520 = vadd.f32 %v2420, %v1971
    %v2521 = vadd.f32 %v2421, %v1972
    %v2522 = vadd.f32 %v2422, %v1973
    %v2523 = vadd.f32 %v2423, %v1974
    %v2524 = vadd.f32 %v2424, %v1975
    %v2525 = vadd.f32 %v2425, %v1976
    %v2526 = vadd.f32 %v2426, %v1977
    %v2527 = vadd.f32 %v2427, %v1978
    %v2528 = vadd.f32 %v2428, %v1979
    %v2529 = vadd.f32 %v2429, %v1986
    %v2530 = vadd.f32 %v2430, %v1987
    %v2531 = vadd.f32 %v2431, %v1988
    %v2532 = vadd.f32 %v2432, %v1989
    %v2533 = vadd.f32 %v2433, %v1990
    %v2534 = vadd.f32 %v2434, %v1991
    %v2535 = vadd.f32 %v2435, %v1992
    %v2536 = vadd.f32 %v2436, %v1993
    %v2537 = vadd.f32 %v2437, %v1994
    %v2538 = vadd.f32 %v2438, %v1995
    %v2539 = vadd.f32 %v2439, %v2002
    %v2540 = vadd.f32 %v2440, %v2003
    %v2541 = vadd.f32 %v2441, %v2004
    %v2542 = vadd.f32 %v2442, %v2005
    %v2543 = vadd.f32 %v2443, %v2006
    %v2544 = vadd.f32 %v2444, %v2007
    %v2545 = vadd.f32 %v2445, %v2008
    %v2546 = vadd.f32 %v2446, %v2009
    %v2547 = vadd.f32 %v2447, %v2010
    %v2548 = vadd.f32 %v2448, %v2011
    %v2549 = vadd.f32 %v2449, %v2018
    %v2550 = vadd.f32 %v2450, %v2019
    %v2551 = vadd.f32 %v2451, %v2020
    %v2552 = vadd.f32 %v2452, %v2021
    %v2553 = vadd.f32 %v2453, %v2022
    %v2554 = vadd.f32 %v2454, %v2023
    %v2555 = vadd.f32 %v2455, %v2024
    %v2556 = vadd.f32 %v2456, %v2025
    %v2557 = vadd.f32 %v2457, %v2026
    %v2558 = vadd.f32 %v2458, %v2027
    %v2559 = vadd.f32 %v2459, %v2034
    %v2560 = vadd.f32 %v2460, %v2035
    %v2561 = vadd.f32 %v2461, %v2036
    %v2562 = vadd.f32 %v2462, %v2037
    %v2563 = vadd.f32 %v2463, %v2038
    %v2564 = vadd.f32 %v2464, %v2039
    %v2565 = vadd.f32 %v2465, %v2040
    %v2566 = vadd.f32 %v2466, %v2041
    %v2567 = vadd.f32 %v2467, %v2042
    %v2568 = vadd.f32 %v2468, %v2043
    %v2569 = vadd.f32 %v2469, %v2050
    %v2570 = vadd.f32 %v2470, %v2051
    %v2571 = vadd.f32 %v2471, %v2052
    %v2572 = vadd.f32 %v2472, %v2053
    %v2573 = vadd.f32 %v2473, %v2054
    %v2574 = vadd.f32 %v2474, %v2055
    %v2575 = vadd.f32 %v2475, %v2056
    %v2576 = vadd.f32 %v2476, %v2057
    %v2577 = vadd.f32 %v2477, %v2058
    %v2578 = vadd.f32 %v2478, %v2059
    %v2579 = vadd.f32 %v2479, %v2066
    %v2580 = vadd.f32 %v2480, %v2067
    %v2581 = vadd.f32 %v2481, %v2068
    %v2582 = vadd.f32 %v2482, %v2069
    %v2583 = vadd.f32 %v2483, %v2070
    %v2584 = vadd.f32 %v2484, %v2071
    %v2585 = vadd.f32 %v2485, %v2072
    %v2586 = vadd.f32 %v2486, %v2073
    %v2587 = vadd.f32 %v2487, %v2074
    %v2588 = vadd.f32 %v2488, %v2075
    %v2589 = vadd.f32 %v2489, %v2082
    %v2590 = vadd.f32 %v2490, %v2083
    %v2591 = vadd.f32 %v2491, %v2084
    %v2592 = vadd.f32 %v2492, %v2085
    %v2593 = vadd.f32 %v2493, %v2086
    %v2594 = vadd.f32 %v2494, %v2087
    %v2595 = vadd.f32 %v2495, %v2088
    %v2596 = vadd.f32 %v2496, %v2089
    %v2597 = vadd.f32 %v2497, %v2090
    %v2598 = vadd.f32 %v2498, %v2091
    %v2599 = vadd.f32 %v2499, %v2098
    %v2600 = vadd.f32 %v2500, %v2099
    %v2601 = vadd.f32 %v2501, %v2100
    %v2602 = vadd.f32 %v2502, %v2101
    %v2603 = vadd.f32 %v2503, %v2102
    %v2604 = vadd.f32 %v2504, %v2103
    %v2605 = vadd.f32 %v2505, %v2104
    %v2606 = vadd.f32 %v2506, %v2105
    %v2607 = vadd.f32 %v2507, %v2106
    %v2608 = vadd.f32 %v2508, %v2107
    %v2609 = vadd.f32 %v2509, %v1955
    %v2610 = vadd.f32 %v2510, %v1956
    %v2611 = vadd.f32 %v2511, %v1957
    %v2612 = vadd.f32 %v2512, %v1958
    %v2613 = vadd.f32 %v2513, %v1959
    %v2614 = vadd.f32 %v2514, %v1960
    %v2615 = vadd.f32 %v2515, %v1961
    %v2616 = vadd.f32 %v2516, %v1962
    %v2617 = vadd.f32 %v2517, %v1963
    %v2618 = vadd.f32 %v2518, %v1964
    %v2619 = vadd.f32 %v2519, %v1971
    %v2620 = vadd.f32 %v2520, %v1972
    %v2621 = vadd.f32 %v2521, %v1973
    %v2622 = vadd.f32 %v2522, %v1974
    %v2623 = vadd.f32 %v2523, %v1975
    %v2624 = vadd.f32 %v2524, %v1976
    %v2625 = vadd.f32 %v2525, %v1977
    %v2626 = vadd.f32 %v2526, %v1978
    %v2627 = vadd.f32 %v2527, %v1979
    %v2628 = vadd.f32 %v2528, %v1980
    %v2629 = vadd.f32 %v2529, %v1987
    %v2630 = vadd.f32 %v2530, %v1988
    %v2631 = vadd.f32 %v2531, %v1989
    %v2632 = vadd.f32 %v2532, %v1990
    %v2633 = vadd.f32 %v2533, %v1991
    %v2634 = vadd.f32 %v2534, %v1992
    %v2635 = vadd.f32 %v2535, %v1993
    %v2636 = vadd.f32 %v2536, %v1994
    %v2637 = vadd.f32 %v2537, %v1995
    %v2638 = vadd.f32 %v2538, %v1996
    %v2639 = vadd.f32 %v2539, %v2003
    %v2640 = vadd.f32 %v2540, %v2004
    %v2641 = vadd.f32 %v2541, %v2005
    %v2642 = vadd.f32 %v2542, %v2006
    %v2643 = vadd.f32 %v2543, %v2007
    %v2644 = vadd.f32 %v2544, %v2008
    %v2645 = vadd.f32 %v2545, %v2009
    %v2646 = vadd.f32 %v2546, %v2010
    %v2647 = vadd.f32 %v2547, %v2011
    %v2648 = vadd.f32 %v2548, %v2012
    %v2649 = vadd.f32 %v2549, %v2019
    %v2650 = vadd.f32 %v2550, %v2020
    %v2651 = vadd.f32 %v2551, %v2021
    %v2652 = vadd.f32 %v2552, %v2022
    %v2653 = vadd.f32 %v2553, %v2023
    %v2654 = vadd.f32 %v2554, %v2024
    %v2655 = vadd.f32 %v2555, %v2025
    %v2656 = vadd.f32 %v2556, %v2026
    %v2657 = vadd.f32 %v2557, %v2027
    %v2658 = vadd.f32 %v2558, %v2028
    %v2659 = vadd.f32 %v2559, %v2035
    %v2660 = vadd.f32 %v2560, %v2036
    %v2661 = vadd.f32 %v2561, %v2037
    %v2662 = vadd.f32 %v2562, %v2038
    %v2663 = vadd.f32 %v2563, %v2039
    %v2664 = vadd.f32 %v2564, %v2040
    %v2665 = vadd.f32 %v2565, %v2041
    %v2666 = vadd.f32 %v2566, %v2042
    %v2667 = vadd.f32 %v2567, %v2043
    %v2668 = vadd.f32 %v2568, %v2044
    %v2669 = vadd.f32 %v2569, %v2051
    %v2670 = vadd.f32 %v2570, %v2052
    %v2671 = vadd.f32 %v2571, %v2053
    %v2672 = vadd.f32 %v2572, %v2054
    %v2673 = vadd.f32 %v2573, %v2055
    %v2674 = vadd.f32 %v2574, %v2056
    %v2675 = vadd.f32 %v2575, %v2057
    %v2676 = vadd.f32 %v2576, %v2058
    %v2677 = vadd.f32 %v2577, %v2059
    %v2678 = vadd.f32 %v2578, %v2060
    %v2679 = vadd.f32 %v2579, %v2067
    %v2680 = vadd.f32 %v2580, %v2068
    %v2681 = vadd.f32 %v2581, %v2069
    %v2682 = vadd.f32 %v2582, %v2070
    %v2683 = vadd.f32 %v2583, %v2071
    %v2684 = vadd.f32 %v2584, %v2072
    %v2685 = vadd.f32 %v2585, %v2073
    %v2686 = vadd.f32 %v2586, %v2074
    %v2687 = vadd.f32 %v2587, %v2075
    %v2688 = vadd.f32 %v2588, %v2076
    %v2689 = vadd.f32 %v2589, %v2083
    %v2690 = vadd.f32 %v2590, %v2084
    %v2691 = vadd.f32 %v2591, %v2085
    %v2692 = vadd.f32 %v2592, %v2086
    %v2693 = vadd.f32 %v2593, %v2087
    %v2694 = vadd.f32 %v2594, %v2088
    %v2695 = vadd.f32 %v2595, %v2089
    %v2696 = vadd.f32 %v2596, %v2090
    %v2697 = vadd.f32 %v2597, %v2091
    %v2698 = vadd.f32 %v2598, %v2092
    %v2699 = vadd.f32 %v2599, %v2099
    %v2700 = vadd.f32 %v2600, %v2100
    %v2701 = vadd.f32 %v2601, %v2101
    %v2702 = vadd.f32 %v2602, %v2102
    %v2703 = vadd.f32 %v2603, %v2103
    %v2704 = vadd.f32 %v2604, %v2104
    %v2705 = vadd.f32 %v2605, %v2105
    %v2706 = vadd.f32 %v2606, %v2106
    %v2707 = vadd.f32 %v2607, %v2107
    %v2708 = vadd.f32 %v2608, %v2108
    %v2709 = vmul.f32 %v2609, 0.020408163
    %v2710 = vmul.f32 %v2610, 0.020408163
    %v2711 = vmul.f32 %v2611, 0.020408163
    %v2712 = vmul.f32 %v2612, 0.020408163
    %v2713 = vmul.f32 %v2613, 0.020408163
    %v2714 = vmul.f32 %v2614, 0.020408163
    %v2715 = vmul.f32 %v2615, 0.020408163
    %v2716 = vmul.f32 %v2616, 0.020408163
    %v2717 = vmul.f32 %v2617, 0.020408163
    %v2718 = vmul.f32 %v2618, 0.020408163
    %v2719 = vmul.f32 %v2619, 0.020408163
    %v2720 = vmul.f32 %v2620, 0.020408163
    %v2721 = vmul.f32 %v2621, 0.020408163
    %v2722 = vmul.f32 %v2622, 0.020408163
    %v2723 = vmul.f32 %v2623, 0.020408163
    %v2724 = vmul.f32 %v2624, 0.020408163
    %v2725 = vmul.f32 %v2625, 0.020408163
    %v2726 = vmul.f32 %v2626, 0.020408163
    %v2727 = vmul.f32 %v2627, 0.020408163
    %v2728 = vmul.f32 %v2628, 0.020408163
    %v2729 = vmul.f32 %v2629, 0.020408163
    %v2730 = vmul.f32 %v2630, 0.020408163
    %v2731 = vmul.f32 %v2631, 0.020408163
    %v2732 = vmul.f32 %v2632, 0.020408163
    %v2733 = vmul.f32 %v2633, 0.020408163
    %v2734 = vmul.f32 %v2634, 0.020408163
    %v2735 = vmul.f32 %v2635, 0.020408163
    %v2736 = vmul.f32 %v2636, 0.020408163
    %v2737 = vmul.f32 %v2637, 0.020408163
    %v2738 = vmul.f32 %v2638, 0.020408163
    %v2739 = vmul.f32 %v2639, 0.020408163
    %v2740 = vmul.f32 %v2640, 0.020408163
    %v2741 = vmul.f32 %v2641, 0.020408163
    %v2742 = vmul.f32 %v2642, 0.020408163
    %v2743 = vmul.f32 %v2643, 0.020408163
    %v2744 = vmul.f32 %v2644, 0.020408163
    %v2745 = vmul.f32 %v2645, 0.020408163
    %v2746 = vmul.f32 %v2646, 0.020408163
    %v2747 = vmul.f32 %v2647, 0.020408163
    %v2748 = vmul.f32 %v2648, 0.020408163
    %v2749 = vmul.f32 %v2649, 0.020408163
    %v2750 = vmul.f32 %v2650, 0.020408163
    %v2751 = vmul.f32 %v2651, 0.020408163
    %v2752 = vmul.f32 %v2652, 0.020408163
    %v2753 = vmul.f32 %v2653, 0.020408163
    %v2754 = vmul.f32 %v2654, 0.020408163
    %v2755 = vmul.f32 %v2655, 0.020408163
    %v2756 = vmul.f32 %v2656, 0.020408163
    %v2757 = vmul.f32 %v2657, 0.020408163
    %v2758 = vmul.f32 %v2658, 0.020408163
    %v2759 = vmul.f32 %v2659, 0.020408163
    %v2760 = vmul.f32 %v2660, 0.020408163
    %v2761 = vmul.f32 %v2661, 0.020408163
    %v2762 = vmul.f32 %v2662, 0.020408163
    %v2763 = vmul.f32 %v2663, 0.020408163
    %v2764 = vmul.f32 %v2664, 0.020408163
    %v2765 = vmul.f32 %v2665, 0.020408163
    %v2766 = vmul.f32 %v2666, 0.020408163
    %v2767 = vmul.f32 %v2667, 0.020408163
    %v2768 = vmul.f32 %v2668, 0.020408163
    %v2769 = vmul.f32 %v2669, 0.020408163
    %v2770 = vmul.f32 %v2670, 0.020408163
    %v2771 = vmul.f32 %v2671, 0.020408163
    %v2772 = vmul.f32 %v2672, 0.020408163
    %v2773 = vmul.f32 %v2673, 0.020408163
    %v2774 = vmul.f32 %v2674, 0.020408163
    %v2775 = vmul.f32 %v2675, 0.020408163
    %v2776 = vmul.f32 %v2676, 0.020408163
    %v2777 = vmul.f32 %v2677, 0.020408163
    %v2778 = vmul.f32 %v2678, 0.020408163
    %v2779 = vmul.f32 %v2679, 0.020408163
    %v2780 = vmul.f32 %v2680, 0.020408163
    %v2781 = vmul.f32 %v2681, 0.020408163
    %v2782 = vmul.f32 %v2682, 0.020408163
    %v2783 = vmul.f32 %v2683, 0.020408163
    %v2784 = vmul.f32 %v2684, 0.020408163
    %v2785 = vmul.f32 %v2685, 0.020408163
    %v2786 = vmul.f32 %v2686, 0.020408163
    %v2787 = vmul.f32 %v2687, 0.020408163
    %v2788 = vmul.f32 %v2688, 0.020408163
    %v2789 = vmul.f32 %v2689, 0.020408163
    %v2790 = vmul.f32 %v2690, 0.020408163
    %v2791 = vmul.f32 %v2691, 0.020408163
    %v2792 = vmul.f32 %v2692, 0.020408163
    %v2793 = vmul.f32 %v2693, 0.020408163
    %v2794 = vmul.f32 %v2694, 0.020408163
    %v2795 = vmul.f32 %v2695, 0.020408163
    %v2796 = vmul.f32 %v2696, 0.020408163
    %v2797 = vmul.f32 %v2697, 0.020408163
    %v2798 = vmul.f32 %v2698, 0.020408163
    %v2799 = vmul.f32 %v2699, 0.020408163
    %v2800 = vmul.f32 %v2700, 0.020408163
    %v2801 = vmul.f32 %v2701, 0.020408163
    %v2802 = vmul.f32 %v2702, 0.020408163
    %v2803 = vmul.f32 %v2703, 0.020408163
    %v2804 = vmul.f32 %v2704, 0.020408163
    %v2805 = vmul.f32 %v2705, 0.020408163
    %v2806 = vmul.f32 %v2706, 0.020408163
    %v2807 = vmul.f32 %v2707, 0.020408163
    %v2808 = vmul.f32 %v2708, 0.020408163
    %2809 = vst [vmem:[#allocation5] sm:$0xff] %v2709
    %2810 = vst [vmem:[#allocation5 + $0x8] sm:$0xff] %v2710
    %2811 = vst [vmem:[#allocation5 + $0x10] sm:$0xff] %v2711
    %2812 = vst [vmem:[#allocation5 + $0x18] sm:$0xff] %v2712
    %2813 = vst [vmem:[#allocation5 + $0x20] sm:$0xff] %v2713
    %2814 = vst [vmem:[#allocation5 + $0x28] sm:$0xff] %v2714
    %2815 = vst [vmem:[#allocation5 + $0x30] sm:$0xff] %v2715
    %2816 = vst [vmem:[#allocation5 + $0x38] sm:$0xff] %v2716
    %2817 = vst [vmem:[#allocation5 + $0x40] sm:$0xff] %v2717
    %2818 = vst [vmem:[#allocation5 + $0x48] sm:$0xff] %v2718
    %2819 = vst [vmem:[#allocation5 + $0x50] sm:$0xff] %v2719
    %2820 = vst [vmem:[#allocation5 + $0x58] sm:$0xff] %v2720
    %2821 = vst [vmem:[#allocation5 + $0x60] sm:$0xff] %v2721
    %2822 = vst [vmem:[#allocation5 + $0x68] sm:$0xff] %v2722
    %2823 = vst [vmem:[#allocation5 + $0x70] sm:$0xff] %v2723
    %2824 = vst [vmem:[#allocation5 + $0x78] sm:$0xff] %v2724
    %2825 = vst [vmem:[#allocation5 + $0x80] sm:$0xff] %v2725
    %2826 = vst [vmem:[#allocation5 + $0x88] sm:$0xff] %v2726
    %2827 = vst [vmem:[#allocation5 + $0x90] sm:$0xff] %v2727
    %2828 = vst [vmem:[#allocation5 + $0x98] sm:$0xff] %v2728
    %2829 = vst [vmem:[#allocation5 + $0xa0] sm:$0xff] %v2729
    %2830 = vst [vmem:[#allocation5 + $0xa8] sm:$0xff] %v2730
    %2831 = vst [vmem:[#allocation5 + $0xb0] sm:$0xff] %v2731
    %2832 = vst [vmem:[#allocation5 + $0xb8] sm:$0xff] %v2732
    %2833 = vst [vmem:[#allocation5 + $0xc0] sm:$0xff] %v2733
    %2834 = vst [vmem:[#allocation5 + $0xc8] sm:$0xff] %v2734
    %2835 = vst [vmem:[#allocation5 + $0xd0] sm:$0xff] %v2735
    %2836 = vst [vmem:[#allocation5 + $0xd8] sm:$0xff] %v2736
    %2837 = vst [vmem:[#allocation5 + $0xe0] sm:$0xff] %v2737
    %2838 = vst [vmem:[#allocation5 + $0xe8] sm:$0xff] %v2738
    %2839 = vst [vmem:[#allocation5 + $0xf0] sm:$0xff] %v2739
    %2840 = vst [vmem:[#allocation5 + $0xf8] sm:$0xff] %v2740
    %2841 = vst [vmem:[#allocation5 + $0x100] sm:$0xff] %v2741
    %2842 = vst [vmem:[#allocation5 + $0x108] sm:$0xff] %v2742
    %2843 = vst [vmem:[#allocation5 + $0x110] sm:$0xff] %v2743
    %2844 = vst [vmem:[#allocation5 + $0x118] sm:$0xff] %v2744
    %2845 = vst [vmem:[#allocation5 + $0x120] sm:$0xff] %v2745
    %2846 = vst [vmem:[#allocation5 + $0x128] sm:$0xff] %v2746
    %2847 = vst [vmem:[#allocation5 + $0x130] sm:$0xff] %v2747
    %2848 = vst [vmem:[#allocation5 + $0x138] sm:$0xff] %v2748
    %2849 = vst [vmem:[#allocation5 + $0x140] sm:$0xff] %v2749
    %2850 = vst [vmem:[#allocation5 + $0x148] sm:$0xff] %v2750
    %2851 = vst [vmem:[#allocation5 + $0x150] sm:$0xff] %v2751
    %2852 = vst [vmem:[#allocation5 + $0x158] sm:$0xff] %v2752
    %2853 = vst [vmem:[#allocation5 + $0x160] sm:$0xff] %v2753
    %2854 = vst [vmem:[#allocation5 + $0x168] sm:$0xff] %v2754
    %2855 = vst [vmem:[#allocation5 + $0x170] sm:$0xff] %v2755
    %2856 = vst [vmem:[#allocation5 + $0x178] sm:$0xff] %v2756
    %2857 = vst [vmem:[#allocation5 + $0x180] sm:$0xff] %v2757
    %2858 = vst [vmem:[#allocation5 + $0x188] sm:$0xff] %v2758
    %2859 = vst [vmem:[#allocation5 + $0x190] sm:$0xff] %v2759
    %2860 = vst [vmem:[#allocation5 + $0x198] sm:$0xff] %v2760
    %2861 = vst [vmem:[#allocation5 + $0x1a0] sm:$0xff] %v2761
    %2862 = vst [vmem:[#allocation5 + $0x1a8] sm:$0xff] %v2762
    %2863 = vst [vmem:[#allocation5 + $0x1b0] sm:$0xff] %v2763
    %2864 = vst [vmem:[#allocation5 + $0x1b8] sm:$0xff] %v2764
    %2865 = vst [vmem:[#allocation5 + $0x1c0] sm:$0xff] %v2765
    %2866 = vst [vmem:[#allocation5 + $0x1c8] sm:$0xff] %v2766
    %2867 = vst [vmem:[#allocation5 + $0x1d0] sm:$0xff] %v2767
    %2868 = vst [vmem:[#allocation5 + $0x1d8] sm:$0xff] %v2768
    %2869 = vst [vmem:[#allocation5 + $0x1e0] sm:$0xff] %v2769
    %2870 = vst [vmem:[#allocation5 + $0x1e8] sm:$0xff] %v2770
    %2871 = vst [vmem:[#allocation5 + $0x1f0] sm:$0xff] %v2771
    %2872 = vst [vmem:[#allocation5 + $0x1f8] sm:$0xff] %v2772
    %2873 = vst [vmem:[#allocation5 + $0x200] sm:$0xff] %v2773
    %2874 = vst [vmem:[#allocation5 + $0x208] sm:$0xff] %v2774
    %2875 = vst [vmem:[#allocation5 + $0x210] sm:$0xff] %v2775
    %2876 = vst [vmem:[#allocation5 + $0x218] sm:$0xff] %v2776
    %2877 = vst [vmem:[#allocation5 + $0x220] sm:$0xff] %v2777
    %2878 = vst [vmem:[#allocation5 + $0x228] sm:$0xff] %v2778
    %2879 = vst [vmem:[#allocation5 + $0x230] sm:$0xff] %v2779
    %2880 = vst [vmem:[#allocation5 + $0x238] sm:$0xff] %v2780
    %2881 = vst [vmem:[#allocation5 + $0x240] sm:$0xff] %v2781
    %2882 = vst [vmem:[#allocation5 + $0x248] sm:$0xff] %v2782
    %2883 = vst [vmem:[#allocation5 + $0x250] sm:$0xff] %v2783
    %2884 = vst [vmem:[#allocation5 + $0x258] sm:$0xff] %v2784
    %2885 = vst [vmem:[#allocation5 + $0x260] sm:$0xff] %v2785
    %2886 = vst [vmem:[#allocation5 + $0x268] sm:$0xff] %v2786
    %2887 = vst [vmem:[#allocation5 + $0x270] sm:$0xff] %v2787
    %2888 = vst [vmem:[#allocation5 + $0x278] sm:$0xff] %v2788
    %2889 = vst [vmem:[#allocation5 + $0x280] sm:$0xff] %v2789
    %2890 = vst [vmem:[#allocation5 + $0x288] sm:$0xff] %v2790
    %2891 = vst [vmem:[#allocation5 + $0x290] sm:$0xff] %v2791
    %2892 = vst [vmem:[#allocation5 + $0x298] sm:$0xff] %v2792
    %2893 = vst [vmem:[#allocation5 + $0x2a0] sm:$0xff] %v2793
    %2894 = vst [vmem:[#allocation5 + $0x2a8] sm:$0xff] %v2794
    %2895 = vst [vmem:[#allocation5 + $0x2b0] sm:$0xff] %v2795
    %2896 = vst [vmem:[#allocation5 + $0x2b8] sm:$0xff] %v2796
    %2897 = vst [vmem:[#allocation5 + $0x2c0] sm:$0xff] %v2797
    %2898 = vst [vmem:[#allocation5 + $0x2c8] sm:$0xff] %v2798
    %2899 = vst [vmem:[#allocation5 + $0x2d0] sm:$0xff] %v2799
    %2900 = vst [vmem:[#allocation5 + $0x2d8] sm:$0xff] %v2800
    %2901 = vst [vmem:[#allocation5 + $0x2e0] sm:$0xff] %v2801
    %2902 = vst [vmem:[#allocation5 + $0x2e8] sm:$0xff] %v2802
    %2903 = vst [vmem:[#allocation5 + $0x2f0] sm:$0xff] %v2803
    %2904 = vst [vmem:[#allocation5 + $0x2f8] sm:$0xff] %v2804
    %2905 = vst [vmem:[#allocation5 + $0x300] sm:$0xff] %v2805
    %2906 = vst [vmem:[#allocation5 + $0x308] sm:$0xff] %v2806
    %2907 = vst [vmem:[#allocation5 + $0x310] sm:$0xff] %v2807
    %2908 = vst [vmem:[#allocation5 + $0x318] sm:$0xff] %v2808
    // Predicated region
    $region10: #{tpu_custom_call.1} parent=1 // pred_check
      _
    $region11: #{tpu_custom_call.1} parent=1 // pred_check_branch
      %2910 = sbr.rel (0) target = $region13
    $region12: #{tpu_custom_call.1} parent=1 // pred_region
      %s2912 = ssub.s32 12800, 12800
      %2913 = vsyncadd [#allocation4], %s2912
      %s2914 = sshll.u32 [#allocation5], 4
      %s2915 = int_to_ptr.vmem [resolvable:$true] %s2914
      %2920 = dma.vmem_to_hbm [thread:$0]  %s2915, 12800, %s1, [#allocation4], 128, 128, 8
    $region13: #{tpu_custom_call.1} parent=1 // pred_fallthru
      _
    // Predicated region
    $region14: #{tpu_custom_call.1} parent=1 // pred_check
      _
    $region15: #{tpu_custom_call.1} parent=1 // pred_check_branch
      %2922 = sbr.rel (0) target = $region17
    $region16: #{tpu_custom_call.1} parent=1 // pred_region
      %2923 = dma.done [#allocation4], 12800
    $region17: #{tpu_custom_call.1} parent=1 // pred_fallthru
      _
    %2924 = vsyncpa [#allocation3], 1
    %2925 = vsyncpa [#allocation4], 1

</llo_original>
